<compile_context>
chip_gen: v7x
topology: tpu7x:2x2x1
jax: 0.10.0
libtpu: 0.0.40
codegen_flags: <defaults>
</compile_context>

<pallas_src>
import functools

import numpy as np
import jax
import jax.numpy as jnp
from jax.experimental import pallas as pl
from jax.experimental.pallas import tpu as pltpu

# Keep the XLA-side matmuls (hoisted input projections + pure-JAX reference)
# at full f32 precision so the numeric self-check is meaningful.
jax.config.update("jax_default_matmul_precision", "highest")


# ----------------------------------------------------------------------------
# Fused Pallas kernel: attr LSTM + decoder LSTM stack + mask + dense/conv head
# ----------------------------------------------------------------------------
def _fused_ar_kernel(
    gates_attr_ref,   # (T, B, 4H)  precomputed mel0 @ W_ih_attr + b_attr
    gates_ctx_ref,    # (T, B, 4H)  precomputed context @ W_ih0_ctx + b0
    mask_ref,         # (T, B, 1)   1.0 where t < lens[b] else 0.0
    mel_ref,          # (N, C)      flattened mel (N = T*B)
    whh_attr_ref,     # (H, 4H)
    wih0_mel_ref,     # (H, 4H)     mel_hidden half of decoder layer-0 W_ih
    whh0_ref,         # (H, 4H)
    wih_rest_ref,     # (Lr, H, 4H) decoder layers 1..L-1 (Lr = max(L-1, 1))
    whh_rest_ref,     # (Lr, H, 4H)
    b_rest_ref,       # (Lr, 1, 4H)
    w1_ref, b1_ref,   # (H, H), (1, H)   DenseLayer linear 1
    w2_ref, b2_ref,   # (H, H), (1, H)   DenseLayer linear 2
    wc_ref, bc_ref,   # (H, 2C), (1, 2C) kernel-1 Conv1d
    mel_out_ref,      # (N, C) output
    log_s_ref,        # (N, C) output
    hid_sc,           # VMEM scratch (N, H): masked last-layer hidden sequence
    *, T, B, H, C, L):

    def cell(gates, c_prev):
        # PyTorch gate order: i, f, g, o
        i = jax.nn.sigmoid(gates[:, 0 * H:1 * H])
        f = jax.nn.sigmoid(gates[:, 1 * H:2 * H])
        g = jnp.tanh(gates[:, 2 * H:3 * H])
        o = jax.nn.sigmoid(gates[:, 3 * H:4 * H])
        c = f * c_prev + i * g
        return o * jnp.tanh(c), c

    # Hoist all weight loads out of the serial loop.
    whh_attr = whh_attr_ref[...]
    wih0_mel = wih0_mel_ref[...]
    whh0 = whh0_ref[...]
    rest = [(wih_rest_ref[l], whh_rest_ref[l], b_rest_ref[l])
            for l in range(L - 1)]

    zeros = jnp.zeros((B, H), jnp.float32)
    init = (zeros, zeros, (zeros,) * L, (zeros,) * L)

    def body(t, carry):
        h_a, c_a, hs, cs = carry

        # attr LSTM: input projection was precomputed; only h @ W_hh remains.
        g_a = gates_attr_ref[t] + jnp.dot(
            h_a, whh_attr, preferred_element_type=jnp.float32)
        h_a, c_a = cell(g_a, c_a)

        # decoder LSTM layer 0: concat(mel_hidden, context) realized as the sum
        # of two matmuls; the context half (+ bias) was precomputed outside.
        g0 = (gates_ctx_ref[t]
              + jnp.dot(h_a, wih0_mel, preferred_element_type=jnp.float32)
              + jnp.dot(hs[0], whh0, preferred_element_type=jnp.float32))
        h0, c0 = cell(g0, cs[0])
        new_hs = [h0]
        new_cs = [c0]
        x = h0

        # decoder LSTM layers 1 .. L-1 (static python loop; traced once).
        for l in range(1, L):
            wih_l, whh_l, b_l = rest[l - 1]
            g = (jnp.dot(x, wih_l, preferred_element_type=jnp.float32)
                 + jnp.dot(hs[l], whh_l, preferred_element_type=jnp.float32)
                 + b_l)
            hl, cl = cell(g, cs[l])
            new_hs.append(hl)
            new_cs.append(cl)
            x = hl

        # pack_padded_sequence semantics: outputs zero at t >= lens[b],
        # fused directly into the VMEM store of the hidden sequence.
        hid_sc[pl.ds(t * B, B), :] = x * mask_ref[t]
        return (h_a, c_a, tuple(new_hs), tuple(new_cs))

    jax.lax.fori_loop(0, T, body, init)

    # ---- head: DenseLayer (2x tanh-linear) + kernel-1 Conv1d + 'exp' affine --
    # One pass over the full (N, H) VMEM-resident hidden matrix (big matmuls).
    hid = hid_sc[...]                                             # (N, H)
    h1 = jnp.tanh(jnp.dot(hid, w1_ref[...],
                          preferred_element_type=jnp.float32) + b1_ref[...])
    h2 = jnp.tanh(jnp.dot(h1, w2_ref[...],
                          preferred_element_type=jnp.float32) + b2_ref[...])
    d = jnp.dot(h2, wc_ref[...],
                preferred_element_type=jnp.float32) + bc_ref[...]  # (N, 2C)
    scale_un = d[:, :C]                                           # log_s ('exp')
    bias = d[:, C:]
    mel_out_ref[...] = jnp.exp(scale_un) * mel_ref[...] + bias
    log_s_ref[...] = scale_un


def _full_spec(shape):
    n = len(shape)
    return pl.BlockSpec(shape, lambda i, n=n: (0,) * n)


# ----------------------------------------------------------------------------
# AR_Step.forward (no spline flow), built around the fused kernel
# ----------------------------------------------------------------------------
def ar_step_forward(params, mel, context, lens):
    T, B, C = mel.shape
    H = params["attr_w_hh"].shape[0]
    L = len(params["lstm_w_ih"])
    N = T * B

    lens_j = jnp.asarray(lens, jnp.int32)
    mask = (jnp.arange(T)[:, None] < lens_j[None, :]
            ).astype(jnp.float32)[:, :, None]                     # (T, B, 1)

    # mel0 = cat([zeros, mel[:-1]], 0)
    mel0 = jnp.concatenate([jnp.zeros((1, B, C), mel.dtype), mel[:-1]], axis=0)

    # Hoisted input projections: one large MXU-friendly matmul each instead of
    # T tiny per-step matmuls inside the recurrence.
    def proj(x, w, b):
        Tx, Bx, D = x.shape
        return (x.reshape(Tx * Bx, D) @ w + b).reshape(Tx, Bx, -1)

    gates_attr = proj(mel0, params["attr_w_ih"], params["attr_b"])
    wih0 = params["lstm_w_ih"][0]
    wih0_mel, wih0_ctx = wih0[:H], wih0[H:]
    gates_ctx = proj(context, wih0_ctx, params["lstm_b"][0])

    if L > 1:
        wih_rest = jnp.stack(params["lstm_w_ih"][1:])
        whh_rest = jnp.stack(params["lstm_w_hh"][1:])
        b_rest = jnp.stack(params["lstm_b"][1:])
    else:  # dummy (unused) stacks so the kernel signature stays fixed
        wih_rest = jnp.zeros((1, H, 4 * H), jnp.float32)
        whh_rest = jnp.zeros((1, H, 4 * H), jnp.float32)
        b_rest = jnp.zeros((1, 1, 4 * H), jnp.float32)

    inputs = [
        gates_attr, gates_ctx, mask, mel.reshape(N, C),
        params["attr_w_hh"], wih0_mel, params["lstm_w_hh"][0],
        wih_rest, whh_rest, b_rest,
        params["dense_w1"], params["dense_b1"],
        params["dense_w2"], params["dense_b2"],
        params["conv_w"], params["conv_b"],
    ]

    kernel = functools.partial(_fused_ar_kernel, T=T, B=B, H=H, C=C, L=L)

    mel_out, log_s = pl.pallas_call(
        kernel,
        out_shape=(jax.ShapeDtypeStruct((N, C), jnp.float32),
                   jax.ShapeDtypeStruct((N, C), jnp.float32)),
        grid_spec=pltpu.PrefetchScalarGridSpec(
            num_scalar_prefetch=0,
            grid=(1,),
            in_specs=[_full_spec(x.shape) for x in inputs],
            out_specs=[_full_spec((N, C)), _full_spec((N, C))],
            scratch_shapes=[pltpu.VMEM((N, H), jnp.float32)],
        ),
        compiler_params=pltpu.CompilerParams(
            dimension_semantics=("arbitrary",)),
    )(*inputs)

    return mel_out.reshape(T, B, C), log_s.reshape(T, B, C)


# ----------------------------------------------------------------------------
# AR_Back_Step.forward
# ----------------------------------------------------------------------------
def ar_back_step_forward(params, mel, context, lens):
    T = mel.shape[0]
    lens_j = jnp.asarray(lens, jnp.int32)
    # flip + per-batch roll(lens[b])  ==  gather with idx (lens[b]-1-t) mod T.
    # The inverse transform (roll(-lens[b]) + flip) is the SAME gather.
    gidx = jnp.mod(lens_j[None, :] - 1 - jnp.arange(T)[:, None], T)   # (T, B)
    mel_r = jnp.take_along_axis(mel, gidx[:, :, None], axis=0)
    ctx_r = jnp.take_along_axis(context, gidx[:, :, None], axis=0)

    mel_s, log_s = ar_step_forward(params, mel_r, ctx_r, lens_j)

    mel_out = jnp.take_along_axis(mel_s, gidx[:, :, None], axis=0)
    return mel_out, log_s   # log_s stays in the flipped/rolled frame (as torch)


# ----------------------------------------------------------------------------
# Pure-JAX reference (lax.scan LSTM) for a numeric self-check
# ----------------------------------------------------------------------------
def _lstm_ref(x, w_ih, w_hh, b):
    T, B, _ = x.shape
    H = w_hh.shape[0]

    def step(carry, xt):
        h, c = carry
        g = xt @ w_ih + h @ w_hh + b
        i = jax.nn.sigmoid(g[:, :H])
        f = jax.nn.sigmoid(g[:, H:2 * H])
        gg = jnp.tanh(g[:, 2 * H:3 * H])
        o = jax.nn.sigmoid(g[:, 3 * H:])
        c = f * c + i * gg
        h = o * jnp.tanh(c)
        return (h, c), h

    init = (jnp.zeros((B, H), jnp.float32), jnp.zeros((B, H), jnp.float32))
    _, hs = jax.lax.scan(step, init, x)
    return hs


def ar_back_step_reference(params, mel, context, lens):
    T, B, C = mel.shape
    lens_j = jnp.asarray(lens, jnp.int32)
    gidx = jnp.mod(lens_j[None, :] - 1 - jnp.arange(T)[:, None], T)
    mel_r = jnp.take_along_axis(mel, gidx[:, :, None], axis=0)
    ctx_r = jnp.take_along_axis(context, gidx[:, :, None], axis=0)
    mask = (jnp.arange(T)[:, None] < lens_j[None, :]
            ).astype(jnp.float32)[:, :, None]

    mel0 = jnp.concatenate([jnp.zeros((1, B, C), jnp.float32), mel_r[:-1]], 0)
    mh = _lstm_ref(mel0, params["attr_w_ih"], params["attr_w_hh"],
                   params["attr_b"]) * mask
    x = jnp.concatenate([mh, ctx_r], -1)
    for wih, whh, b in zip(params["lstm_w_ih"], params["lstm_w_hh"],
                           params["lstm_b"]):
        x = _lstm_ref(x, wih, whh, b)
    x = x * mask
    h1 = jnp.tanh(x @ params["dense_w1"] + params["dense_b1"])
    h2 = jnp.tanh(h1 @ params["dense_w2"] + params["dense_b2"])
    d = h2 @ params["conv_w"] + params["conv_b"]
    log_s = d[..., :C]
    mel_s = jnp.exp(log_s) * mel_r + d[..., C:]
    mel_out = jnp.take_along_axis(mel_s, gidx[:, :, None], axis=0)
    return mel_out, log_s


# ----------------------------------------------------------------------------
# deterministic parameter init (shapes per AR_Step.__init__)
# ----------------------------------------------------------------------------
def init_params(key, n_attr, n_speaker, n_text, n_hidden, n_lstm_layers):
    keys = iter(jax.random.split(key, 32))

    def norm(shape, scale=0.1):
        return (scale * jax.random.normal(next(keys), shape)).astype(jnp.float32)

    H = n_hidden
    p = {}
    # attr_lstm: LSTM(n_attr -> H), 1 layer (combined b_ih + b_hh bias)
    p["attr_w_ih"] = norm((n_attr, 4 * H))
    p["attr_w_hh"] = norm((H, 4 * H))
    p["attr_b"] = norm((1, 4 * H))
    # lstm: LSTM(H + n_text + n_speaker -> H), n_lstm_layers layers
    din0 = H + n_text + n_speaker
    p["lstm_w_ih"], p["lstm_w_hh"], p["lstm_b"] = [], [], []
    for layer in range(n_lstm_layers):
        din = din0 if layer == 0 else H
        p["lstm_w_ih"].append(norm((din, 4 * H)))
        p["lstm_w_hh"].append(norm((H, 4 * H)))
        p["lstm_b"].append(norm((1, 4 * H)))
    # DenseLayer(in_dim=H, sizes=[H, H]) : tanh(linear) x2
    p["dense_w1"] = norm((H, H))
    p["dense_b1"] = norm((1, H))
    p["dense_w2"] = norm((H, H))
    p["dense_b2"] = norm((1, H))
    # Conv1d(H, 2*n_attr, kernel 1) == linear H -> 2*n_attr.
    # NOTE: the torch __init__ zero-inits these (identity affine); nonzero
    # values are used here so the affine path is actually exercised.
    p["conv_w"] = norm((H, 2 * n_attr), scale=0.05)
    p["conv_b"] = norm((1, 2 * n_attr), scale=0.05)
    return p


# ----------------------------------------------------------------------------
if __name__ == "__main__":
    n_attr, n_speaker, n_text = 8, 8, 16
    n_hidden, n_lstm_layers = 32, 2
    T, B = 8, 2

    key = jax.random.PRNGKey(0)
    k_mel, k_ctx, k_par = jax.random.split(key, 3)
    mel = jax.random.normal(k_mel, (T, B, n_attr), jnp.float32)
    context = jax.random.normal(k_ctx, (T, B, n_text + n_speaker), jnp.float32)
    lens = jnp.array([T, T - 2], dtype=jnp.int32)   # max(lens) == T (required)

    params = init_params(k_par, n_attr, n_speaker, n_text, n_hidden,
                         n_lstm_layers)

    fwd = jax.jit(ar_back_step_forward)
    mel_out, log_s = fwd(params, mel, context, lens)
    jax.block_until_ready((mel_out, log_s))
    assert mel_out.shape == (T, B, n_attr) and log_s.shape == (T, B, n_attr)

    # numeric self-check against a pure-JAX (lax.scan) reference
    mel_ref, log_ref = jax.jit(ar_back_step_reference)(params, mel, context,
                                                       lens)
    np.testing.assert_allclose(np.asarray(mel_out), np.asarray(mel_ref),
                               rtol=1e-2, atol=1e-2)
    np.testing.assert_allclose(np.asarray(log_s), np.asarray(log_ref),
                               rtol=1e-2, atol=1e-2)
    print("KERNEL_OK")
</pallas_src>

<mosaic_0001>
module attributes {stable_mosaic.version = 11 : i64} {
  func.func @_fused_ar_kernel(%arg0: i32, %arg1: memref<8x2x128xf32, #tpu.memory_space<vmem>>, %arg2: memref<8x2x128xf32, #tpu.memory_space<vmem>>, %arg3: memref<8x2x1xf32, #tpu.memory_space<vmem>>, %arg4: memref<16x8xf32, #tpu.memory_space<vmem>>, %arg5: memref<32x128xf32, #tpu.memory_space<vmem>>, %arg6: memref<32x128xf32, #tpu.memory_space<vmem>>, %arg7: memref<32x128xf32, #tpu.memory_space<vmem>>, %arg8: memref<1x32x128xf32, #tpu.memory_space<vmem>>, %arg9: memref<1x32x128xf32, #tpu.memory_space<vmem>>, %arg10: memref<1x1x128xf32, #tpu.memory_space<vmem>>, %arg11: memref<32x32xf32, #tpu.memory_space<vmem>>, %arg12: memref<1x32xf32, #tpu.memory_space<vmem>>, %arg13: memref<32x32xf32, #tpu.memory_space<vmem>>, %arg14: memref<1x32xf32, #tpu.memory_space<vmem>>, %arg15: memref<32x16xf32, #tpu.memory_space<vmem>>, %arg16: memref<1x16xf32, #tpu.memory_space<vmem>>, %arg17: memref<16x8xf32, #tpu.memory_space<vmem>>, %arg18: memref<16x8xf32, #tpu.memory_space<vmem>>, %arg19: memref<16x32xf32, #tpu.memory_space<vmem>>) attributes {dimension_semantics = [#tpu.dimension_semantics<arbitrary>], iteration_bounds = array<i64: 1>, scalar_prefetch = 0 : i64, scratch_operands = 1 : i64, tpu.core_type = #tpu.core_type<tc>, window_params = [{pipeline_mode = #tpu.pipeline_mode<synchronous>, transform_indices = @transform_0, window_bounds = array<i64: 8, 2, 128>}, {pipeline_mode = #tpu.pipeline_mode<synchronous>, transform_indices = @transform_1, window_bounds = array<i64: 8, 2, 128>}, {pipeline_mode = #tpu.pipeline_mode<synchronous>, transform_indices = @transform_2, window_bounds = array<i64: 8, 2, 1>}, {pipeline_mode = #tpu.pipeline_mode<synchronous>, transform_indices = @transform_3, window_bounds = array<i64: 16, 8>}, {pipeline_mode = #tpu.pipeline_mode<synchronous>, transform_indices = @transform_4, window_bounds = array<i64: 32, 128>}, {pipeline_mode = #tpu.pipeline_mode<synchronous>, transform_indices = @transform_5, window_bounds = array<i64: 32, 128>}, {pipeline_mode = #tpu.pipeline_mode<synchronous>, transform_indices = @transform_6, window_bounds = array<i64: 32, 128>}, {pipeline_mode = #tpu.pipeline_mode<synchronous>, transform_indices = @transform_7, window_bounds = array<i64: 1, 32, 128>}, {pipeline_mode = #tpu.pipeline_mode<synchronous>, transform_indices = @transform_8, window_bounds = array<i64: 1, 32, 128>}, {pipeline_mode = #tpu.pipeline_mode<synchronous>, transform_indices = @transform_9, window_bounds = array<i64: 1, 1, 128>}, {pipeline_mode = #tpu.pipeline_mode<synchronous>, transform_indices = @transform_10, window_bounds = array<i64: 32, 32>}, {pipeline_mode = #tpu.pipeline_mode<synchronous>, transform_indices = @transform_11, window_bounds = array<i64: 1, 32>}, {pipeline_mode = #tpu.pipeline_mode<synchronous>, transform_indices = @transform_12, window_bounds = array<i64: 32, 32>}, {pipeline_mode = #tpu.pipeline_mode<synchronous>, transform_indices = @transform_13, window_bounds = array<i64: 1, 32>}, {pipeline_mode = #tpu.pipeline_mode<synchronous>, transform_indices = @transform_14, window_bounds = array<i64: 32, 16>}, {pipeline_mode = #tpu.pipeline_mode<synchronous>, transform_indices = @transform_15, window_bounds = array<i64: 1, 16>}, {pipeline_mode = #tpu.pipeline_mode<synchronous>, transform_indices = @transform_16, window_bounds = array<i64: 16, 8>}, {pipeline_mode = #tpu.pipeline_mode<synchronous>, transform_indices = @transform_17, window_bounds = array<i64: 16, 8>}]} {
    %c0 = arith.constant 0 : index
    %c0_0 = arith.constant 0 : index
    %0 = vector.load %arg5[%c0, %c0_0] : memref<32x128xf32, #tpu.memory_space<vmem>>, vector<32x128xf32>
    %c0_1 = arith.constant 0 : index
    %c0_2 = arith.constant 0 : index
    %1 = vector.load %arg6[%c0_1, %c0_2] : memref<32x128xf32, #tpu.memory_space<vmem>>, vector<32x128xf32>
    %c0_3 = arith.constant 0 : index
    %c0_4 = arith.constant 0 : index
    %2 = vector.load %arg7[%c0_3, %c0_4] : memref<32x128xf32, #tpu.memory_space<vmem>>, vector<32x128xf32>
    %c0_5 = arith.constant 0 : index
    %c0_6 = arith.constant 0 : index
    %c0_7 = arith.constant 0 : index
    %3 = vector.load %arg8[%c0_5, %c0_6, %c0_7] : memref<1x32x128xf32, #tpu.memory_space<vmem>>, vector<1x32x128xf32>
    %4 = vector.shape_cast %3 : vector<1x32x128xf32> to vector<32x128xf32>
    %c0_8 = arith.constant 0 : index
    %c0_9 = arith.constant 0 : index
    %c0_10 = arith.constant 0 : index
    %5 = vector.load %arg9[%c0_8, %c0_9, %c0_10] : memref<1x32x128xf32, #tpu.memory_space<vmem>>, vector<1x32x128xf32>
    %6 = vector.shape_cast %5 : vector<1x32x128xf32> to vector<32x128xf32>
    %c0_11 = arith.constant 0 : index
    %c0_12 = arith.constant 0 : index
    %c0_13 = arith.constant 0 : index
    %7 = vector.load %arg10[%c0_11, %c0_12, %c0_13] : memref<1x1x128xf32, #tpu.memory_space<vmem>>, vector<1x1x128xf32>
    %8 = vector.shape_cast %7 : vector<1x1x128xf32> to vector<1x128xf32>
    %cst = arith.constant 0.000000e+00 : f32
    %9 = vector.broadcast %cst : f32 to vector<2x32xf32>
    %c0_i32 = arith.constant 0 : i32
    %c8_i32 = arith.constant 8 : i32
    %10 = arith.addi %c0_i32, %c8_i32 : i32
    %c1_i32 = arith.constant 1 : i32
    %11:6 = scf.for %arg20 = %c0_i32 to %10 step %c1_i32 iter_args(%arg21 = %9, %arg22 = %9, %arg23 = %9, %arg24 = %9, %arg25 = %9, %arg26 = %9) -> (vector<2x32xf32>, vector<2x32xf32>, vector<2x32xf32>, vector<2x32xf32>, vector<2x32xf32>, vector<2x32xf32>)  : i32 {
      %38 = arith.index_cast %arg20 : i32 to index
      %c0_38 = arith.constant 0 : index
      %c0_39 = arith.constant 0 : index
      %39 = vector.load %arg1[%38, %c0_38, %c0_39] : memref<8x2x128xf32, #tpu.memory_space<vmem>>, vector<1x2x128xf32>
      %40 = vector.shape_cast %39 : vector<1x2x128xf32> to vector<2x128xf32>
      %cst_40 = arith.constant dense<0.000000e+00> : vector<2x128xf32>
      %41 = tpu.matmul %arg21, %0, %cst_40 {dimension_numbers = #tpu.dot_dimension_numbers<[1], [0], [0], [1], [0, 0, 1, 1], [], []>, precision = #tpu.contract_precision<fp32>} : vector<2x32xf32>, vector<32x128xf32>, vector<2x128xf32> -> vector<2x128xf32>
      %42 = arith.addf %40, %41 : vector<2x128xf32>
      %43 = vector.extract_strided_slice %42 {offsets = [0, 0], sizes = [2, 32], strides = [1, 1]} : vector<2x128xf32> to vector<2x32xf32>
      %44 = arith.negf %43 : vector<2x32xf32>
      %45 = math.exp %44 : vector<2x32xf32>
      %cst_41 = arith.constant 1.000000e+00 : f32
      %46 = vector.broadcast %cst_41 : f32 to vector<2x32xf32>
      %47 = arith.addf %46, %45 : vector<2x32xf32>
      %48 = arith.divf %46, %47 : vector<2x32xf32>
      %49 = vector.extract_strided_slice %42 {offsets = [0, 32], sizes = [2, 32], strides = [1, 1]} : vector<2x128xf32> to vector<2x32xf32>
      %50 = arith.negf %49 : vector<2x32xf32>
      %51 = math.exp %50 : vector<2x32xf32>
      %cst_42 = arith.constant 1.000000e+00 : f32
      %52 = vector.broadcast %cst_42 : f32 to vector<2x32xf32>
      %53 = arith.addf %52, %51 : vector<2x32xf32>
      %54 = arith.divf %52, %53 : vector<2x32xf32>
      %55 = vector.extract_strided_slice %42 {offsets = [0, 64], sizes = [2, 32], strides = [1, 1]} : vector<2x128xf32> to vector<2x32xf32>
      %56 = math.tanh %55 : vector<2x32xf32>
      %57 = vector.extract_strided_slice %42 {offsets = [0, 96], sizes = [2, 32], strides = [1, 1]} : vector<2x128xf32> to vector<2x32xf32>
      %58 = arith.negf %57 : vector<2x32xf32>
      %59 = math.exp %58 : vector<2x32xf32>
      %cst_43 = arith.constant 1.000000e+00 : f32
      %60 = vector.broadcast %cst_43 : f32 to vector<2x32xf32>
      %61 = arith.addf %60, %59 : vector<2x32xf32>
      %62 = arith.divf %60, %61 : vector<2x32xf32>
      %63 = arith.mulf %54, %arg22 : vector<2x32xf32>
      %64 = arith.mulf %48, %56 : vector<2x32xf32>
      %65 = arith.addf %63, %64 : vector<2x32xf32>
      %66 = math.tanh %65 : vector<2x32xf32>
      %67 = arith.mulf %62, %66 : vector<2x32xf32>
      %68 = arith.index_cast %arg20 : i32 to index
      %c0_44 = arith.constant 0 : index
      %c0_45 = arith.constant 0 : index
      %69 = vector.load %arg2[%68, %c0_44, %c0_45] : memref<8x2x128xf32, #tpu.memory_space<vmem>>, vector<1x2x128xf32>
      %70 = vector.shape_cast %69 : vector<1x2x128xf32> to vector<2x128xf32>
      %cst_46 = arith.constant dense<0.000000e+00> : vector<2x128xf32>
      %71 = tpu.matmul %67, %1, %cst_46 {dimension_numbers = #tpu.dot_dimension_numbers<[1], [0], [0], [1], [0, 0, 1, 1], [], []>, precision = #tpu.contract_precision<fp32>} : vector<2x32xf32>, vector<32x128xf32>, vector<2x128xf32> -> vector<2x128xf32>
      %72 = arith.addf %70, %71 : vector<2x128xf32>
      %cst_47 = arith.constant dense<0.000000e+00> : vector<2x128xf32>
      %73 = tpu.matmul %arg23, %2, %cst_47 {dimension_numbers = #tpu.dot_dimension_numbers<[1], [0], [0], [1], [0, 0, 1, 1], [], []>, precision = #tpu.contract_precision<fp32>} : vector<2x32xf32>, vector<32x128xf32>, vector<2x128xf32> -> vector<2x128xf32>
      %74 = arith.addf %72, %73 : vector<2x128xf32>
      %75 = vector.extract_strided_slice %74 {offsets = [0, 0], sizes = [2, 32], strides = [1, 1]} : vector<2x128xf32> to vector<2x32xf32>
      %76 = arith.negf %75 : vector<2x32xf32>
      %77 = math.exp %76 : vector<2x32xf32>
      %cst_48 = arith.constant 1.000000e+00 : f32
      %78 = vector.broadcast %cst_48 : f32 to vector<2x32xf32>
      %79 = arith.addf %78, %77 : vector<2x32xf32>
      %80 = arith.divf %78, %79 : vector<2x32xf32>
      %81 = vector.extract_strided_slice %74 {offsets = [0, 32], sizes = [2, 32], strides = [1, 1]} : vector<2x128xf32> to vector<2x32xf32>
      %82 = arith.negf %81 : vector<2x32xf32>
      %83 = math.exp %82 : vector<2x32xf32>
      %cst_49 = arith.constant 1.000000e+00 : f32
      %84 = vector.broadcast %cst_49 : f32 to vector<2x32xf32>
      %85 = arith.addf %84, %83 : vector<2x32xf32>
      %86 = arith.divf %84, %85 : vector<2x32xf32>
      %87 = vector.extract_strided_slice %74 {offsets = [0, 64], sizes = [2, 32], strides = [1, 1]} : vector<2x128xf32> to vector<2x32xf32>
      %88 = math.tanh %87 : vector<2x32xf32>
      %89 = vector.extract_strided_slice %74 {offsets = [0, 96], sizes = [2, 32], strides = [1, 1]} : vector<2x128xf32> to vector<2x32xf32>
      %90 = arith.negf %89 : vector<2x32xf32>
      %91 = math.exp %90 : vector<2x32xf32>
      %cst_50 = arith.constant 1.000000e+00 : f32
      %92 = vector.broadcast %cst_50 : f32 to vector<2x32xf32>
      %93 = arith.addf %92, %91 : vector<2x32xf32>
      %94 = arith.divf %92, %93 : vector<2x32xf32>
      %95 = arith.mulf %86, %arg25 : vector<2x32xf32>
      %96 = arith.mulf %80, %88 : vector<2x32xf32>
      %97 = arith.addf %95, %96 : vector<2x32xf32>
      %98 = math.tanh %97 : vector<2x32xf32>
      %99 = arith.mulf %94, %98 : vector<2x32xf32>
      %cst_51 = arith.constant dense<0.000000e+00> : vector<2x128xf32>
      %100 = tpu.matmul %99, %4, %cst_51 {dimension_numbers = #tpu.dot_dimension_numbers<[1], [0], [0], [1], [0, 0, 1, 1], [], []>, precision = #tpu.contract_precision<fp32>} : vector<2x32xf32>, vector<32x128xf32>, vector<2x128xf32> -> vector<2x128xf32>
      %cst_52 = arith.constant dense<0.000000e+00> : vector<2x128xf32>
      %101 = tpu.matmul %arg24, %6, %cst_52 {dimension_numbers = #tpu.dot_dimension_numbers<[1], [0], [0], [1], [0, 0, 1, 1], [], []>, precision = #tpu.contract_precision<fp32>} : vector<2x32xf32>, vector<32x128xf32>, vector<2x128xf32> -> vector<2x128xf32>
      %102 = arith.addf %100, %101 : vector<2x128xf32>
      %103 = vector.broadcast %8 : vector<1x128xf32> to vector<2x128xf32>
      %104 = arith.addf %102, %103 : vector<2x128xf32>
      %105 = vector.extract_strided_slice %104 {offsets = [0, 0], sizes = [2, 32], strides = [1, 1]} : vector<2x128xf32> to vector<2x32xf32>
      %106 = arith.negf %105 : vector<2x32xf32>
      %107 = math.exp %106 : vector<2x32xf32>
      %cst_53 = arith.constant 1.000000e+00 : f32
      %108 = vector.broadcast %cst_53 : f32 to vector<2x32xf32>
      %109 = arith.addf %108, %107 : vector<2x32xf32>
      %110 = arith.divf %108, %109 : vector<2x32xf32>
      %111 = vector.extract_strided_slice %104 {offsets = [0, 32], sizes = [2, 32], strides = [1, 1]} : vector<2x128xf32> to vector<2x32xf32>
      %112 = arith.negf %111 : vector<2x32xf32>
      %113 = math.exp %112 : vector<2x32xf32>
      %cst_54 = arith.constant 1.000000e+00 : f32
      %114 = vector.broadcast %cst_54 : f32 to vector<2x32xf32>
      %115 = arith.addf %114, %113 : vector<2x32xf32>
      %116 = arith.divf %114, %115 : vector<2x32xf32>
      %117 = vector.extract_strided_slice %104 {offsets = [0, 64], sizes = [2, 32], strides = [1, 1]} : vector<2x128xf32> to vector<2x32xf32>
      %118 = math.tanh %117 : vector<2x32xf32>
      %119 = vector.extract_strided_slice %104 {offsets = [0, 96], sizes = [2, 32], strides = [1, 1]} : vector<2x128xf32> to vector<2x32xf32>
      %120 = arith.negf %119 : vector<2x32xf32>
      %121 = math.exp %120 : vector<2x32xf32>
      %cst_55 = arith.constant 1.000000e+00 : f32
      %122 = vector.broadcast %cst_55 : f32 to vector<2x32xf32>
      %123 = arith.addf %122, %121 : vector<2x32xf32>
      %124 = arith.divf %122, %123 : vector<2x32xf32>
      %125 = arith.mulf %116, %arg26 : vector<2x32xf32>
      %126 = arith.mulf %110, %118 : vector<2x32xf32>
      %127 = arith.addf %125, %126 : vector<2x32xf32>
      %128 = math.tanh %127 : vector<2x32xf32>
      %129 = arith.mulf %124, %128 : vector<2x32xf32>
      %130 = arith.index_cast %arg20 : i32 to index
      %c0_56 = arith.constant 0 : index
      %c0_57 = arith.constant 0 : index
      %131 = vector.load %arg3[%130, %c0_56, %c0_57] : memref<8x2x1xf32, #tpu.memory_space<vmem>>, vector<1x2x1xf32>
      %132 = vector.shape_cast %131 : vector<1x2x1xf32> to vector<2x1xf32>
      %133 = vector.broadcast %132 : vector<2x1xf32> to vector<2x32xf32>
      %134 = arith.mulf %129, %133 : vector<2x32xf32>
      %c2_i32 = arith.constant 2 : i32
      %135 = arith.muli %arg20, %c2_i32 : i32
      %136 = arith.index_cast %135 : i32 to index
      %c0_58 = arith.constant 0 : index
      %137 = vector.load %arg19[%136, %c0_58] : memref<16x32xf32, #tpu.memory_space<vmem>>, vector<2x32xf32>
      tpu.vector_store %arg19[%136, %c0_58], %134 {strides = array<i32>} : memref<16x32xf32, #tpu.memory_space<vmem>>, vector<2x32xf32>,
      scf.yield %67, %65, %99, %129, %97, %127 : vector<2x32xf32>, vector<2x32xf32>, vector<2x32xf32>, vector<2x32xf32>, vector<2x32xf32>, vector<2x32xf32>
    }
    %c8_i32_14 = arith.constant 8 : i32
    %c0_15 = arith.constant 0 : index
    %c0_16 = arith.constant 0 : index
    %12 = vector.load %arg19[%c0_15, %c0_16] : memref<16x32xf32, #tpu.memory_space<vmem>>, vector<16x32xf32>
    %c0_17 = arith.constant 0 : index
    %c0_18 = arith.constant 0 : index
    %13 = vector.load %arg11[%c0_17, %c0_18] : memref<32x32xf32, #tpu.memory_space<vmem>>, vector<32x32xf32>
    %cst_19 = arith.constant dense<0.000000e+00> : vector<16x32xf32>
    %14 = tpu.matmul %12, %13, %cst_19 {dimension_numbers = #tpu.dot_dimension_numbers<[1], [0], [0], [1], [0, 0, 1, 1], [], []>, precision = #tpu.contract_precision<fp32>} : vector<16x32xf32>, vector<32x32xf32>, vector<16x32xf32> -> vector<16x32xf32>
    %c0_20 = arith.constant 0 : index
    %c0_21 = arith.constant 0 : index
    %15 = vector.load %arg12[%c0_20, %c0_21] : memref<1x32xf32, #tpu.memory_space<vmem>>, vector<1x32xf32>
    %16 = vector.broadcast %15 : vector<1x32xf32> to vector<16x32xf32>
    %17 = arith.addf %14, %16 : vector<16x32xf32>
    %18 = math.tanh %17 : vector<16x32xf32>
    %c0_22 = arith.constant 0 : index
    %c0_23 = arith.constant 0 : index
    %19 = vector.load %arg13[%c0_22, %c0_23] : memref<32x32xf32, #tpu.memory_space<vmem>>, vector<32x32xf32>
    %cst_24 = arith.constant dense<0.000000e+00> : vector<16x32xf32>
    %20 = tpu.matmul %18, %19, %cst_24 {dimension_numbers = #tpu.dot_dimension_numbers<[1], [0], [0], [1], [0, 0, 1, 1], [], []>, precision = #tpu.contract_precision<fp32>} : vector<16x32xf32>, vector<32x32xf32>, vector<16x32xf32> -> vector<16x32xf32>
    %c0_25 = arith.constant 0 : index
    %c0_26 = arith.constant 0 : index
    %21 = vector.load %arg14[%c0_25, %c0_26] : memref<1x32xf32, #tpu.memory_space<vmem>>, vector<1x32xf32>
    %22 = vector.broadcast %21 : vector<1x32xf32> to vector<16x32xf32>
    %23 = arith.addf %20, %22 : vector<16x32xf32>
    %24 = math.tanh %23 : vector<16x32xf32>
    %c0_27 = arith.constant 0 : index
    %c0_28 = arith.constant 0 : index
    %25 = vector.load %arg15[%c0_27, %c0_28] : memref<32x16xf32, #tpu.memory_space<vmem>>, vector<32x16xf32>
    %cst_29 = arith.constant dense<0.000000e+00> : vector<16x16xf32>
    %26 = tpu.matmul %24, %25, %cst_29 {dimension_numbers = #tpu.dot_dimension_numbers<[1], [0], [0], [1], [0, 0, 1, 1], [], []>, precision = #tpu.contract_precision<fp32>} : vector<16x32xf32>, vector<32x16xf32>, vector<16x16xf32> -> vector<16x16xf32>
    %c0_30 = arith.constant 0 : index
    %c0_31 = arith.constant 0 : index
    %27 = vector.load %arg16[%c0_30, %c0_31] : memref<1x16xf32, #tpu.memory_space<vmem>>, vector<1x16xf32>
    %28 = vector.broadcast %27 : vector<1x16xf32> to vector<16x16xf32>
    %29 = arith.addf %26, %28 : vector<16x16xf32>
    %30 = vector.extract_strided_slice %29 {offsets = [0, 0], sizes = [16, 8], strides = [1, 1]} : vector<16x16xf32> to vector<16x8xf32>
    %31 = vector.extract_strided_slice %29 {offsets = [0, 8], sizes = [16, 8], strides = [1, 1]} : vector<16x16xf32> to vector<16x8xf32>
    %32 = math.exp %30 : vector<16x8xf32>
    %c0_32 = arith.constant 0 : index
    %c0_33 = arith.constant 0 : index
    %33 = vector.load %arg4[%c0_32, %c0_33] : memref<16x8xf32, #tpu.memory_space<vmem>>, vector<16x8xf32>
    %34 = arith.mulf %32, %33 : vector<16x8xf32>
    %35 = arith.addf %34, %31 : vector<16x8xf32>
    %c0_34 = arith.constant 0 : index
    %c0_35 = arith.constant 0 : index
    %36 = vector.load %arg17[%c0_34, %c0_35] : memref<16x8xf32, #tpu.memory_space<vmem>>, vector<16x8xf32>
    tpu.vector_store %arg17[%c0_34, %c0_35], %35 {strides = array<i32>} : memref<16x8xf32, #tpu.memory_space<vmem>>, vector<16x8xf32>,
    %c0_36 = arith.constant 0 : index
    %c0_37 = arith.constant 0 : index
    %37 = vector.load %arg18[%c0_36, %c0_37] : memref<16x8xf32, #tpu.memory_space<vmem>>, vector<16x8xf32>
    tpu.vector_store %arg18[%c0_36, %c0_37], %30 {strides = array<i32>} : memref<16x8xf32, #tpu.memory_space<vmem>>, vector<16x8xf32>,
    return
  }
  func.func @transform_0(%arg0: i32) -> (i32, i32, i32) {
    %c0_i32 = arith.constant 0 : i32
    %c0_i32_0 = arith.constant 0 : i32
    %c0_i32_1 = arith.constant 0 : i32
    %c0_i32_2 = arith.constant 0 : i32
    return %c0_i32, %c0_i32_0, %c0_i32_1 : i32, i32, i32
  }
  func.func @transform_1(%arg0: i32) -> (i32, i32, i32) {
    %c0_i32 = arith.constant 0 : i32
    %c0_i32_0 = arith.constant 0 : i32
    %c0_i32_1 = arith.constant 0 : i32
    %c0_i32_2 = arith.constant 0 : i32
    return %c0_i32, %c0_i32_0, %c0_i32_1 : i32, i32, i32
  }
  func.func @transform_2(%arg0: i32) -> (i32, i32, i32) {
    %c0_i32 = arith.constant 0 : i32
    %c0_i32_0 = arith.constant 0 : i32
    %c0_i32_1 = arith.constant 0 : i32
    %c0_i32_2 = arith.constant 0 : i32
    return %c0_i32, %c0_i32_0, %c0_i32_1 : i32, i32, i32
  }
  func.func @transform_3(%arg0: i32) -> (i32, i32) {
    %c0_i32 = arith.constant 0 : i32
    %c0_i32_0 = arith.constant 0 : i32
    %c0_i32_1 = arith.constant 0 : i32
    return %c0_i32, %c0_i32_0 : i32, i32
  }
  func.func @transform_4(%arg0: i32) -> (i32, i32) {
    %c0_i32 = arith.constant 0 : i32
    %c0_i32_0 = arith.constant 0 : i32
    %c0_i32_1 = arith.constant 0 : i32
    return %c0_i32, %c0_i32_0 : i32, i32
  }
  func.func @transform_5(%arg0: i32) -> (i32, i32) {
    %c0_i32 = arith.constant 0 : i32
    %c0_i32_0 = arith.constant 0 : i32
    %c0_i32_1 = arith.constant 0 : i32
    return %c0_i32, %c0_i32_0 : i32, i32
  }
  func.func @transform_6(%arg0: i32) -> (i32, i32) {
    %c0_i32 = arith.constant 0 : i32
    %c0_i32_0 = arith.constant 0 : i32
    %c0_i32_1 = arith.constant 0 : i32
    return %c0_i32, %c0_i32_0 : i32, i32
  }
  func.func @transform_7(%arg0: i32) -> (i32, i32, i32) {
    %c0_i32 = arith.constant 0 : i32
    %c0_i32_0 = arith.constant 0 : i32
    %c0_i32_1 = arith.constant 0 : i32
    %c0_i32_2 = arith.constant 0 : i32
    return %c0_i32, %c0_i32_0, %c0_i32_1 : i32, i32, i32
  }
  func.func @transform_8(%arg0: i32) -> (i32, i32, i32) {
    %c0_i32 = arith.constant 0 : i32
    %c0_i32_0 = arith.constant 0 : i32
    %c0_i32_1 = arith.constant 0 : i32
    %c0_i32_2 = arith.constant 0 : i32
    return %c0_i32, %c0_i32_0, %c0_i32_1 : i32, i32, i32
  }
  func.func @transform_9(%arg0: i32) -> (i32, i32, i32) {
    %c0_i32 = arith.constant 0 : i32
    %c0_i32_0 = arith.constant 0 : i32
    %c0_i32_1 = arith.constant 0 : i32
    %c0_i32_2 = arith.constant 0 : i32
    return %c0_i32, %c0_i32_0, %c0_i32_1 : i32, i32, i32
  }
  func.func @transform_10(%arg0: i32) -> (i32, i32) {
    %c0_i32 = arith.constant 0 : i32
    %c0_i32_0 = arith.constant 0 : i32
    %c0_i32_1 = arith.constant 0 : i32
    return %c0_i32, %c0_i32_0 : i32, i32
  }
  func.func @transform_11(%arg0: i32) -> (i32, i32) {
    %c0_i32 = arith.constant 0 : i32
    %c0_i32_0 = arith.constant 0 : i32
    %c0_i32_1 = arith.constant 0 : i32
    return %c0_i32, %c0_i32_0 : i32, i32
  }
  func.func @transform_12(%arg0: i32) -> (i32, i32) {
    %c0_i32 = arith.constant 0 : i32
    %c0_i32_0 = arith.constant 0 : i32
    %c0_i32_1 = arith.constant 0 : i32
    return %c0_i32, %c0_i32_0 : i32, i32
  }
  func.func @transform_13(%arg0: i32) -> (i32, i32) {
    %c0_i32 = arith.constant 0 : i32
    %c0_i32_0 = arith.constant 0 : i32
    %c0_i32_1 = arith.constant 0 : i32
    return %c0_i32, %c0_i32_0 : i32, i32
  }
  func.func @transform_14(%arg0: i32) -> (i32, i32) {
    %c0_i32 = arith.constant 0 : i32
    %c0_i32_0 = arith.constant 0 : i32
    %c0_i32_1 = arith.constant 0 : i32
    return %c0_i32, %c0_i32_0 : i32, i32
  }
  func.func @transform_15(%arg0: i32) -> (i32, i32) {
    %c0_i32 = arith.constant 0 : i32
    %c0_i32_0 = arith.constant 0 : i32
    %c0_i32_1 = arith.constant 0 : i32
    return %c0_i32, %c0_i32_0 : i32, i32
  }
  func.func @transform_16(%arg0: i32) -> (i32, i32) {
    %c0_i32 = arith.constant 0 : i32
    %c0_i32_0 = arith.constant 0 : i32
    %c0_i32_1 = arith.constant 0 : i32
    return %c0_i32, %c0_i32_0 : i32, i32
  }
  func.func @transform_17(%arg0: i32) -> (i32, i32) {
    %c0_i32 = arith.constant 0 : i32
    %c0_i32_0 = arith.constant 0 : i32
    %c0_i32_1 = arith.constant 0 : i32
    return %c0_i32, %c0_i32_0 : i32, i32
  }
}

</mosaic_0001>

<llo_original>
// kernel: ar_back_step_forward.1
$region0: #{ar_back_step_forward.1}
  #allocation0 [shape = 'u32[]', space=smem, size = 0x4, offset = 0x4, fixed_abs, tag = 'smem constant byte address 0x4 - core index']
  #allocation1 [shape = 'u32[144,128]{1,0:T(1,128)}', space=vmem, size = 0x12000, scoped, tag = 'internal scratch']
  #allocation2 [shape = 'f32[16,32]{1,0:T(8,128)}', space=vmem, size = 0x2000, scoped, tag = 'scratch operand']
  %s0 = inlined_call_operand.vmem [shape: f32[8,2,128], index: 0, kind: input, shape index: {}]
  %s1 = inlined_call_operand.vmem [shape: f32[8,2,128], index: 1, kind: input, shape index: {}]
  %s2 = inlined_call_operand.vmem [shape: f32[8,2,1], index: 2, kind: input, shape index: {}]
  %s3 = inlined_call_operand.vmem [shape: f32[16,8], index: 3, kind: input, shape index: {}]
  %s4 = inlined_call_operand.vmem [shape: f32[32,128], index: 4, kind: input, shape index: {}]
  %s5 = inlined_call_operand.vmem [shape: f32[32,128], index: 5, kind: input, shape index: {}]
  %s6 = inlined_call_operand.vmem [shape: f32[32,128], index: 6, kind: input, shape index: {}]
  %s7 = inlined_call_operand.vmem [shape: f32[1,32,128], index: 7, kind: input, shape index: {}]
  %s8 = inlined_call_operand.vmem [shape: f32[1,32,128], index: 8, kind: input, shape index: {}]
  %s9 = inlined_call_operand.vmem [shape: f32[1,1,128], index: 9, kind: input, shape index: {}]
  %s10 = inlined_call_operand.vmem [shape: f32[32,32], index: 10, kind: input, shape index: {}]
  %s11 = inlined_call_operand.vmem [shape: f32[1,32], index: 11, kind: input, shape index: {}]
  %s12 = inlined_call_operand.vmem [shape: f32[32,32], index: 12, kind: input, shape index: {}]
  %s13 = inlined_call_operand.vmem [shape: f32[1,32], index: 13, kind: input, shape index: {}]
  %s14 = inlined_call_operand.vmem [shape: f32[32,16], index: 14, kind: input, shape index: {}]
  %s15 = inlined_call_operand.vmem [shape: f32[1,16], index: 15, kind: input, shape index: {}]
  %s16 = inlined_call_operand.vmem [shape: f32[16,8], index: 16, kind: output, shape index: {0}]
  %s17 = inlined_call_operand.hbm [shape: f32[16,8], index: 17, kind: output, shape index: {1}]
  %18 = xla_tuple %s16, %s17
  %s19 = sld [smem:[#allocation0]]
  $region89: #{ar_back_step_forward.1} parent=0
    _
  %s21 = ssub.s32 1, %s19
  %s22 = scalar_select 0, %s21, %s19
  $region1: #{ar_back_step_forward.1} parent=0
    #allocation3 [shape = 'u8[8192]{0}', space=vmem, size = 0x2000, scoped, tag = 'output window, operand 1, single buffered']
    #allocation4 [shape = 's32[1]{0}', space=sflag, size = 0x4, scoped, tag = 'scoped memory for ar_back_step_forward.1']
    %23 = vsyncpa [#allocation4], 0
    // Predicated region
    $region2: #{ar_back_step_forward.1} parent=1 // pred_check
      _
    $region3: #{ar_back_step_forward.1} parent=1 // pred_check_branch
      %25 = sbr.rel (0) target = $region5
    $region4: #{ar_back_step_forward.1} parent=1 // pred_region
      _
    $region5: #{ar_back_step_forward.1} parent=1 // pred_fallthru
      _
    // Predicated region
    $region6: #{ar_back_step_forward.1} parent=1 // pred_check
      _
    $region7: #{ar_back_step_forward.1} parent=1 // pred_check_branch
      %27 = sbr.rel (0) target = $region9
    $region8: #{ar_back_step_forward.1} parent=1 // pred_region
      _
    $region9: #{ar_back_step_forward.1} parent=1 // pred_fallthru
      _
    // Predicated region
    $region10: #{ar_back_step_forward.1} parent=1 // pred_check
      _
    $region11: #{ar_back_step_forward.1} parent=1 // pred_check_branch
      %29 = sbr.rel (0) target = $region13
    $region12: #{ar_back_step_forward.1} parent=1 // pred_region
      _
    $region13: #{ar_back_step_forward.1} parent=1 // pred_fallthru
      _
    // Predicated region
    $region14: #{ar_back_step_forward.1} parent=1 // pred_check
      _
    $region15: #{ar_back_step_forward.1} parent=1 // pred_check_branch
      %31 = sbr.rel (0) target = $region17
    $region16: #{ar_back_step_forward.1} parent=1 // pred_region
      _
    $region17: #{ar_back_step_forward.1} parent=1 // pred_fallthru
      _
    // Predicated region
    $region18: #{ar_back_step_forward.1} parent=1 // pred_check
      _
    $region19: #{ar_back_step_forward.1} parent=1 // pred_check_branch
      %33 = sbr.rel (0) target = $region21
    $region20: #{ar_back_step_forward.1} parent=1 // pred_region
      _
    $region21: #{ar_back_step_forward.1} parent=1 // pred_fallthru
      _
    // Predicated region
    $region22: #{ar_back_step_forward.1} parent=1 // pred_check
      _
    $region23: #{ar_back_step_forward.1} parent=1 // pred_check_branch
      %35 = sbr.rel (0) target = $region25
    $region24: #{ar_back_step_forward.1} parent=1 // pred_region
      _
    $region25: #{ar_back_step_forward.1} parent=1 // pred_fallthru
      _
    // Predicated region
    $region26: #{ar_back_step_forward.1} parent=1 // pred_check
      _
    $region27: #{ar_back_step_forward.1} parent=1 // pred_check_branch
      %37 = sbr.rel (0) target = $region29
    $region28: #{ar_back_step_forward.1} parent=1 // pred_region
      _
    $region29: #{ar_back_step_forward.1} parent=1 // pred_fallthru
      _
    // Predicated region
    $region30: #{ar_back_step_forward.1} parent=1 // pred_check
      _
    $region31: #{ar_back_step_forward.1} parent=1 // pred_check_branch
      %39 = sbr.rel (0) target = $region33
    $region32: #{ar_back_step_forward.1} parent=1 // pred_region
      _
    $region33: #{ar_back_step_forward.1} parent=1 // pred_fallthru
      _
    // Predicated region
    $region34: #{ar_back_step_forward.1} parent=1 // pred_check
      _
    $region35: #{ar_back_step_forward.1} parent=1 // pred_check_branch
      %41 = sbr.rel (0) target = $region37
    $region36: #{ar_back_step_forward.1} parent=1 // pred_region
      _
    $region37: #{ar_back_step_forward.1} parent=1 // pred_fallthru
      _
    // Predicated region
    $region38: #{ar_back_step_forward.1} parent=1 // pred_check
      _
    $region39: #{ar_back_step_forward.1} parent=1 // pred_check_branch
      %43 = sbr.rel (0) target = $region41
    $region40: #{ar_back_step_forward.1} parent=1 // pred_region
      _
    $region41: #{ar_back_step_forward.1} parent=1 // pred_fallthru
      _
    // Predicated region
    $region42: #{ar_back_step_forward.1} parent=1 // pred_check
      _
    $region43: #{ar_back_step_forward.1} parent=1 // pred_check_branch
      %45 = sbr.rel (0) target = $region45
    $region44: #{ar_back_step_forward.1} parent=1 // pred_region
      _
    $region45: #{ar_back_step_forward.1} parent=1 // pred_fallthru
      _
    // Predicated region
    $region46: #{ar_back_step_forward.1} parent=1 // pred_check
      _
    $region47: #{ar_back_step_forward.1} parent=1 // pred_check_branch
      %47 = sbr.rel (0) target = $region49
    $region48: #{ar_back_step_forward.1} parent=1 // pred_region
      _
    $region49: #{ar_back_step_forward.1} parent=1 // pred_fallthru
      _
    // Predicated region
    $region50: #{ar_back_step_forward.1} parent=1 // pred_check
      _
    $region51: #{ar_back_step_forward.1} parent=1 // pred_check_branch
      %49 = sbr.rel (0) target = $region53
    $region52: #{ar_back_step_forward.1} parent=1 // pred_region
      _
    $region53: #{ar_back_step_forward.1} parent=1 // pred_fallthru
      _
    // Predicated region
    $region54: #{ar_back_step_forward.1} parent=1 // pred_check
      _
    $region55: #{ar_back_step_forward.1} parent=1 // pred_check_branch
      %51 = sbr.rel (0) target = $region57
    $region56: #{ar_back_step_forward.1} parent=1 // pred_region
      _
    $region57: #{ar_back_step_forward.1} parent=1 // pred_fallthru
      _
    // Predicated region
    $region58: #{ar_back_step_forward.1} parent=1 // pred_check
      _
    $region59: #{ar_back_step_forward.1} parent=1 // pred_check_branch
      %53 = sbr.rel (0) target = $region61
    $region60: #{ar_back_step_forward.1} parent=1 // pred_region
      _
    $region61: #{ar_back_step_forward.1} parent=1 // pred_fallthru
      _
    // Predicated region
    $region62: #{ar_back_step_forward.1} parent=1 // pred_check
      _
    $region63: #{ar_back_step_forward.1} parent=1 // pred_check_branch
      %55 = sbr.rel (0) target = $region65
    $region64: #{ar_back_step_forward.1} parent=1 // pred_region
      _
    $region65: #{ar_back_step_forward.1} parent=1 // pred_fallthru
      _
    %v56 = vld [vmem:[%s4] sm:$0xff]
    %v57 = vld [vmem:[%s4 + $0x8] sm:$0xff]
    %v58 = vld [vmem:[%s4 + $0x10] sm:$0xff]
    %v59 = vld [vmem:[%s4 + $0x18] sm:$0xff]
    %v60 = vld [vmem:[%s5] sm:$0xff]
    %v61 = vld [vmem:[%s5 + $0x8] sm:$0xff]
    %v62 = vld [vmem:[%s5 + $0x10] sm:$0xff]
    %v63 = vld [vmem:[%s5 + $0x18] sm:$0xff]
    %v64 = vld [vmem:[%s6] sm:$0xff]
    %v65 = vld [vmem:[%s6 + $0x8] sm:$0xff]
    %v66 = vld [vmem:[%s6 + $0x10] sm:$0xff]
    %v67 = vld [vmem:[%s6 + $0x18] sm:$0xff]
    %v68 = vld [vmem:[%s7] sm:$0xff]
    %v69 = vld [vmem:[%s7 + $0x8] sm:$0xff]
    %v70 = vld [vmem:[%s7 + $0x10] sm:$0xff]
    %v71 = vld [vmem:[%s7 + $0x18] sm:$0xff]
    %v72 = vld [vmem:[%s8] sm:$0xff]
    %v73 = vld [vmem:[%s8 + $0x8] sm:$0xff]
    %v74 = vld [vmem:[%s8 + $0x10] sm:$0xff]
    %v75 = vld [vmem:[%s8 + $0x18] sm:$0xff]
    %v76 = vld [vmem:[%s9] sm:$0x1]
    loop: start=0, step=1, limit=8
    $region66: #{ar_back_step_forward.1} parent=1 // loop_pre_header
      _
    $region67: #{ar_back_step_forward.1} parent=1 // loop_header
      %s78 = sphi 0, %s82
      %p79 = scmp.ge.s32.totalorder %s78, 8
      %v83 = vphi 0.0, %v607
      %v84 = vphi 0.0, %v601
      %v85 = vphi 0.0, %v1615
      %v86 = vphi 0.0, %v2626
      %v87 = vphi 0.0, %v1609
      %v88 = vphi 0.0, %v2620
    $region68: #{ar_back_step_forward.1} parent=1 // loop_header_branch
      %81 = sbr.rel (%p79) target = $region72
    $region69: #{ar_back_step_forward.1} parent=1 // loop_body
      %s89 = smul.u32 %s78, 2
      %s90 = scalar_lea.vmem %s0, %s89
      %v91 = vld [vmem:[%s90] sm:$0x3]
      %93 = vrot.lane.b32.xlu0 %v83, 32
      %v94 = vpop.permute.xlu0 %93
      %vm95 = vcmask 261120
      %v96 = vsel %vm95, %v94, 0
      %98 = vmatprep.subr.mxu0 0.0
      %v99 = vand.u32 %v56, 4294901760
      %100 = vmatpush1.msra.mxu0 %v99
      %101 = vmatprep.subr.mxu0 0.0
      %v102 = vand.u32 %v57, 4294901760
      %103 = vmatpush1.msra.mxu0 %v102
      %104 = vmatprep.subr.mxu0 0.0
      %v105 = vand.u32 %v58, 4294901760
      %106 = vmatpush1.msra.mxu0 %v105
      %107 = vmatprep.subr.mxu0 0.0
      %v108 = vand.u32 %v59, 4294901760
      %109 = vmatpush1.msra.mxu0 %v108
      %110 = vmatprep.subr.mxu0 0.0
      %111 = vmatpush1.msra.mxu0 0.0
      %112 = vmatprep.subr.mxu0 0.0
      %113 = vmatpush1.msra.mxu0 0.0
      %114 = vmatprep.subr.mxu0 0.0
      %115 = vmatpush1.msra.mxu0 0.0
      %116 = vmatprep.subr.mxu0 0.0
      %117 = vmatpush1.msra.mxu0 0.0
      %118 = vmatprep.subr.mxu0 0.0
      %119 = vmatpush1.msra.mxu0 0.0
      %120 = vmatprep.subr.mxu0 0.0
      %121 = vmatpush1.msra.mxu0 0.0
      %122 = vmatprep.subr.mxu0 0.0
      %123 = vmatpush1.msra.mxu0 0.0
      %124 = vmatprep.subr.mxu0 0.0
      %125 = vmatpush1.msra.mxu0 0.0
      %126 = vmatprep.subr.mxu0 0.0
      %127 = vmatpush1.msra.mxu0 0.0
      %128 = vmatprep.subr.mxu0 0.0
      %129 = vmatpush1.msra.mxu0 0.0
      %130 = vmatprep.subr.mxu0 0.0
      %131 = vmatpush1.msra.mxu0 0.0
      %132 = vmatprep.subr.mxu0 0.0
      %133 = vmatpush1.msra.mxu0 0.0
      %134 = vmatprep.subr.mxu0 0.0
      %135 = vmatpush1.msra.mxu0 0.0
      %136 = vmatprep.subr.mxu0 0.0
      %137 = vmatpush1.msra.mxu0 0.0
      %138 = vmatprep.subr.mxu0 0.0
      %139 = vmatpush1.msra.mxu0 0.0
      %140 = vmatprep.subr.mxu0 0.0
      %141 = vmatpush1.msra.mxu0 0.0
      %142 = vmatprep.subr.mxu0 0.0
      %143 = vmatpush1.msra.mxu0 0.0
      %144 = vmatprep.subr.mxu0 0.0
      %145 = vmatpush1.msra.mxu0 0.0
      %146 = vmatprep.subr.mxu0 0.0
      %147 = vmatpush1.msra.mxu0 0.0
      %148 = vmatprep.subr.mxu0 0.0
      %149 = vmatpush1.msra.mxu0 0.0
      %150 = vmatprep.subr.mxu0 0.0
      %151 = vmatpush1.msra.mxu0 0.0
      %152 = vmatprep.subr.mxu0 0.0
      %153 = vmatpush1.msra.mxu0 0.0
      %154 = vmatprep.subr.mxu0 0.0
      %155 = vmatpush1.msra.mxu0 0.0
      %156 = vmatprep.subr.mxu0 0.0
      %157 = vmatpush1.msra.mxu0 0.0
      %158 = vmatprep.subr.mxu0 0.0
      %159 = vmatpush1.msra.mxu0 0.0
      %160 = vmatprep.subr.mxu0 0.0
      %161 = vmatpush1.msra.mxu0 0.0
      %162 = vmatprep.subr.mxu0 0.0
      %163 = vmatpush1.msra.mxu0 0.0
      %164 = vmatprep.subr.mxu0 0.0
      %165 = vmatpush1.msra.mxu0 0.0
      %166 = vmatprep.mubr.f32.mxu0 0.0
      %v167 = vand.u32 %v96, 4294901760
      %v168 = vsub.f32 %v96, %v167
      %v169 = vand.u32 %v168, 4294901760
      %v170 = vsub.f32 %v168, %v169
      %v171 = vand.u32 %v170, 4294901760
      %172 = vmatmul.mubr.f32.gmra.mrb[0].mxu0 %v171
      %v173 = vpop.f32.mrb[0].mxu0
      %v174 = vadd.f32 0.0, %v173
      %v175 = vpop.f32.mrb[0].mxu0
      %176 = vdwg.mxu0
      %177 = vmatprep.subr.mxu0 0.0
      %v178 = vand.u32 %v56, 4294901760
      %v179 = vsub.f32 %v56, %v178
      %v180 = vand.u32 %v179, 4294901760
      %v181 = vsub.f32 %v179, %v180
      %v182 = vand.u32 %v181, 4294901760
      %183 = vmatpush1.msra.mxu0 %v182
      %184 = vmatprep.subr.mxu0 0.0
      %v185 = vand.u32 %v57, 4294901760
      %v186 = vsub.f32 %v57, %v185
      %v187 = vand.u32 %v186, 4294901760
      %v188 = vsub.f32 %v186, %v187
      %v189 = vand.u32 %v188, 4294901760
      %190 = vmatpush1.msra.mxu0 %v189
      %191 = vmatprep.subr.mxu0 0.0
      %v192 = vand.u32 %v58, 4294901760
      %v193 = vsub.f32 %v58, %v192
      %v194 = vand.u32 %v193, 4294901760
      %v195 = vsub.f32 %v193, %v194
      %v196 = vand.u32 %v195, 4294901760
      %197 = vmatpush1.msra.mxu0 %v196
      %198 = vmatprep.subr.mxu0 0.0
      %v199 = vand.u32 %v59, 4294901760
      %v200 = vsub.f32 %v59, %v199
      %v201 = vand.u32 %v200, 4294901760
      %v202 = vsub.f32 %v200, %v201
      %v203 = vand.u32 %v202, 4294901760
      %204 = vmatpush1.msra.mxu0 %v203
      %205 = vmatprep.subr.mxu0 0.0
      %206 = vmatpush1.msra.mxu0 0.0
      %207 = vmatprep.subr.mxu0 0.0
      %208 = vmatpush1.msra.mxu0 0.0
      %209 = vmatprep.subr.mxu0 0.0
      %210 = vmatpush1.msra.mxu0 0.0
      %211 = vmatprep.subr.mxu0 0.0
      %212 = vmatpush1.msra.mxu0 0.0
      %213 = vmatprep.subr.mxu0 0.0
      %214 = vmatpush1.msra.mxu0 0.0
      %215 = vmatprep.subr.mxu0 0.0
      %216 = vmatpush1.msra.mxu0 0.0
      %217 = vmatprep.subr.mxu0 0.0
      %218 = vmatpush1.msra.mxu0 0.0
      %219 = vmatprep.subr.mxu0 0.0
      %220 = vmatpush1.msra.mxu0 0.0
      %221 = vmatprep.subr.mxu0 0.0
      %222 = vmatpush1.msra.mxu0 0.0
      %223 = vmatprep.subr.mxu0 0.0
      %224 = vmatpush1.msra.mxu0 0.0
      %225 = vmatprep.subr.mxu0 0.0
      %226 = vmatpush1.msra.mxu0 0.0
      %227 = vmatprep.subr.mxu0 0.0
      %228 = vmatpush1.msra.mxu0 0.0
      %229 = vmatprep.subr.mxu0 0.0
      %230 = vmatpush1.msra.mxu0 0.0
      %231 = vmatprep.subr.mxu0 0.0
      %232 = vmatpush1.msra.mxu0 0.0
      %233 = vmatprep.subr.mxu0 0.0
      %234 = vmatpush1.msra.mxu0 0.0
      %235 = vmatprep.subr.mxu0 0.0
      %236 = vmatpush1.msra.mxu0 0.0
      %237 = vmatprep.subr.mxu0 0.0
      %238 = vmatpush1.msra.mxu0 0.0
      %239 = vmatprep.subr.mxu0 0.0
      %240 = vmatpush1.msra.mxu0 0.0
      %241 = vmatprep.subr.mxu0 0.0
      %242 = vmatpush1.msra.mxu0 0.0
      %243 = vmatprep.subr.mxu0 0.0
      %244 = vmatpush1.msra.mxu0 0.0
      %245 = vmatprep.subr.mxu0 0.0
      %246 = vmatpush1.msra.mxu0 0.0
      %247 = vmatprep.subr.mxu0 0.0
      %248 = vmatpush1.msra.mxu0 0.0
      %249 = vmatprep.subr.mxu0 0.0
      %250 = vmatpush1.msra.mxu0 0.0
      %251 = vmatprep.subr.mxu0 0.0
      %252 = vmatpush1.msra.mxu0 0.0
      %253 = vmatprep.subr.mxu0 0.0
      %254 = vmatpush1.msra.mxu0 0.0
      %255 = vmatprep.subr.mxu0 0.0
      %256 = vmatpush1.msra.mxu0 0.0
      %257 = vmatprep.subr.mxu0 0.0
      %258 = vmatpush1.msra.mxu0 0.0
      %259 = vmatprep.subr.mxu0 0.0
      %260 = vmatpush1.msra.mxu0 0.0
      %261 = vmatprep.mubr.f32.mxu0 0.0
      %v262 = vand.u32 %v96, 4294901760
      %263 = vmatmul.mubr.f32.gmra.mrb[0].mxu0 %v262
      %v264 = vpop.f32.mrb[0].mxu0
      %v265 = vadd.f32 %v174, %v264
      %v266 = vpop.f32.mrb[0].mxu0
      %267 = vdwg.mxu0
      %268 = vmatprep.subr.mxu0 0.0
      %v269 = vand.u32 %v56, 4294901760
      %v270 = vsub.f32 %v56, %v269
      %271 = vmatpush1.msra.mxu0 %v270
      %272 = vmatprep.subr.mxu0 0.0
      %v273 = vand.u32 %v57, 4294901760
      %v274 = vsub.f32 %v57, %v273
      %275 = vmatpush1.msra.mxu0 %v274
      %276 = vmatprep.subr.mxu0 0.0
      %v277 = vand.u32 %v58, 4294901760
      %v278 = vsub.f32 %v58, %v277
      %279 = vmatpush1.msra.mxu0 %v278
      %280 = vmatprep.subr.mxu0 0.0
      %v281 = vand.u32 %v59, 4294901760
      %v282 = vsub.f32 %v59, %v281
      %283 = vmatpush1.msra.mxu0 %v282
      %284 = vmatprep.subr.mxu0 0.0
      %285 = vmatpush1.msra.mxu0 0.0
      %286 = vmatprep.subr.mxu0 0.0
      %287 = vmatpush1.msra.mxu0 0.0
      %288 = vmatprep.subr.mxu0 0.0
      %289 = vmatpush1.msra.mxu0 0.0
      %290 = vmatprep.subr.mxu0 0.0
      %291 = vmatpush1.msra.mxu0 0.0
      %292 = vmatprep.subr.mxu0 0.0
      %293 = vmatpush1.msra.mxu0 0.0
      %294 = vmatprep.subr.mxu0 0.0
      %295 = vmatpush1.msra.mxu0 0.0
      %296 = vmatprep.subr.mxu0 0.0
      %297 = vmatpush1.msra.mxu0 0.0
      %298 = vmatprep.subr.mxu0 0.0
      %299 = vmatpush1.msra.mxu0 0.0
      %300 = vmatprep.subr.mxu0 0.0
      %301 = vmatpush1.msra.mxu0 0.0
      %302 = vmatprep.subr.mxu0 0.0
      %303 = vmatpush1.msra.mxu0 0.0
      %304 = vmatprep.subr.mxu0 0.0
      %305 = vmatpush1.msra.mxu0 0.0
      %306 = vmatprep.subr.mxu0 0.0
      %307 = vmatpush1.msra.mxu0 0.0
      %308 = vmatprep.subr.mxu0 0.0
      %309 = vmatpush1.msra.mxu0 0.0
      %310 = vmatprep.subr.mxu0 0.0
      %311 = vmatpush1.msra.mxu0 0.0
      %312 = vmatprep.subr.mxu0 0.0
      %313 = vmatpush1.msra.mxu0 0.0
      %314 = vmatprep.subr.mxu0 0.0
      %315 = vmatpush1.msra.mxu0 0.0
      %316 = vmatprep.subr.mxu0 0.0
      %317 = vmatpush1.msra.mxu0 0.0
      %318 = vmatprep.subr.mxu0 0.0
      %319 = vmatpush1.msra.mxu0 0.0
      %320 = vmatprep.subr.mxu0 0.0
      %321 = vmatpush1.msra.mxu0 0.0
      %322 = vmatprep.subr.mxu0 0.0
      %323 = vmatpush1.msra.mxu0 0.0
      %324 = vmatprep.subr.mxu0 0.0
      %325 = vmatpush1.msra.mxu0 0.0
      %326 = vmatprep.subr.mxu0 0.0
      %327 = vmatpush1.msra.mxu0 0.0
      %328 = vmatprep.subr.mxu0 0.0
      %329 = vmatpush1.msra.mxu0 0.0
      %330 = vmatprep.subr.mxu0 0.0
      %331 = vmatpush1.msra.mxu0 0.0
      %332 = vmatprep.subr.mxu0 0.0
      %333 = vmatpush1.msra.mxu0 0.0
      %334 = vmatprep.subr.mxu0 0.0
      %335 = vmatpush1.msra.mxu0 0.0
      %336 = vmatprep.subr.mxu0 0.0
      %337 = vmatpush1.msra.mxu0 0.0
      %338 = vmatprep.subr.mxu0 0.0
      %339 = vmatpush1.msra.mxu0 0.0
      %340 = vmatprep.mubr.f32.mxu0 0.0
      %v341 = vand.u32 %v96, 4294901760
      %v342 = vsub.f32 %v96, %v341
      %343 = vmatmul.mubr.f32.gmra.mrb[0].mxu0 %v342
      %v344 = vpop.f32.mrb[0].mxu0
      %v345 = vadd.f32 %v265, %v344
      %v346 = vpop.f32.mrb[0].mxu0
      %347 = vdwg.mxu0
      %348 = vmatprep.subr.mxu0 0.0
      %v349 = vand.u32 %v56, 4294901760
      %350 = vmatpush1.msra.mxu0 %v349
      %351 = vmatprep.subr.mxu0 0.0
      %v352 = vand.u32 %v57, 4294901760
      %353 = vmatpush1.msra.mxu0 %v352
      %354 = vmatprep.subr.mxu0 0.0
      %v355 = vand.u32 %v58, 4294901760
      %356 = vmatpush1.msra.mxu0 %v355
      %357 = vmatprep.subr.mxu0 0.0
      %v358 = vand.u32 %v59, 4294901760
      %359 = vmatpush1.msra.mxu0 %v358
      %360 = vmatprep.subr.mxu0 0.0
      %361 = vmatpush1.msra.mxu0 0.0
      %362 = vmatprep.subr.mxu0 0.0
      %363 = vmatpush1.msra.mxu0 0.0
      %364 = vmatprep.subr.mxu0 0.0
      %365 = vmatpush1.msra.mxu0 0.0
      %366 = vmatprep.subr.mxu0 0.0
      %367 = vmatpush1.msra.mxu0 0.0
      %368 = vmatprep.subr.mxu0 0.0
      %369 = vmatpush1.msra.mxu0 0.0
      %370 = vmatprep.subr.mxu0 0.0
      %371 = vmatpush1.msra.mxu0 0.0
      %372 = vmatprep.subr.mxu0 0.0
      %373 = vmatpush1.msra.mxu0 0.0
      %374 = vmatprep.subr.mxu0 0.0
      %375 = vmatpush1.msra.mxu0 0.0
      %376 = vmatprep.subr.mxu0 0.0
      %377 = vmatpush1.msra.mxu0 0.0
      %378 = vmatprep.subr.mxu0 0.0
      %379 = vmatpush1.msra.mxu0 0.0
      %380 = vmatprep.subr.mxu0 0.0
      %381 = vmatpush1.msra.mxu0 0.0
      %382 = vmatprep.subr.mxu0 0.0
      %383 = vmatpush1.msra.mxu0 0.0
      %384 = vmatprep.subr.mxu0 0.0
      %385 = vmatpush1.msra.mxu0 0.0
      %386 = vmatprep.subr.mxu0 0.0
      %387 = vmatpush1.msra.mxu0 0.0
      %388 = vmatprep.subr.mxu0 0.0
      %389 = vmatpush1.msra.mxu0 0.0
      %390 = vmatprep.subr.mxu0 0.0
      %391 = vmatpush1.msra.mxu0 0.0
      %392 = vmatprep.subr.mxu0 0.0
      %393 = vmatpush1.msra.mxu0 0.0
      %394 = vmatprep.subr.mxu0 0.0
      %395 = vmatpush1.msra.mxu0 0.0
      %396 = vmatprep.subr.mxu0 0.0
      %397 = vmatpush1.msra.mxu0 0.0
      %398 = vmatprep.subr.mxu0 0.0
      %399 = vmatpush1.msra.mxu0 0.0
      %400 = vmatprep.subr.mxu0 0.0
      %401 = vmatpush1.msra.mxu0 0.0
      %402 = vmatprep.subr.mxu0 0.0
      %403 = vmatpush1.msra.mxu0 0.0
      %404 = vmatprep.subr.mxu0 0.0
      %405 = vmatpush1.msra.mxu0 0.0
      %406 = vmatprep.subr.mxu0 0.0
      %407 = vmatpush1.msra.mxu0 0.0
      %408 = vmatprep.subr.mxu0 0.0
      %409 = vmatpush1.msra.mxu0 0.0
      %410 = vmatprep.subr.mxu0 0.0
      %411 = vmatpush1.msra.mxu0 0.0
      %412 = vmatprep.subr.mxu0 0.0
      %413 = vmatpush1.msra.mxu0 0.0
      %414 = vmatprep.subr.mxu0 0.0
      %415 = vmatpush1.msra.mxu0 0.0
      %416 = vmatprep.mubr.f32.mxu0 0.0
      %v417 = vand.u32 %v96, 4294901760
      %v418 = vsub.f32 %v96, %v417
      %v419 = vand.u32 %v418, 4294901760
      %420 = vmatmul.mubr.f32.gmra.mrb[0].mxu0 %v419
      %v421 = vpop.f32.mrb[0].mxu0
      %v422 = vadd.f32 %v345, %v421
      %v423 = vpop.f32.mrb[0].mxu0
      %424 = vdwg.mxu0
      %425 = vmatprep.subr.mxu0 0.0
      %v426 = vand.u32 %v56, 4294901760
      %v427 = vsub.f32 %v56, %v426
      %v428 = vand.u32 %v427, 4294901760
      %429 = vmatpush1.msra.mxu0 %v428
      %430 = vmatprep.subr.mxu0 0.0
      %v431 = vand.u32 %v57, 4294901760
      %v432 = vsub.f32 %v57, %v431
      %v433 = vand.u32 %v432, 4294901760
      %434 = vmatpush1.msra.mxu0 %v433
      %435 = vmatprep.subr.mxu0 0.0
      %v436 = vand.u32 %v58, 4294901760
      %v437 = vsub.f32 %v58, %v436
      %v438 = vand.u32 %v437, 4294901760
      %439 = vmatpush1.msra.mxu0 %v438
      %440 = vmatprep.subr.mxu0 0.0
      %v441 = vand.u32 %v59, 4294901760
      %v442 = vsub.f32 %v59, %v441
      %v443 = vand.u32 %v442, 4294901760
      %444 = vmatpush1.msra.mxu0 %v443
      %445 = vmatprep.subr.mxu0 0.0
      %446 = vmatpush1.msra.mxu0 0.0
      %447 = vmatprep.subr.mxu0 0.0
      %448 = vmatpush1.msra.mxu0 0.0
      %449 = vmatprep.subr.mxu0 0.0
      %450 = vmatpush1.msra.mxu0 0.0
      %451 = vmatprep.subr.mxu0 0.0
      %452 = vmatpush1.msra.mxu0 0.0
      %453 = vmatprep.subr.mxu0 0.0
      %454 = vmatpush1.msra.mxu0 0.0
      %455 = vmatprep.subr.mxu0 0.0
      %456 = vmatpush1.msra.mxu0 0.0
      %457 = vmatprep.subr.mxu0 0.0
      %458 = vmatpush1.msra.mxu0 0.0
      %459 = vmatprep.subr.mxu0 0.0
      %460 = vmatpush1.msra.mxu0 0.0
      %461 = vmatprep.subr.mxu0 0.0
      %462 = vmatpush1.msra.mxu0 0.0
      %463 = vmatprep.subr.mxu0 0.0
      %464 = vmatpush1.msra.mxu0 0.0
      %465 = vmatprep.subr.mxu0 0.0
      %466 = vmatpush1.msra.mxu0 0.0
      %467 = vmatprep.subr.mxu0 0.0
      %468 = vmatpush1.msra.mxu0 0.0
      %469 = vmatprep.subr.mxu0 0.0
      %470 = vmatpush1.msra.mxu0 0.0
      %471 = vmatprep.subr.mxu0 0.0
      %472 = vmatpush1.msra.mxu0 0.0
      %473 = vmatprep.subr.mxu0 0.0
      %474 = vmatpush1.msra.mxu0 0.0
      %475 = vmatprep.subr.mxu0 0.0
      %476 = vmatpush1.msra.mxu0 0.0
      %477 = vmatprep.subr.mxu0 0.0
      %478 = vmatpush1.msra.mxu0 0.0
      %479 = vmatprep.subr.mxu0 0.0
      %480 = vmatpush1.msra.mxu0 0.0
      %481 = vmatprep.subr.mxu0 0.0
      %482 = vmatpush1.msra.mxu0 0.0
      %483 = vmatprep.subr.mxu0 0.0
      %484 = vmatpush1.msra.mxu0 0.0
      %485 = vmatprep.subr.mxu0 0.0
      %486 = vmatpush1.msra.mxu0 0.0
      %487 = vmatprep.subr.mxu0 0.0
      %488 = vmatpush1.msra.mxu0 0.0
      %489 = vmatprep.subr.mxu0 0.0
      %490 = vmatpush1.msra.mxu0 0.0
      %491 = vmatprep.subr.mxu0 0.0
      %492 = vmatpush1.msra.mxu0 0.0
      %493 = vmatprep.subr.mxu0 0.0
      %494 = vmatpush1.msra.mxu0 0.0
      %495 = vmatprep.subr.mxu0 0.0
      %496 = vmatpush1.msra.mxu0 0.0
      %497 = vmatprep.subr.mxu0 0.0
      %498 = vmatpush1.msra.mxu0 0.0
      %499 = vmatprep.subr.mxu0 0.0
      %500 = vmatpush1.msra.mxu0 0.0
      %501 = vmatprep.mubr.f32.mxu0 0.0
      %v502 = vand.u32 %v96, 4294901760
      %503 = vmatmul.mubr.f32.gmra.mrb[0].mxu0 %v502
      %v504 = vpop.f32.mrb[0].mxu0
      %v505 = vadd.f32 %v422, %v504
      %v506 = vpop.f32.mrb[0].mxu0
      %507 = vdwg.mxu0
      %508 = vmatprep.subr.mxu0 0.0
      %v509 = vand.u32 %v56, 4294901760
      %510 = vmatpush1.msra.mxu0 %v509
      %511 = vmatprep.subr.mxu0 0.0
      %v512 = vand.u32 %v57, 4294901760
      %513 = vmatpush1.msra.mxu0 %v512
      %514 = vmatprep.subr.mxu0 0.0
      %v515 = vand.u32 %v58, 4294901760
      %516 = vmatpush1.msra.mxu0 %v515
      %517 = vmatprep.subr.mxu0 0.0
      %v518 = vand.u32 %v59, 4294901760
      %519 = vmatpush1.msra.mxu0 %v518
      %520 = vmatprep.subr.mxu0 0.0
      %521 = vmatpush1.msra.mxu0 0.0
      %522 = vmatprep.subr.mxu0 0.0
      %523 = vmatpush1.msra.mxu0 0.0
      %524 = vmatprep.subr.mxu0 0.0
      %525 = vmatpush1.msra.mxu0 0.0
      %526 = vmatprep.subr.mxu0 0.0
      %527 = vmatpush1.msra.mxu0 0.0
      %528 = vmatprep.subr.mxu0 0.0
      %529 = vmatpush1.msra.mxu0 0.0
      %530 = vmatprep.subr.mxu0 0.0
      %531 = vmatpush1.msra.mxu0 0.0
      %532 = vmatprep.subr.mxu0 0.0
      %533 = vmatpush1.msra.mxu0 0.0
      %534 = vmatprep.subr.mxu0 0.0
      %535 = vmatpush1.msra.mxu0 0.0
      %536 = vmatprep.subr.mxu0 0.0
      %537 = vmatpush1.msra.mxu0 0.0
      %538 = vmatprep.subr.mxu0 0.0
      %539 = vmatpush1.msra.mxu0 0.0
      %540 = vmatprep.subr.mxu0 0.0
      %541 = vmatpush1.msra.mxu0 0.0
      %542 = vmatprep.subr.mxu0 0.0
      %543 = vmatpush1.msra.mxu0 0.0
      %544 = vmatprep.subr.mxu0 0.0
      %545 = vmatpush1.msra.mxu0 0.0
      %546 = vmatprep.subr.mxu0 0.0
      %547 = vmatpush1.msra.mxu0 0.0
      %548 = vmatprep.subr.mxu0 0.0
      %549 = vmatpush1.msra.mxu0 0.0
      %550 = vmatprep.subr.mxu0 0.0
      %551 = vmatpush1.msra.mxu0 0.0
      %552 = vmatprep.subr.mxu0 0.0
      %553 = vmatpush1.msra.mxu0 0.0
      %554 = vmatprep.subr.mxu0 0.0
      %555 = vmatpush1.msra.mxu0 0.0
      %556 = vmatprep.subr.mxu0 0.0
      %557 = vmatpush1.msra.mxu0 0.0
      %558 = vmatprep.subr.mxu0 0.0
      %559 = vmatpush1.msra.mxu0 0.0
      %560 = vmatprep.subr.mxu0 0.0
      %561 = vmatpush1.msra.mxu0 0.0
      %562 = vmatprep.subr.mxu0 0.0
      %563 = vmatpush1.msra.mxu0 0.0
      %564 = vmatprep.subr.mxu0 0.0
      %565 = vmatpush1.msra.mxu0 0.0
      %566 = vmatprep.subr.mxu0 0.0
      %567 = vmatpush1.msra.mxu0 0.0
      %568 = vmatprep.subr.mxu0 0.0
      %569 = vmatpush1.msra.mxu0 0.0
      %570 = vmatprep.subr.mxu0 0.0
      %571 = vmatpush1.msra.mxu0 0.0
      %572 = vmatprep.subr.mxu0 0.0
      %573 = vmatpush1.msra.mxu0 0.0
      %574 = vmatprep.subr.mxu0 0.0
      %575 = vmatpush1.msra.mxu0 0.0
      %576 = vmatprep.mubr.f32.mxu0 0.0
      %v577 = vand.u32 %v96, 4294901760
      %578 = vmatmul.mubr.f32.gmra.mrb[0].mxu0 %v577
      %v579 = vpop.f32.mrb[0].mxu0
      %v580 = vadd.f32 %v505, %v579
      %v581 = vpop.f32.mrb[0].mxu0
      %582 = vdwg.mxu0
      %v583 = vadd.f32 %v91, %v580
      %v584 = vxor.u32 %v583, 2147483648
      %v585 = vmul.f32 %v584, 1.442695
      %v586 = vpow.pop %v585
      %v587 = vadd.f32 %v586, 1.0
      %v588 = vrcp.pop %v587
      %v589 = vmul.f32 1.0, %v588
      %v590 = vtanh.pop %v583
      %v591 = vmul.f32 %v589, %v84
      %593 = vrot.lane.b32.xlu0 %v590, 64
      %v594 = vpop.permute.xlu0 %593
      %v596 = vmul.f32 %v589, %v594
      %598 = vrot.lane.b32.xlu0 %v596, 32
      %v599 = vpop.permute.xlu0 %598
      %v601 = vadd.f32 %v591, %v599
      %v602 = vtanh.pop %v601
      %604 = vrot.lane.b32.xlu0 %v602, 64
      %v605 = vpop.permute.xlu0 %604
      %v607 = vmul.f32 %v589, %v605
      %s608 = scalar_lea.vmem %s1, %s89
      %v609 = vld [vmem:[%s608] sm:$0x3]
      %611 = vrot.lane.b32.xlu0 %v607, 32
      %v612 = vpop.permute.xlu0 %611
      %v613 = vsel %vm95, %v612, 0
      %615 = vmatprep.subr.mxu0 0.0
      %v616 = vand.u32 %v60, 4294901760
      %617 = vmatpush1.msra.mxu0 %v616
      %618 = vmatprep.subr.mxu0 0.0
      %v619 = vand.u32 %v61, 4294901760
      %620 = vmatpush1.msra.mxu0 %v619
      %621 = vmatprep.subr.mxu0 0.0
      %v622 = vand.u32 %v62, 4294901760
      %623 = vmatpush1.msra.mxu0 %v622
      %624 = vmatprep.subr.mxu0 0.0
      %v625 = vand.u32 %v63, 4294901760
      %626 = vmatpush1.msra.mxu0 %v625
      %627 = vmatprep.subr.mxu0 0.0
      %628 = vmatpush1.msra.mxu0 0.0
      %629 = vmatprep.subr.mxu0 0.0
      %630 = vmatpush1.msra.mxu0 0.0
      %631 = vmatprep.subr.mxu0 0.0
      %632 = vmatpush1.msra.mxu0 0.0
      %633 = vmatprep.subr.mxu0 0.0
      %634 = vmatpush1.msra.mxu0 0.0
      %635 = vmatprep.subr.mxu0 0.0
      %636 = vmatpush1.msra.mxu0 0.0
      %637 = vmatprep.subr.mxu0 0.0
      %638 = vmatpush1.msra.mxu0 0.0
      %639 = vmatprep.subr.mxu0 0.0
      %640 = vmatpush1.msra.mxu0 0.0
      %641 = vmatprep.subr.mxu0 0.0
      %642 = vmatpush1.msra.mxu0 0.0
      %643 = vmatprep.subr.mxu0 0.0
      %644 = vmatpush1.msra.mxu0 0.0
      %645 = vmatprep.subr.mxu0 0.0
      %646 = vmatpush1.msra.mxu0 0.0
      %647 = vmatprep.subr.mxu0 0.0
      %648 = vmatpush1.msra.mxu0 0.0
      %649 = vmatprep.subr.mxu0 0.0
      %650 = vmatpush1.msra.mxu0 0.0
      %651 = vmatprep.subr.mxu0 0.0
      %652 = vmatpush1.msra.mxu0 0.0
      %653 = vmatprep.subr.mxu0 0.0
      %654 = vmatpush1.msra.mxu0 0.0
      %655 = vmatprep.subr.mxu0 0.0
      %656 = vmatpush1.msra.mxu0 0.0
      %657 = vmatprep.subr.mxu0 0.0
      %658 = vmatpush1.msra.mxu0 0.0
      %659 = vmatprep.subr.mxu0 0.0
      %660 = vmatpush1.msra.mxu0 0.0
      %661 = vmatprep.subr.mxu0 0.0
      %662 = vmatpush1.msra.mxu0 0.0
      %663 = vmatprep.subr.mxu0 0.0
      %664 = vmatpush1.msra.mxu0 0.0
      %665 = vmatprep.subr.mxu0 0.0
      %666 = vmatpush1.msra.mxu0 0.0
      %667 = vmatprep.subr.mxu0 0.0
      %668 = vmatpush1.msra.mxu0 0.0
      %669 = vmatprep.subr.mxu0 0.0
      %670 = vmatpush1.msra.mxu0 0.0
      %671 = vmatprep.subr.mxu0 0.0
      %672 = vmatpush1.msra.mxu0 0.0
      %673 = vmatprep.subr.mxu0 0.0
      %674 = vmatpush1.msra.mxu0 0.0
      %675 = vmatprep.subr.mxu0 0.0
      %676 = vmatpush1.msra.mxu0 0.0
      %677 = vmatprep.subr.mxu0 0.0
      %678 = vmatpush1.msra.mxu0 0.0
      %679 = vmatprep.subr.mxu0 0.0
      %680 = vmatpush1.msra.mxu0 0.0
      %681 = vmatprep.subr.mxu0 0.0
      %682 = vmatpush1.msra.mxu0 0.0
      %683 = vmatprep.mubr.f32.mxu0 0.0
      %v684 = vand.u32 %v613, 4294901760
      %v685 = vsub.f32 %v613, %v684
      %v686 = vand.u32 %v685, 4294901760
      %v687 = vsub.f32 %v685, %v686
      %v688 = vand.u32 %v687, 4294901760
      %689 = vmatmul.mubr.f32.gmra.mrb[0].mxu0 %v688
      %v690 = vpop.f32.mrb[0].mxu0
      %v691 = vadd.f32 0.0, %v690
      %v692 = vpop.f32.mrb[0].mxu0
      %693 = vdwg.mxu0
      %694 = vmatprep.subr.mxu0 0.0
      %v695 = vand.u32 %v60, 4294901760
      %v696 = vsub.f32 %v60, %v695
      %v697 = vand.u32 %v696, 4294901760
      %v698 = vsub.f32 %v696, %v697
      %v699 = vand.u32 %v698, 4294901760
      %700 = vmatpush1.msra.mxu0 %v699
      %701 = vmatprep.subr.mxu0 0.0
      %v702 = vand.u32 %v61, 4294901760
      %v703 = vsub.f32 %v61, %v702
      %v704 = vand.u32 %v703, 4294901760
      %v705 = vsub.f32 %v703, %v704
      %v706 = vand.u32 %v705, 4294901760
      %707 = vmatpush1.msra.mxu0 %v706
      %708 = vmatprep.subr.mxu0 0.0
      %v709 = vand.u32 %v62, 4294901760
      %v710 = vsub.f32 %v62, %v709
      %v711 = vand.u32 %v710, 4294901760
      %v712 = vsub.f32 %v710, %v711
      %v713 = vand.u32 %v712, 4294901760
      %714 = vmatpush1.msra.mxu0 %v713
      %715 = vmatprep.subr.mxu0 0.0
      %v716 = vand.u32 %v63, 4294901760
      %v717 = vsub.f32 %v63, %v716
      %v718 = vand.u32 %v717, 4294901760
      %v719 = vsub.f32 %v717, %v718
      %v720 = vand.u32 %v719, 4294901760
      %721 = vmatpush1.msra.mxu0 %v720
      %722 = vmatprep.subr.mxu0 0.0
      %723 = vmatpush1.msra.mxu0 0.0
      %724 = vmatprep.subr.mxu0 0.0
      %725 = vmatpush1.msra.mxu0 0.0
      %726 = vmatprep.subr.mxu0 0.0
      %727 = vmatpush1.msra.mxu0 0.0
      %728 = vmatprep.subr.mxu0 0.0
      %729 = vmatpush1.msra.mxu0 0.0
      %730 = vmatprep.subr.mxu0 0.0
      %731 = vmatpush1.msra.mxu0 0.0
      %732 = vmatprep.subr.mxu0 0.0
      %733 = vmatpush1.msra.mxu0 0.0
      %734 = vmatprep.subr.mxu0 0.0
      %735 = vmatpush1.msra.mxu0 0.0
      %736 = vmatprep.subr.mxu0 0.0
      %737 = vmatpush1.msra.mxu0 0.0
      %738 = vmatprep.subr.mxu0 0.0
      %739 = vmatpush1.msra.mxu0 0.0
      %740 = vmatprep.subr.mxu0 0.0
      %741 = vmatpush1.msra.mxu0 0.0
      %742 = vmatprep.subr.mxu0 0.0
      %743 = vmatpush1.msra.mxu0 0.0
      %744 = vmatprep.subr.mxu0 0.0
      %745 = vmatpush1.msra.mxu0 0.0
      %746 = vmatprep.subr.mxu0 0.0
      %747 = vmatpush1.msra.mxu0 0.0
      %748 = vmatprep.subr.mxu0 0.0
      %749 = vmatpush1.msra.mxu0 0.0
      %750 = vmatprep.subr.mxu0 0.0
      %751 = vmatpush1.msra.mxu0 0.0
      %752 = vmatprep.subr.mxu0 0.0
      %753 = vmatpush1.msra.mxu0 0.0
      %754 = vmatprep.subr.mxu0 0.0
      %755 = vmatpush1.msra.mxu0 0.0
      %756 = vmatprep.subr.mxu0 0.0
      %757 = vmatpush1.msra.mxu0 0.0
      %758 = vmatprep.subr.mxu0 0.0
      %759 = vmatpush1.msra.mxu0 0.0
      %760 = vmatprep.subr.mxu0 0.0
      %761 = vmatpush1.msra.mxu0 0.0
      %762 = vmatprep.subr.mxu0 0.0
      %763 = vmatpush1.msra.mxu0 0.0
      %764 = vmatprep.subr.mxu0 0.0
      %765 = vmatpush1.msra.mxu0 0.0
      %766 = vmatprep.subr.mxu0 0.0
      %767 = vmatpush1.msra.mxu0 0.0
      %768 = vmatprep.subr.mxu0 0.0
      %769 = vmatpush1.msra.mxu0 0.0
      %770 = vmatprep.subr.mxu0 0.0
      %771 = vmatpush1.msra.mxu0 0.0
      %772 = vmatprep.subr.mxu0 0.0
      %773 = vmatpush1.msra.mxu0 0.0
      %774 = vmatprep.subr.mxu0 0.0
      %775 = vmatpush1.msra.mxu0 0.0
      %776 = vmatprep.subr.mxu0 0.0
      %777 = vmatpush1.msra.mxu0 0.0
      %778 = vmatprep.mubr.f32.mxu0 0.0
      %v779 = vand.u32 %v613, 4294901760
      %780 = vmatmul.mubr.f32.gmra.mrb[0].mxu0 %v779
      %v781 = vpop.f32.mrb[0].mxu0
      %v782 = vadd.f32 %v691, %v781
      %v783 = vpop.f32.mrb[0].mxu0
      %784 = vdwg.mxu0
      %785 = vmatprep.subr.mxu0 0.0
      %v786 = vand.u32 %v60, 4294901760
      %v787 = vsub.f32 %v60, %v786
      %788 = vmatpush1.msra.mxu0 %v787
      %789 = vmatprep.subr.mxu0 0.0
      %v790 = vand.u32 %v61, 4294901760
      %v791 = vsub.f32 %v61, %v790
      %792 = vmatpush1.msra.mxu0 %v791
      %793 = vmatprep.subr.mxu0 0.0
      %v794 = vand.u32 %v62, 4294901760
      %v795 = vsub.f32 %v62, %v794
      %796 = vmatpush1.msra.mxu0 %v795
      %797 = vmatprep.subr.mxu0 0.0
      %v798 = vand.u32 %v63, 4294901760
      %v799 = vsub.f32 %v63, %v798
      %800 = vmatpush1.msra.mxu0 %v799
      %801 = vmatprep.subr.mxu0 0.0
      %802 = vmatpush1.msra.mxu0 0.0
      %803 = vmatprep.subr.mxu0 0.0
      %804 = vmatpush1.msra.mxu0 0.0
      %805 = vmatprep.subr.mxu0 0.0
      %806 = vmatpush1.msra.mxu0 0.0
      %807 = vmatprep.subr.mxu0 0.0
      %808 = vmatpush1.msra.mxu0 0.0
      %809 = vmatprep.subr.mxu0 0.0
      %810 = vmatpush1.msra.mxu0 0.0
      %811 = vmatprep.subr.mxu0 0.0
      %812 = vmatpush1.msra.mxu0 0.0
      %813 = vmatprep.subr.mxu0 0.0
      %814 = vmatpush1.msra.mxu0 0.0
      %815 = vmatprep.subr.mxu0 0.0
      %816 = vmatpush1.msra.mxu0 0.0
      %817 = vmatprep.subr.mxu0 0.0
      %818 = vmatpush1.msra.mxu0 0.0
      %819 = vmatprep.subr.mxu0 0.0
      %820 = vmatpush1.msra.mxu0 0.0
      %821 = vmatprep.subr.mxu0 0.0
      %822 = vmatpush1.msra.mxu0 0.0
      %823 = vmatprep.subr.mxu0 0.0
      %824 = vmatpush1.msra.mxu0 0.0
      %825 = vmatprep.subr.mxu0 0.0
      %826 = vmatpush1.msra.mxu0 0.0
      %827 = vmatprep.subr.mxu0 0.0
      %828 = vmatpush1.msra.mxu0 0.0
      %829 = vmatprep.subr.mxu0 0.0
      %830 = vmatpush1.msra.mxu0 0.0
      %831 = vmatprep.subr.mxu0 0.0
      %832 = vmatpush1.msra.mxu0 0.0
      %833 = vmatprep.subr.mxu0 0.0
      %834 = vmatpush1.msra.mxu0 0.0
      %835 = vmatprep.subr.mxu0 0.0
      %836 = vmatpush1.msra.mxu0 0.0
      %837 = vmatprep.subr.mxu0 0.0
      %838 = vmatpush1.msra.mxu0 0.0
      %839 = vmatprep.subr.mxu0 0.0
      %840 = vmatpush1.msra.mxu0 0.0
      %841 = vmatprep.subr.mxu0 0.0
      %842 = vmatpush1.msra.mxu0 0.0
      %843 = vmatprep.subr.mxu0 0.0
      %844 = vmatpush1.msra.mxu0 0.0
      %845 = vmatprep.subr.mxu0 0.0
      %846 = vmatpush1.msra.mxu0 0.0
      %847 = vmatprep.subr.mxu0 0.0
      %848 = vmatpush1.msra.mxu0 0.0
      %849 = vmatprep.subr.mxu0 0.0
      %850 = vmatpush1.msra.mxu0 0.0
      %851 = vmatprep.subr.mxu0 0.0
      %852 = vmatpush1.msra.mxu0 0.0
      %853 = vmatprep.subr.mxu0 0.0
      %854 = vmatpush1.msra.mxu0 0.0
      %855 = vmatprep.subr.mxu0 0.0
      %856 = vmatpush1.msra.mxu0 0.0
      %857 = vmatprep.mubr.f32.mxu0 0.0
      %v858 = vand.u32 %v613, 4294901760
      %v859 = vsub.f32 %v613, %v858
      %860 = vmatmul.mubr.f32.gmra.mrb[0].mxu0 %v859
      %v861 = vpop.f32.mrb[0].mxu0
      %v862 = vadd.f32 %v782, %v861
      %v863 = vpop.f32.mrb[0].mxu0
      %864 = vdwg.mxu0
      %865 = vmatprep.subr.mxu0 0.0
      %v866 = vand.u32 %v60, 4294901760
      %867 = vmatpush1.msra.mxu0 %v866
      %868 = vmatprep.subr.mxu0 0.0
      %v869 = vand.u32 %v61, 4294901760
      %870 = vmatpush1.msra.mxu0 %v869
      %871 = vmatprep.subr.mxu0 0.0
      %v872 = vand.u32 %v62, 4294901760
      %873 = vmatpush1.msra.mxu0 %v872
      %874 = vmatprep.subr.mxu0 0.0
      %v875 = vand.u32 %v63, 4294901760
      %876 = vmatpush1.msra.mxu0 %v875
      %877 = vmatprep.subr.mxu0 0.0
      %878 = vmatpush1.msra.mxu0 0.0
      %879 = vmatprep.subr.mxu0 0.0
      %880 = vmatpush1.msra.mxu0 0.0
      %881 = vmatprep.subr.mxu0 0.0
      %882 = vmatpush1.msra.mxu0 0.0
      %883 = vmatprep.subr.mxu0 0.0
      %884 = vmatpush1.msra.mxu0 0.0
      %885 = vmatprep.subr.mxu0 0.0
      %886 = vmatpush1.msra.mxu0 0.0
      %887 = vmatprep.subr.mxu0 0.0
      %888 = vmatpush1.msra.mxu0 0.0
      %889 = vmatprep.subr.mxu0 0.0
      %890 = vmatpush1.msra.mxu0 0.0
      %891 = vmatprep.subr.mxu0 0.0
      %892 = vmatpush1.msra.mxu0 0.0
      %893 = vmatprep.subr.mxu0 0.0
      %894 = vmatpush1.msra.mxu0 0.0
      %895 = vmatprep.subr.mxu0 0.0
      %896 = vmatpush1.msra.mxu0 0.0
      %897 = vmatprep.subr.mxu0 0.0
      %898 = vmatpush1.msra.mxu0 0.0
      %899 = vmatprep.subr.mxu0 0.0
      %900 = vmatpush1.msra.mxu0 0.0
      %901 = vmatprep.subr.mxu0 0.0
      %902 = vmatpush1.msra.mxu0 0.0
      %903 = vmatprep.subr.mxu0 0.0
      %904 = vmatpush1.msra.mxu0 0.0
      %905 = vmatprep.subr.mxu0 0.0
      %906 = vmatpush1.msra.mxu0 0.0
      %907 = vmatprep.subr.mxu0 0.0
      %908 = vmatpush1.msra.mxu0 0.0
      %909 = vmatprep.subr.mxu0 0.0
      %910 = vmatpush1.msra.mxu0 0.0
      %911 = vmatprep.subr.mxu0 0.0
      %912 = vmatpush1.msra.mxu0 0.0
      %913 = vmatprep.subr.mxu0 0.0
      %914 = vmatpush1.msra.mxu0 0.0
      %915 = vmatprep.subr.mxu0 0.0
      %916 = vmatpush1.msra.mxu0 0.0
      %917 = vmatprep.subr.mxu0 0.0
      %918 = vmatpush1.msra.mxu0 0.0
      %919 = vmatprep.subr.mxu0 0.0
      %920 = vmatpush1.msra.mxu0 0.0
      %921 = vmatprep.subr.mxu0 0.0
      %922 = vmatpush1.msra.mxu0 0.0
      %923 = vmatprep.subr.mxu0 0.0
      %924 = vmatpush1.msra.mxu0 0.0
      %925 = vmatprep.subr.mxu0 0.0
      %926 = vmatpush1.msra.mxu0 0.0
      %927 = vmatprep.subr.mxu0 0.0
      %928 = vmatpush1.msra.mxu0 0.0
      %929 = vmatprep.subr.mxu0 0.0
      %930 = vmatpush1.msra.mxu0 0.0
      %931 = vmatprep.subr.mxu0 0.0
      %932 = vmatpush1.msra.mxu0 0.0
      %933 = vmatprep.mubr.f32.mxu0 0.0
      %v934 = vand.u32 %v613, 4294901760
      %v935 = vsub.f32 %v613, %v934
      %v936 = vand.u32 %v935, 4294901760
      %937 = vmatmul.mubr.f32.gmra.mrb[0].mxu0 %v936
      %v938 = vpop.f32.mrb[0].mxu0
      %v939 = vadd.f32 %v862, %v938
      %v940 = vpop.f32.mrb[0].mxu0
      %941 = vdwg.mxu0
      %942 = vmatprep.subr.mxu0 0.0
      %v943 = vand.u32 %v60, 4294901760
      %v944 = vsub.f32 %v60, %v943
      %v945 = vand.u32 %v944, 4294901760
      %946 = vmatpush1.msra.mxu0 %v945
      %947 = vmatprep.subr.mxu0 0.0
      %v948 = vand.u32 %v61, 4294901760
      %v949 = vsub.f32 %v61, %v948
      %v950 = vand.u32 %v949, 4294901760
      %951 = vmatpush1.msra.mxu0 %v950
      %952 = vmatprep.subr.mxu0 0.0
      %v953 = vand.u32 %v62, 4294901760
      %v954 = vsub.f32 %v62, %v953
      %v955 = vand.u32 %v954, 4294901760
      %956 = vmatpush1.msra.mxu0 %v955
      %957 = vmatprep.subr.mxu0 0.0
      %v958 = vand.u32 %v63, 4294901760
      %v959 = vsub.f32 %v63, %v958
      %v960 = vand.u32 %v959, 4294901760
      %961 = vmatpush1.msra.mxu0 %v960
      %962 = vmatprep.subr.mxu0 0.0
      %963 = vmatpush1.msra.mxu0 0.0
      %964 = vmatprep.subr.mxu0 0.0
      %965 = vmatpush1.msra.mxu0 0.0
      %966 = vmatprep.subr.mxu0 0.0
      %967 = vmatpush1.msra.mxu0 0.0
      %968 = vmatprep.subr.mxu0 0.0
      %969 = vmatpush1.msra.mxu0 0.0
      %970 = vmatprep.subr.mxu0 0.0
      %971 = vmatpush1.msra.mxu0 0.0
      %972 = vmatprep.subr.mxu0 0.0
      %973 = vmatpush1.msra.mxu0 0.0
      %974 = vmatprep.subr.mxu0 0.0
      %975 = vmatpush1.msra.mxu0 0.0
      %976 = vmatprep.subr.mxu0 0.0
      %977 = vmatpush1.msra.mxu0 0.0
      %978 = vmatprep.subr.mxu0 0.0
      %979 = vmatpush1.msra.mxu0 0.0
      %980 = vmatprep.subr.mxu0 0.0
      %981 = vmatpush1.msra.mxu0 0.0
      %982 = vmatprep.subr.mxu0 0.0
      %983 = vmatpush1.msra.mxu0 0.0
      %984 = vmatprep.subr.mxu0 0.0
      %985 = vmatpush1.msra.mxu0 0.0
      %986 = vmatprep.subr.mxu0 0.0
      %987 = vmatpush1.msra.mxu0 0.0
      %988 = vmatprep.subr.mxu0 0.0
      %989 = vmatpush1.msra.mxu0 0.0
      %990 = vmatprep.subr.mxu0 0.0
      %991 = vmatpush1.msra.mxu0 0.0
      %992 = vmatprep.subr.mxu0 0.0
      %993 = vmatpush1.msra.mxu0 0.0
      %994 = vmatprep.subr.mxu0 0.0
      %995 = vmatpush1.msra.mxu0 0.0
      %996 = vmatprep.subr.mxu0 0.0
      %997 = vmatpush1.msra.mxu0 0.0
      %998 = vmatprep.subr.mxu0 0.0
      %999 = vmatpush1.msra.mxu0 0.0
      %1000 = vmatprep.subr.mxu0 0.0
      %1001 = vmatpush1.msra.mxu0 0.0
      %1002 = vmatprep.subr.mxu0 0.0
      %1003 = vmatpush1.msra.mxu0 0.0
      %1004 = vmatprep.subr.mxu0 0.0
      %1005 = vmatpush1.msra.mxu0 0.0
      %1006 = vmatprep.subr.mxu0 0.0
      %1007 = vmatpush1.msra.mxu0 0.0
      %1008 = vmatprep.subr.mxu0 0.0
      %1009 = vmatpush1.msra.mxu0 0.0
      %1010 = vmatprep.subr.mxu0 0.0
      %1011 = vmatpush1.msra.mxu0 0.0
      %1012 = vmatprep.subr.mxu0 0.0
      %1013 = vmatpush1.msra.mxu0 0.0
      %1014 = vmatprep.subr.mxu0 0.0
      %1015 = vmatpush1.msra.mxu0 0.0
      %1016 = vmatprep.subr.mxu0 0.0
      %1017 = vmatpush1.msra.mxu0 0.0
      %1018 = vmatprep.mubr.f32.mxu0 0.0
      %v1019 = vand.u32 %v613, 4294901760
      %1020 = vmatmul.mubr.f32.gmra.mrb[0].mxu0 %v1019
      %v1021 = vpop.f32.mrb[0].mxu0
      %v1022 = vadd.f32 %v939, %v1021
      %v1023 = vpop.f32.mrb[0].mxu0
      %1024 = vdwg.mxu0
      %1025 = vmatprep.subr.mxu0 0.0
      %v1026 = vand.u32 %v60, 4294901760
      %1027 = vmatpush1.msra.mxu0 %v1026
      %1028 = vmatprep.subr.mxu0 0.0
      %v1029 = vand.u32 %v61, 4294901760
      %1030 = vmatpush1.msra.mxu0 %v1029
      %1031 = vmatprep.subr.mxu0 0.0
      %v1032 = vand.u32 %v62, 4294901760
      %1033 = vmatpush1.msra.mxu0 %v1032
      %1034 = vmatprep.subr.mxu0 0.0
      %v1035 = vand.u32 %v63, 4294901760
      %1036 = vmatpush1.msra.mxu0 %v1035
      %1037 = vmatprep.subr.mxu0 0.0
      %1038 = vmatpush1.msra.mxu0 0.0
      %1039 = vmatprep.subr.mxu0 0.0
      %1040 = vmatpush1.msra.mxu0 0.0
      %1041 = vmatprep.subr.mxu0 0.0
      %1042 = vmatpush1.msra.mxu0 0.0
      %1043 = vmatprep.subr.mxu0 0.0
      %1044 = vmatpush1.msra.mxu0 0.0
      %1045 = vmatprep.subr.mxu0 0.0
      %1046 = vmatpush1.msra.mxu0 0.0
      %1047 = vmatprep.subr.mxu0 0.0
      %1048 = vmatpush1.msra.mxu0 0.0
      %1049 = vmatprep.subr.mxu0 0.0
      %1050 = vmatpush1.msra.mxu0 0.0
      %1051 = vmatprep.subr.mxu0 0.0
      %1052 = vmatpush1.msra.mxu0 0.0
      %1053 = vmatprep.subr.mxu0 0.0
      %1054 = vmatpush1.msra.mxu0 0.0
      %1055 = vmatprep.subr.mxu0 0.0
      %1056 = vmatpush1.msra.mxu0 0.0
      %1057 = vmatprep.subr.mxu0 0.0
      %1058 = vmatpush1.msra.mxu0 0.0
      %1059 = vmatprep.subr.mxu0 0.0
      %1060 = vmatpush1.msra.mxu0 0.0
      %1061 = vmatprep.subr.mxu0 0.0
      %1062 = vmatpush1.msra.mxu0 0.0
      %1063 = vmatprep.subr.mxu0 0.0
      %1064 = vmatpush1.msra.mxu0 0.0
      %1065 = vmatprep.subr.mxu0 0.0
      %1066 = vmatpush1.msra.mxu0 0.0
      %1067 = vmatprep.subr.mxu0 0.0
      %1068 = vmatpush1.msra.mxu0 0.0
      %1069 = vmatprep.subr.mxu0 0.0
      %1070 = vmatpush1.msra.mxu0 0.0
      %1071 = vmatprep.subr.mxu0 0.0
      %1072 = vmatpush1.msra.mxu0 0.0
      %1073 = vmatprep.subr.mxu0 0.0
      %1074 = vmatpush1.msra.mxu0 0.0
      %1075 = vmatprep.subr.mxu0 0.0
      %1076 = vmatpush1.msra.mxu0 0.0
      %1077 = vmatprep.subr.mxu0 0.0
      %1078 = vmatpush1.msra.mxu0 0.0
      %1079 = vmatprep.subr.mxu0 0.0
      %1080 = vmatpush1.msra.mxu0 0.0
      %1081 = vmatprep.subr.mxu0 0.0
      %1082 = vmatpush1.msra.mxu0 0.0
      %1083 = vmatprep.subr.mxu0 0.0
      %1084 = vmatpush1.msra.mxu0 0.0
      %1085 = vmatprep.subr.mxu0 0.0
      %1086 = vmatpush1.msra.mxu0 0.0
      %1087 = vmatprep.subr.mxu0 0.0
      %1088 = vmatpush1.msra.mxu0 0.0
      %1089 = vmatprep.subr.mxu0 0.0
      %1090 = vmatpush1.msra.mxu0 0.0
      %1091 = vmatprep.subr.mxu0 0.0
      %1092 = vmatpush1.msra.mxu0 0.0
      %1093 = vmatprep.mubr.f32.mxu0 0.0
      %v1094 = vand.u32 %v613, 4294901760
      %1095 = vmatmul.mubr.f32.gmra.mrb[0].mxu0 %v1094
      %v1096 = vpop.f32.mrb[0].mxu0
      %v1097 = vadd.f32 %v1022, %v1096
      %v1098 = vpop.f32.mrb[0].mxu0
      %1099 = vdwg.mxu0
      %v1100 = vadd.f32 %v609, %v1097
      %1102 = vrot.lane.b32.xlu0 %v85, 32
      %v1103 = vpop.permute.xlu0 %1102
      %v1104 = vsel %vm95, %v1103, 0
      %1106 = vmatprep.subr.mxu0 0.0
      %v1107 = vand.u32 %v64, 4294901760
      %1108 = vmatpush1.msra.mxu0 %v1107
      %1109 = vmatprep.subr.mxu0 0.0
      %v1110 = vand.u32 %v65, 4294901760
      %1111 = vmatpush1.msra.mxu0 %v1110
      %1112 = vmatprep.subr.mxu0 0.0
      %v1113 = vand.u32 %v66, 4294901760
      %1114 = vmatpush1.msra.mxu0 %v1113
      %1115 = vmatprep.subr.mxu0 0.0
      %v1116 = vand.u32 %v67, 4294901760
      %1117 = vmatpush1.msra.mxu0 %v1116
      %1118 = vmatprep.subr.mxu0 0.0
      %1119 = vmatpush1.msra.mxu0 0.0
      %1120 = vmatprep.subr.mxu0 0.0
      %1121 = vmatpush1.msra.mxu0 0.0
      %1122 = vmatprep.subr.mxu0 0.0
      %1123 = vmatpush1.msra.mxu0 0.0
      %1124 = vmatprep.subr.mxu0 0.0
      %1125 = vmatpush1.msra.mxu0 0.0
      %1126 = vmatprep.subr.mxu0 0.0
      %1127 = vmatpush1.msra.mxu0 0.0
      %1128 = vmatprep.subr.mxu0 0.0
      %1129 = vmatpush1.msra.mxu0 0.0
      %1130 = vmatprep.subr.mxu0 0.0
      %1131 = vmatpush1.msra.mxu0 0.0
      %1132 = vmatprep.subr.mxu0 0.0
      %1133 = vmatpush1.msra.mxu0 0.0
      %1134 = vmatprep.subr.mxu0 0.0
      %1135 = vmatpush1.msra.mxu0 0.0
      %1136 = vmatprep.subr.mxu0 0.0
      %1137 = vmatpush1.msra.mxu0 0.0
      %1138 = vmatprep.subr.mxu0 0.0
      %1139 = vmatpush1.msra.mxu0 0.0
      %1140 = vmatprep.subr.mxu0 0.0
      %1141 = vmatpush1.msra.mxu0 0.0
      %1142 = vmatprep.subr.mxu0 0.0
      %1143 = vmatpush1.msra.mxu0 0.0
      %1144 = vmatprep.subr.mxu0 0.0
      %1145 = vmatpush1.msra.mxu0 0.0
      %1146 = vmatprep.subr.mxu0 0.0
      %1147 = vmatpush1.msra.mxu0 0.0
      %1148 = vmatprep.subr.mxu0 0.0
      %1149 = vmatpush1.msra.mxu0 0.0
      %1150 = vmatprep.subr.mxu0 0.0
      %1151 = vmatpush1.msra.mxu0 0.0
      %1152 = vmatprep.subr.mxu0 0.0
      %1153 = vmatpush1.msra.mxu0 0.0
      %1154 = vmatprep.subr.mxu0 0.0
      %1155 = vmatpush1.msra.mxu0 0.0
      %1156 = vmatprep.subr.mxu0 0.0
      %1157 = vmatpush1.msra.mxu0 0.0
      %1158 = vmatprep.subr.mxu0 0.0
      %1159 = vmatpush1.msra.mxu0 0.0
      %1160 = vmatprep.subr.mxu0 0.0
      %1161 = vmatpush1.msra.mxu0 0.0
      %1162 = vmatprep.subr.mxu0 0.0
      %1163 = vmatpush1.msra.mxu0 0.0
      %1164 = vmatprep.subr.mxu0 0.0
      %1165 = vmatpush1.msra.mxu0 0.0
      %1166 = vmatprep.subr.mxu0 0.0
      %1167 = vmatpush1.msra.mxu0 0.0
      %1168 = vmatprep.subr.mxu0 0.0
      %1169 = vmatpush1.msra.mxu0 0.0
      %1170 = vmatprep.subr.mxu0 0.0
      %1171 = vmatpush1.msra.mxu0 0.0
      %1172 = vmatprep.subr.mxu0 0.0
      %1173 = vmatpush1.msra.mxu0 0.0
      %1174 = vmatprep.mubr.f32.mxu0 0.0
      %v1175 = vand.u32 %v1104, 4294901760
      %v1176 = vsub.f32 %v1104, %v1175
      %v1177 = vand.u32 %v1176, 4294901760
      %v1178 = vsub.f32 %v1176, %v1177
      %v1179 = vand.u32 %v1178, 4294901760
      %1180 = vmatmul.mubr.f32.gmra.mrb[0].mxu0 %v1179
      %v1181 = vpop.f32.mrb[0].mxu0
      %v1182 = vadd.f32 0.0, %v1181
      %v1183 = vpop.f32.mrb[0].mxu0
      %1184 = vdwg.mxu0
      %1185 = vmatprep.subr.mxu0 0.0
      %v1186 = vand.u32 %v64, 4294901760
      %v1187 = vsub.f32 %v64, %v1186
      %v1188 = vand.u32 %v1187, 4294901760
      %v1189 = vsub.f32 %v1187, %v1188
      %v1190 = vand.u32 %v1189, 4294901760
      %1191 = vmatpush1.msra.mxu0 %v1190
      %1192 = vmatprep.subr.mxu0 0.0
      %v1193 = vand.u32 %v65, 4294901760
      %v1194 = vsub.f32 %v65, %v1193
      %v1195 = vand.u32 %v1194, 4294901760
      %v1196 = vsub.f32 %v1194, %v1195
      %v1197 = vand.u32 %v1196, 4294901760
      %1198 = vmatpush1.msra.mxu0 %v1197
      %1199 = vmatprep.subr.mxu0 0.0
      %v1200 = vand.u32 %v66, 4294901760
      %v1201 = vsub.f32 %v66, %v1200
      %v1202 = vand.u32 %v1201, 4294901760
      %v1203 = vsub.f32 %v1201, %v1202
      %v1204 = vand.u32 %v1203, 4294901760
      %1205 = vmatpush1.msra.mxu0 %v1204
      %1206 = vmatprep.subr.mxu0 0.0
      %v1207 = vand.u32 %v67, 4294901760
      %v1208 = vsub.f32 %v67, %v1207
      %v1209 = vand.u32 %v1208, 4294901760
      %v1210 = vsub.f32 %v1208, %v1209
      %v1211 = vand.u32 %v1210, 4294901760
      %1212 = vmatpush1.msra.mxu0 %v1211
      %1213 = vmatprep.subr.mxu0 0.0
      %1214 = vmatpush1.msra.mxu0 0.0
      %1215 = vmatprep.subr.mxu0 0.0
      %1216 = vmatpush1.msra.mxu0 0.0
      %1217 = vmatprep.subr.mxu0 0.0
      %1218 = vmatpush1.msra.mxu0 0.0
      %1219 = vmatprep.subr.mxu0 0.0
      %1220 = vmatpush1.msra.mxu0 0.0
      %1221 = vmatprep.subr.mxu0 0.0
      %1222 = vmatpush1.msra.mxu0 0.0
      %1223 = vmatprep.subr.mxu0 0.0
      %1224 = vmatpush1.msra.mxu0 0.0
      %1225 = vmatprep.subr.mxu0 0.0
      %1226 = vmatpush1.msra.mxu0 0.0
      %1227 = vmatprep.subr.mxu0 0.0
      %1228 = vmatpush1.msra.mxu0 0.0
      %1229 = vmatprep.subr.mxu0 0.0
      %1230 = vmatpush1.msra.mxu0 0.0
      %1231 = vmatprep.subr.mxu0 0.0
      %1232 = vmatpush1.msra.mxu0 0.0
      %1233 = vmatprep.subr.mxu0 0.0
      %1234 = vmatpush1.msra.mxu0 0.0
      %1235 = vmatprep.subr.mxu0 0.0
      %1236 = vmatpush1.msra.mxu0 0.0
      %1237 = vmatprep.subr.mxu0 0.0
      %1238 = vmatpush1.msra.mxu0 0.0
      %1239 = vmatprep.subr.mxu0 0.0
      %1240 = vmatpush1.msra.mxu0 0.0
      %1241 = vmatprep.subr.mxu0 0.0
      %1242 = vmatpush1.msra.mxu0 0.0
      %1243 = vmatprep.subr.mxu0 0.0
      %1244 = vmatpush1.msra.mxu0 0.0
      %1245 = vmatprep.subr.mxu0 0.0
      %1246 = vmatpush1.msra.mxu0 0.0
      %1247 = vmatprep.subr.mxu0 0.0
      %1248 = vmatpush1.msra.mxu0 0.0
      %1249 = vmatprep.subr.mxu0 0.0
      %1250 = vmatpush1.msra.mxu0 0.0
      %1251 = vmatprep.subr.mxu0 0.0
      %1252 = vmatpush1.msra.mxu0 0.0
      %1253 = vmatprep.subr.mxu0 0.0
      %1254 = vmatpush1.msra.mxu0 0.0
      %1255 = vmatprep.subr.mxu0 0.0
      %1256 = vmatpush1.msra.mxu0 0.0
      %1257 = vmatprep.subr.mxu0 0.0
      %1258 = vmatpush1.msra.mxu0 0.0
      %1259 = vmatprep.subr.mxu0 0.0
      %1260 = vmatpush1.msra.mxu0 0.0
      %1261 = vmatprep.subr.mxu0 0.0
      %1262 = vmatpush1.msra.mxu0 0.0
      %1263 = vmatprep.subr.mxu0 0.0
      %1264 = vmatpush1.msra.mxu0 0.0
      %1265 = vmatprep.subr.mxu0 0.0
      %1266 = vmatpush1.msra.mxu0 0.0
      %1267 = vmatprep.subr.mxu0 0.0
      %1268 = vmatpush1.msra.mxu0 0.0
      %1269 = vmatprep.mubr.f32.mxu0 0.0
      %v1270 = vand.u32 %v1104, 4294901760
      %1271 = vmatmul.mubr.f32.gmra.mrb[0].mxu0 %v1270
      %v1272 = vpop.f32.mrb[0].mxu0
      %v1273 = vadd.f32 %v1182, %v1272
      %v1274 = vpop.f32.mrb[0].mxu0
      %1275 = vdwg.mxu0
      %1276 = vmatprep.subr.mxu0 0.0
      %v1277 = vand.u32 %v64, 4294901760
      %v1278 = vsub.f32 %v64, %v1277
      %1279 = vmatpush1.msra.mxu0 %v1278
      %1280 = vmatprep.subr.mxu0 0.0
      %v1281 = vand.u32 %v65, 4294901760
      %v1282 = vsub.f32 %v65, %v1281
      %1283 = vmatpush1.msra.mxu0 %v1282
      %1284 = vmatprep.subr.mxu0 0.0
      %v1285 = vand.u32 %v66, 4294901760
      %v1286 = vsub.f32 %v66, %v1285
      %1287 = vmatpush1.msra.mxu0 %v1286
      %1288 = vmatprep.subr.mxu0 0.0
      %v1289 = vand.u32 %v67, 4294901760
      %v1290 = vsub.f32 %v67, %v1289
      %1291 = vmatpush1.msra.mxu0 %v1290
      %1292 = vmatprep.subr.mxu0 0.0
      %1293 = vmatpush1.msra.mxu0 0.0
      %1294 = vmatprep.subr.mxu0 0.0
      %1295 = vmatpush1.msra.mxu0 0.0
      %1296 = vmatprep.subr.mxu0 0.0
      %1297 = vmatpush1.msra.mxu0 0.0
      %1298 = vmatprep.subr.mxu0 0.0
      %1299 = vmatpush1.msra.mxu0 0.0
      %1300 = vmatprep.subr.mxu0 0.0
      %1301 = vmatpush1.msra.mxu0 0.0
      %1302 = vmatprep.subr.mxu0 0.0
      %1303 = vmatpush1.msra.mxu0 0.0
      %1304 = vmatprep.subr.mxu0 0.0
      %1305 = vmatpush1.msra.mxu0 0.0
      %1306 = vmatprep.subr.mxu0 0.0
      %1307 = vmatpush1.msra.mxu0 0.0
      %1308 = vmatprep.subr.mxu0 0.0
      %1309 = vmatpush1.msra.mxu0 0.0
      %1310 = vmatprep.subr.mxu0 0.0
      %1311 = vmatpush1.msra.mxu0 0.0
      %1312 = vmatprep.subr.mxu0 0.0
      %1313 = vmatpush1.msra.mxu0 0.0
      %1314 = vmatprep.subr.mxu0 0.0
      %1315 = vmatpush1.msra.mxu0 0.0
      %1316 = vmatprep.subr.mxu0 0.0
      %1317 = vmatpush1.msra.mxu0 0.0
      %1318 = vmatprep.subr.mxu0 0.0
      %1319 = vmatpush1.msra.mxu0 0.0
      %1320 = vmatprep.subr.mxu0 0.0
      %1321 = vmatpush1.msra.mxu0 0.0
      %1322 = vmatprep.subr.mxu0 0.0
      %1323 = vmatpush1.msra.mxu0 0.0
      %1324 = vmatprep.subr.mxu0 0.0
      %1325 = vmatpush1.msra.mxu0 0.0
      %1326 = vmatprep.subr.mxu0 0.0
      %1327 = vmatpush1.msra.mxu0 0.0
      %1328 = vmatprep.subr.mxu0 0.0
      %1329 = vmatpush1.msra.mxu0 0.0
      %1330 = vmatprep.subr.mxu0 0.0
      %1331 = vmatpush1.msra.mxu0 0.0
      %1332 = vmatprep.subr.mxu0 0.0
      %1333 = vmatpush1.msra.mxu0 0.0
      %1334 = vmatprep.subr.mxu0 0.0
      %1335 = vmatpush1.msra.mxu0 0.0
      %1336 = vmatprep.subr.mxu0 0.0
      %1337 = vmatpush1.msra.mxu0 0.0
      %1338 = vmatprep.subr.mxu0 0.0
      %1339 = vmatpush1.msra.mxu0 0.0
      %1340 = vmatprep.subr.mxu0 0.0
      %1341 = vmatpush1.msra.mxu0 0.0
      %1342 = vmatprep.subr.mxu0 0.0
      %1343 = vmatpush1.msra.mxu0 0.0
      %1344 = vmatprep.subr.mxu0 0.0
      %1345 = vmatpush1.msra.mxu0 0.0
      %1346 = vmatprep.subr.mxu0 0.0
      %1347 = vmatpush1.msra.mxu0 0.0
      %1348 = vmatprep.mubr.f32.mxu0 0.0
      %v1349 = vand.u32 %v1104, 4294901760
      %v1350 = vsub.f32 %v1104, %v1349
      %1351 = vmatmul.mubr.f32.gmra.mrb[0].mxu0 %v1350
      %v1352 = vpop.f32.mrb[0].mxu0
      %v1353 = vadd.f32 %v1273, %v1352
      %v1354 = vpop.f32.mrb[0].mxu0
      %1355 = vdwg.mxu0
      %1356 = vmatprep.subr.mxu0 0.0
      %v1357 = vand.u32 %v64, 4294901760
      %1358 = vmatpush1.msra.mxu0 %v1357
      %1359 = vmatprep.subr.mxu0 0.0
      %v1360 = vand.u32 %v65, 4294901760
      %1361 = vmatpush1.msra.mxu0 %v1360
      %1362 = vmatprep.subr.mxu0 0.0
      %v1363 = vand.u32 %v66, 4294901760
      %1364 = vmatpush1.msra.mxu0 %v1363
      %1365 = vmatprep.subr.mxu0 0.0
      %v1366 = vand.u32 %v67, 4294901760
      %1367 = vmatpush1.msra.mxu0 %v1366
      %1368 = vmatprep.subr.mxu0 0.0
      %1369 = vmatpush1.msra.mxu0 0.0
      %1370 = vmatprep.subr.mxu0 0.0
      %1371 = vmatpush1.msra.mxu0 0.0
      %1372 = vmatprep.subr.mxu0 0.0
      %1373 = vmatpush1.msra.mxu0 0.0
      %1374 = vmatprep.subr.mxu0 0.0
      %1375 = vmatpush1.msra.mxu0 0.0
      %1376 = vmatprep.subr.mxu0 0.0
      %1377 = vmatpush1.msra.mxu0 0.0
      %1378 = vmatprep.subr.mxu0 0.0
      %1379 = vmatpush1.msra.mxu0 0.0
      %1380 = vmatprep.subr.mxu0 0.0
      %1381 = vmatpush1.msra.mxu0 0.0
      %1382 = vmatprep.subr.mxu0 0.0
      %1383 = vmatpush1.msra.mxu0 0.0
      %1384 = vmatprep.subr.mxu0 0.0
      %1385 = vmatpush1.msra.mxu0 0.0
      %1386 = vmatprep.subr.mxu0 0.0
      %1387 = vmatpush1.msra.mxu0 0.0
      %1388 = vmatprep.subr.mxu0 0.0
      %1389 = vmatpush1.msra.mxu0 0.0
      %1390 = vmatprep.subr.mxu0 0.0
      %1391 = vmatpush1.msra.mxu0 0.0
      %1392 = vmatprep.subr.mxu0 0.0
      %1393 = vmatpush1.msra.mxu0 0.0
      %1394 = vmatprep.subr.mxu0 0.0
      %1395 = vmatpush1.msra.mxu0 0.0
      %1396 = vmatprep.subr.mxu0 0.0
      %1397 = vmatpush1.msra.mxu0 0.0
      %1398 = vmatprep.subr.mxu0 0.0
      %1399 = vmatpush1.msra.mxu0 0.0
      %1400 = vmatprep.subr.mxu0 0.0
      %1401 = vmatpush1.msra.mxu0 0.0
      %1402 = vmatprep.subr.mxu0 0.0
      %1403 = vmatpush1.msra.mxu0 0.0
      %1404 = vmatprep.subr.mxu0 0.0
      %1405 = vmatpush1.msra.mxu0 0.0
      %1406 = vmatprep.subr.mxu0 0.0
      %1407 = vmatpush1.msra.mxu0 0.0
      %1408 = vmatprep.subr.mxu0 0.0
      %1409 = vmatpush1.msra.mxu0 0.0
      %1410 = vmatprep.subr.mxu0 0.0
      %1411 = vmatpush1.msra.mxu0 0.0
      %1412 = vmatprep.subr.mxu0 0.0
      %1413 = vmatpush1.msra.mxu0 0.0
      %1414 = vmatprep.subr.mxu0 0.0
      %1415 = vmatpush1.msra.mxu0 0.0
      %1416 = vmatprep.subr.mxu0 0.0
      %1417 = vmatpush1.msra.mxu0 0.0
      %1418 = vmatprep.subr.mxu0 0.0
      %1419 = vmatpush1.msra.mxu0 0.0
      %1420 = vmatprep.subr.mxu0 0.0
      %1421 = vmatpush1.msra.mxu0 0.0
      %1422 = vmatprep.subr.mxu0 0.0
      %1423 = vmatpush1.msra.mxu0 0.0
      %1424 = vmatprep.mubr.f32.mxu0 0.0
      %v1425 = vand.u32 %v1104, 4294901760
      %v1426 = vsub.f32 %v1104, %v1425
      %v1427 = vand.u32 %v1426, 4294901760
      %1428 = vmatmul.mubr.f32.gmra.mrb[0].mxu0 %v1427
      %v1429 = vpop.f32.mrb[0].mxu0
      %v1430 = vadd.f32 %v1353, %v1429
      %v1431 = vpop.f32.mrb[0].mxu0
      %1432 = vdwg.mxu0
      %1433 = vmatprep.subr.mxu0 0.0
      %v1434 = vand.u32 %v64, 4294901760
      %v1435 = vsub.f32 %v64, %v1434
      %v1436 = vand.u32 %v1435, 4294901760
      %1437 = vmatpush1.msra.mxu0 %v1436
      %1438 = vmatprep.subr.mxu0 0.0
      %v1439 = vand.u32 %v65, 4294901760
      %v1440 = vsub.f32 %v65, %v1439
      %v1441 = vand.u32 %v1440, 4294901760
      %1442 = vmatpush1.msra.mxu0 %v1441
      %1443 = vmatprep.subr.mxu0 0.0
      %v1444 = vand.u32 %v66, 4294901760
      %v1445 = vsub.f32 %v66, %v1444
      %v1446 = vand.u32 %v1445, 4294901760
      %1447 = vmatpush1.msra.mxu0 %v1446
      %1448 = vmatprep.subr.mxu0 0.0
      %v1449 = vand.u32 %v67, 4294901760
      %v1450 = vsub.f32 %v67, %v1449
      %v1451 = vand.u32 %v1450, 4294901760
      %1452 = vmatpush1.msra.mxu0 %v1451
      %1453 = vmatprep.subr.mxu0 0.0
      %1454 = vmatpush1.msra.mxu0 0.0
      %1455 = vmatprep.subr.mxu0 0.0
      %1456 = vmatpush1.msra.mxu0 0.0
      %1457 = vmatprep.subr.mxu0 0.0
      %1458 = vmatpush1.msra.mxu0 0.0
      %1459 = vmatprep.subr.mxu0 0.0
      %1460 = vmatpush1.msra.mxu0 0.0
      %1461 = vmatprep.subr.mxu0 0.0
      %1462 = vmatpush1.msra.mxu0 0.0
      %1463 = vmatprep.subr.mxu0 0.0
      %1464 = vmatpush1.msra.mxu0 0.0
      %1465 = vmatprep.subr.mxu0 0.0
      %1466 = vmatpush1.msra.mxu0 0.0
      %1467 = vmatprep.subr.mxu0 0.0
      %1468 = vmatpush1.msra.mxu0 0.0
      %1469 = vmatprep.subr.mxu0 0.0
      %1470 = vmatpush1.msra.mxu0 0.0
      %1471 = vmatprep.subr.mxu0 0.0
      %1472 = vmatpush1.msra.mxu0 0.0
      %1473 = vmatprep.subr.mxu0 0.0
      %1474 = vmatpush1.msra.mxu0 0.0
      %1475 = vmatprep.subr.mxu0 0.0
      %1476 = vmatpush1.msra.mxu0 0.0
      %1477 = vmatprep.subr.mxu0 0.0
      %1478 = vmatpush1.msra.mxu0 0.0
      %1479 = vmatprep.subr.mxu0 0.0
      %1480 = vmatpush1.msra.mxu0 0.0
      %1481 = vmatprep.subr.mxu0 0.0
      %1482 = vmatpush1.msra.mxu0 0.0
      %1483 = vmatprep.subr.mxu0 0.0
      %1484 = vmatpush1.msra.mxu0 0.0
      %1485 = vmatprep.subr.mxu0 0.0
      %1486 = vmatpush1.msra.mxu0 0.0
      %1487 = vmatprep.subr.mxu0 0.0
      %1488 = vmatpush1.msra.mxu0 0.0
      %1489 = vmatprep.subr.mxu0 0.0
      %1490 = vmatpush1.msra.mxu0 0.0
      %1491 = vmatprep.subr.mxu0 0.0
      %1492 = vmatpush1.msra.mxu0 0.0
      %1493 = vmatprep.subr.mxu0 0.0
      %1494 = vmatpush1.msra.mxu0 0.0
      %1495 = vmatprep.subr.mxu0 0.0
      %1496 = vmatpush1.msra.mxu0 0.0
      %1497 = vmatprep.subr.mxu0 0.0
      %1498 = vmatpush1.msra.mxu0 0.0
      %1499 = vmatprep.subr.mxu0 0.0
      %1500 = vmatpush1.msra.mxu0 0.0
      %1501 = vmatprep.subr.mxu0 0.0
      %1502 = vmatpush1.msra.mxu0 0.0
      %1503 = vmatprep.subr.mxu0 0.0
      %1504 = vmatpush1.msra.mxu0 0.0
      %1505 = vmatprep.subr.mxu0 0.0
      %1506 = vmatpush1.msra.mxu0 0.0
      %1507 = vmatprep.subr.mxu0 0.0
      %1508 = vmatpush1.msra.mxu0 0.0
      %1509 = vmatprep.mubr.f32.mxu0 0.0
      %v1510 = vand.u32 %v1104, 4294901760
      %1511 = vmatmul.mubr.f32.gmra.mrb[0].mxu0 %v1510
      %v1512 = vpop.f32.mrb[0].mxu0
      %v1513 = vadd.f32 %v1430, %v1512
      %v1514 = vpop.f32.mrb[0].mxu0
      %1515 = vdwg.mxu0
      %1516 = vmatprep.subr.mxu0 0.0
      %v1517 = vand.u32 %v64, 4294901760
      %1518 = vmatpush1.msra.mxu0 %v1517
      %1519 = vmatprep.subr.mxu0 0.0
      %v1520 = vand.u32 %v65, 4294901760
      %1521 = vmatpush1.msra.mxu0 %v1520
      %1522 = vmatprep.subr.mxu0 0.0
      %v1523 = vand.u32 %v66, 4294901760
      %1524 = vmatpush1.msra.mxu0 %v1523
      %1525 = vmatprep.subr.mxu0 0.0
      %v1526 = vand.u32 %v67, 4294901760
      %1527 = vmatpush1.msra.mxu0 %v1526
      %1528 = vmatprep.subr.mxu0 0.0
      %1529 = vmatpush1.msra.mxu0 0.0
      %1530 = vmatprep.subr.mxu0 0.0
      %1531 = vmatpush1.msra.mxu0 0.0
      %1532 = vmatprep.subr.mxu0 0.0
      %1533 = vmatpush1.msra.mxu0 0.0
      %1534 = vmatprep.subr.mxu0 0.0
      %1535 = vmatpush1.msra.mxu0 0.0
      %1536 = vmatprep.subr.mxu0 0.0
      %1537 = vmatpush1.msra.mxu0 0.0
      %1538 = vmatprep.subr.mxu0 0.0
      %1539 = vmatpush1.msra.mxu0 0.0
      %1540 = vmatprep.subr.mxu0 0.0
      %1541 = vmatpush1.msra.mxu0 0.0
      %1542 = vmatprep.subr.mxu0 0.0
      %1543 = vmatpush1.msra.mxu0 0.0
      %1544 = vmatprep.subr.mxu0 0.0
      %1545 = vmatpush1.msra.mxu0 0.0
      %1546 = vmatprep.subr.mxu0 0.0
      %1547 = vmatpush1.msra.mxu0 0.0
      %1548 = vmatprep.subr.mxu0 0.0
      %1549 = vmatpush1.msra.mxu0 0.0
      %1550 = vmatprep.subr.mxu0 0.0
      %1551 = vmatpush1.msra.mxu0 0.0
      %1552 = vmatprep.subr.mxu0 0.0
      %1553 = vmatpush1.msra.mxu0 0.0
      %1554 = vmatprep.subr.mxu0 0.0
      %1555 = vmatpush1.msra.mxu0 0.0
      %1556 = vmatprep.subr.mxu0 0.0
      %1557 = vmatpush1.msra.mxu0 0.0
      %1558 = vmatprep.subr.mxu0 0.0
      %1559 = vmatpush1.msra.mxu0 0.0
      %1560 = vmatprep.subr.mxu0 0.0
      %1561 = vmatpush1.msra.mxu0 0.0
      %1562 = vmatprep.subr.mxu0 0.0
      %1563 = vmatpush1.msra.mxu0 0.0
      %1564 = vmatprep.subr.mxu0 0.0
      %1565 = vmatpush1.msra.mxu0 0.0
      %1566 = vmatprep.subr.mxu0 0.0
      %1567 = vmatpush1.msra.mxu0 0.0
      %1568 = vmatprep.subr.mxu0 0.0
      %1569 = vmatpush1.msra.mxu0 0.0
      %1570 = vmatprep.subr.mxu0 0.0
      %1571 = vmatpush1.msra.mxu0 0.0
      %1572 = vmatprep.subr.mxu0 0.0
      %1573 = vmatpush1.msra.mxu0 0.0
      %1574 = vmatprep.subr.mxu0 0.0
      %1575 = vmatpush1.msra.mxu0 0.0
      %1576 = vmatprep.subr.mxu0 0.0
      %1577 = vmatpush1.msra.mxu0 0.0
      %1578 = vmatprep.subr.mxu0 0.0
      %1579 = vmatpush1.msra.mxu0 0.0
      %1580 = vmatprep.subr.mxu0 0.0
      %1581 = vmatpush1.msra.mxu0 0.0
      %1582 = vmatprep.subr.mxu0 0.0
      %1583 = vmatpush1.msra.mxu0 0.0
      %1584 = vmatprep.mubr.f32.mxu0 0.0
      %v1585 = vand.u32 %v1104, 4294901760
      %1586 = vmatmul.mubr.f32.gmra.mrb[0].mxu0 %v1585
      %v1587 = vpop.f32.mrb[0].mxu0
      %v1588 = vadd.f32 %v1513, %v1587
      %v1589 = vpop.f32.mrb[0].mxu0
      %1590 = vdwg.mxu0
      %v1591 = vadd.f32 %v1100, %v1588
      %v1592 = vxor.u32 %v1591, 2147483648
      %v1593 = vmul.f32 %v1592, 1.442695
      %v1594 = vpow.pop %v1593
      %v1595 = vadd.f32 %v1594, 1.0
      %v1596 = vrcp.pop %v1595
      %v1597 = vmul.f32 1.0, %v1596
      %v1598 = vtanh.pop %v1591
      %v1599 = vmul.f32 %v1597, %v87
      %1601 = vrot.lane.b32.xlu0 %v1598, 64
      %v1602 = vpop.permute.xlu0 %1601
      %v1604 = vmul.f32 %v1597, %v1602
      %1606 = vrot.lane.b32.xlu0 %v1604, 32
      %v1607 = vpop.permute.xlu0 %1606
      %v1609 = vadd.f32 %v1599, %v1607
      %v1610 = vtanh.pop %v1609
      %1612 = vrot.lane.b32.xlu0 %v1610, 64
      %v1613 = vpop.permute.xlu0 %1612
      %v1615 = vmul.f32 %v1597, %v1613
      %1617 = vrot.lane.b32.xlu0 %v86, 32
      %v1618 = vpop.permute.xlu0 %1617
      %v1619 = vsel %vm95, %v1618, 0
      %1621 = vmatprep.subr.mxu0 0.0
      %v1622 = vand.u32 %v72, 4294901760
      %1623 = vmatpush1.msra.mxu0 %v1622
      %1624 = vmatprep.subr.mxu0 0.0
      %v1625 = vand.u32 %v73, 4294901760
      %1626 = vmatpush1.msra.mxu0 %v1625
      %1627 = vmatprep.subr.mxu0 0.0
      %v1628 = vand.u32 %v74, 4294901760
      %1629 = vmatpush1.msra.mxu0 %v1628
      %1630 = vmatprep.subr.mxu0 0.0
      %v1631 = vand.u32 %v75, 4294901760
      %1632 = vmatpush1.msra.mxu0 %v1631
      %1633 = vmatprep.subr.mxu0 0.0
      %1634 = vmatpush1.msra.mxu0 0.0
      %1635 = vmatprep.subr.mxu0 0.0
      %1636 = vmatpush1.msra.mxu0 0.0
      %1637 = vmatprep.subr.mxu0 0.0
      %1638 = vmatpush1.msra.mxu0 0.0
      %1639 = vmatprep.subr.mxu0 0.0
      %1640 = vmatpush1.msra.mxu0 0.0
      %1641 = vmatprep.subr.mxu0 0.0
      %1642 = vmatpush1.msra.mxu0 0.0
      %1643 = vmatprep.subr.mxu0 0.0
      %1644 = vmatpush1.msra.mxu0 0.0
      %1645 = vmatprep.subr.mxu0 0.0
      %1646 = vmatpush1.msra.mxu0 0.0
      %1647 = vmatprep.subr.mxu0 0.0
      %1648 = vmatpush1.msra.mxu0 0.0
      %1649 = vmatprep.subr.mxu0 0.0
      %1650 = vmatpush1.msra.mxu0 0.0
      %1651 = vmatprep.subr.mxu0 0.0
      %1652 = vmatpush1.msra.mxu0 0.0
      %1653 = vmatprep.subr.mxu0 0.0
      %1654 = vmatpush1.msra.mxu0 0.0
      %1655 = vmatprep.subr.mxu0 0.0
      %1656 = vmatpush1.msra.mxu0 0.0
      %1657 = vmatprep.subr.mxu0 0.0
      %1658 = vmatpush1.msra.mxu0 0.0
      %1659 = vmatprep.subr.mxu0 0.0
      %1660 = vmatpush1.msra.mxu0 0.0
      %1661 = vmatprep.subr.mxu0 0.0
      %1662 = vmatpush1.msra.mxu0 0.0
      %1663 = vmatprep.subr.mxu0 0.0
      %1664 = vmatpush1.msra.mxu0 0.0
      %1665 = vmatprep.subr.mxu0 0.0
      %1666 = vmatpush1.msra.mxu0 0.0
      %1667 = vmatprep.subr.mxu0 0.0
      %1668 = vmatpush1.msra.mxu0 0.0
      %1669 = vmatprep.subr.mxu0 0.0
      %1670 = vmatpush1.msra.mxu0 0.0
      %1671 = vmatprep.subr.mxu0 0.0
      %1672 = vmatpush1.msra.mxu0 0.0
      %1673 = vmatprep.subr.mxu0 0.0
      %1674 = vmatpush1.msra.mxu0 0.0
      %1675 = vmatprep.subr.mxu0 0.0
      %1676 = vmatpush1.msra.mxu0 0.0
      %1677 = vmatprep.subr.mxu0 0.0
      %1678 = vmatpush1.msra.mxu0 0.0
      %1679 = vmatprep.subr.mxu0 0.0
      %1680 = vmatpush1.msra.mxu0 0.0
      %1681 = vmatprep.subr.mxu0 0.0
      %1682 = vmatpush1.msra.mxu0 0.0
      %1683 = vmatprep.subr.mxu0 0.0
      %1684 = vmatpush1.msra.mxu0 0.0
      %1685 = vmatprep.subr.mxu0 0.0
      %1686 = vmatpush1.msra.mxu0 0.0
      %1687 = vmatprep.subr.mxu0 0.0
      %1688 = vmatpush1.msra.mxu0 0.0
      %1689 = vmatprep.mubr.f32.mxu0 0.0
      %v1690 = vand.u32 %v1619, 4294901760
      %v1691 = vsub.f32 %v1619, %v1690
      %v1692 = vand.u32 %v1691, 4294901760
      %v1693 = vsub.f32 %v1691, %v1692
      %v1694 = vand.u32 %v1693, 4294901760
      %1695 = vmatmul.mubr.f32.gmra.mrb[0].mxu0 %v1694
      %v1696 = vpop.f32.mrb[0].mxu0
      %v1697 = vadd.f32 0.0, %v1696
      %v1698 = vpop.f32.mrb[0].mxu0
      %1699 = vdwg.mxu0
      %1700 = vmatprep.subr.mxu0 0.0
      %v1701 = vand.u32 %v72, 4294901760
      %v1702 = vsub.f32 %v72, %v1701
      %v1703 = vand.u32 %v1702, 4294901760
      %v1704 = vsub.f32 %v1702, %v1703
      %v1705 = vand.u32 %v1704, 4294901760
      %1706 = vmatpush1.msra.mxu0 %v1705
      %1707 = vmatprep.subr.mxu0 0.0
      %v1708 = vand.u32 %v73, 4294901760
      %v1709 = vsub.f32 %v73, %v1708
      %v1710 = vand.u32 %v1709, 4294901760
      %v1711 = vsub.f32 %v1709, %v1710
      %v1712 = vand.u32 %v1711, 4294901760
      %1713 = vmatpush1.msra.mxu0 %v1712
      %1714 = vmatprep.subr.mxu0 0.0
      %v1715 = vand.u32 %v74, 4294901760
      %v1716 = vsub.f32 %v74, %v1715
      %v1717 = vand.u32 %v1716, 4294901760
      %v1718 = vsub.f32 %v1716, %v1717
      %v1719 = vand.u32 %v1718, 4294901760
      %1720 = vmatpush1.msra.mxu0 %v1719
      %1721 = vmatprep.subr.mxu0 0.0
      %v1722 = vand.u32 %v75, 4294901760
      %v1723 = vsub.f32 %v75, %v1722
      %v1724 = vand.u32 %v1723, 4294901760
      %v1725 = vsub.f32 %v1723, %v1724
      %v1726 = vand.u32 %v1725, 4294901760
      %1727 = vmatpush1.msra.mxu0 %v1726
      %1728 = vmatprep.subr.mxu0 0.0
      %1729 = vmatpush1.msra.mxu0 0.0
      %1730 = vmatprep.subr.mxu0 0.0
      %1731 = vmatpush1.msra.mxu0 0.0
      %1732 = vmatprep.subr.mxu0 0.0
      %1733 = vmatpush1.msra.mxu0 0.0
      %1734 = vmatprep.subr.mxu0 0.0
      %1735 = vmatpush1.msra.mxu0 0.0
      %1736 = vmatprep.subr.mxu0 0.0
      %1737 = vmatpush1.msra.mxu0 0.0
      %1738 = vmatprep.subr.mxu0 0.0
      %1739 = vmatpush1.msra.mxu0 0.0
      %1740 = vmatprep.subr.mxu0 0.0
      %1741 = vmatpush1.msra.mxu0 0.0
      %1742 = vmatprep.subr.mxu0 0.0
      %1743 = vmatpush1.msra.mxu0 0.0
      %1744 = vmatprep.subr.mxu0 0.0
      %1745 = vmatpush1.msra.mxu0 0.0
      %1746 = vmatprep.subr.mxu0 0.0
      %1747 = vmatpush1.msra.mxu0 0.0
      %1748 = vmatprep.subr.mxu0 0.0
      %1749 = vmatpush1.msra.mxu0 0.0
      %1750 = vmatprep.subr.mxu0 0.0
      %1751 = vmatpush1.msra.mxu0 0.0
      %1752 = vmatprep.subr.mxu0 0.0
      %1753 = vmatpush1.msra.mxu0 0.0
      %1754 = vmatprep.subr.mxu0 0.0
      %1755 = vmatpush1.msra.mxu0 0.0
      %1756 = vmatprep.subr.mxu0 0.0
      %1757 = vmatpush1.msra.mxu0 0.0
      %1758 = vmatprep.subr.mxu0 0.0
      %1759 = vmatpush1.msra.mxu0 0.0
      %1760 = vmatprep.subr.mxu0 0.0
      %1761 = vmatpush1.msra.mxu0 0.0
      %1762 = vmatprep.subr.mxu0 0.0
      %1763 = vmatpush1.msra.mxu0 0.0
      %1764 = vmatprep.subr.mxu0 0.0
      %1765 = vmatpush1.msra.mxu0 0.0
      %1766 = vmatprep.subr.mxu0 0.0
      %1767 = vmatpush1.msra.mxu0 0.0
      %1768 = vmatprep.subr.mxu0 0.0
      %1769 = vmatpush1.msra.mxu0 0.0
      %1770 = vmatprep.subr.mxu0 0.0
      %1771 = vmatpush1.msra.mxu0 0.0
      %1772 = vmatprep.subr.mxu0 0.0
      %1773 = vmatpush1.msra.mxu0 0.0
      %1774 = vmatprep.subr.mxu0 0.0
      %1775 = vmatpush1.msra.mxu0 0.0
      %1776 = vmatprep.subr.mxu0 0.0
      %1777 = vmatpush1.msra.mxu0 0.0
      %1778 = vmatprep.subr.mxu0 0.0
      %1779 = vmatpush1.msra.mxu0 0.0
      %1780 = vmatprep.subr.mxu0 0.0
      %1781 = vmatpush1.msra.mxu0 0.0
      %1782 = vmatprep.subr.mxu0 0.0
      %1783 = vmatpush1.msra.mxu0 0.0
      %1784 = vmatprep.mubr.f32.mxu0 0.0
      %v1785 = vand.u32 %v1619, 4294901760
      %1786 = vmatmul.mubr.f32.gmra.mrb[0].mxu0 %v1785
      %v1787 = vpop.f32.mrb[0].mxu0
      %v1788 = vadd.f32 %v1697, %v1787
      %v1789 = vpop.f32.mrb[0].mxu0
      %1790 = vdwg.mxu0
      %1791 = vmatprep.subr.mxu0 0.0
      %v1792 = vand.u32 %v72, 4294901760
      %v1793 = vsub.f32 %v72, %v1792
      %1794 = vmatpush1.msra.mxu0 %v1793
      %1795 = vmatprep.subr.mxu0 0.0
      %v1796 = vand.u32 %v73, 4294901760
      %v1797 = vsub.f32 %v73, %v1796
      %1798 = vmatpush1.msra.mxu0 %v1797
      %1799 = vmatprep.subr.mxu0 0.0
      %v1800 = vand.u32 %v74, 4294901760
      %v1801 = vsub.f32 %v74, %v1800
      %1802 = vmatpush1.msra.mxu0 %v1801
      %1803 = vmatprep.subr.mxu0 0.0
      %v1804 = vand.u32 %v75, 4294901760
      %v1805 = vsub.f32 %v75, %v1804
      %1806 = vmatpush1.msra.mxu0 %v1805
      %1807 = vmatprep.subr.mxu0 0.0
      %1808 = vmatpush1.msra.mxu0 0.0
      %1809 = vmatprep.subr.mxu0 0.0
      %1810 = vmatpush1.msra.mxu0 0.0
      %1811 = vmatprep.subr.mxu0 0.0
      %1812 = vmatpush1.msra.mxu0 0.0
      %1813 = vmatprep.subr.mxu0 0.0
      %1814 = vmatpush1.msra.mxu0 0.0
      %1815 = vmatprep.subr.mxu0 0.0
      %1816 = vmatpush1.msra.mxu0 0.0
      %1817 = vmatprep.subr.mxu0 0.0
      %1818 = vmatpush1.msra.mxu0 0.0
      %1819 = vmatprep.subr.mxu0 0.0
      %1820 = vmatpush1.msra.mxu0 0.0
      %1821 = vmatprep.subr.mxu0 0.0
      %1822 = vmatpush1.msra.mxu0 0.0
      %1823 = vmatprep.subr.mxu0 0.0
      %1824 = vmatpush1.msra.mxu0 0.0
      %1825 = vmatprep.subr.mxu0 0.0
      %1826 = vmatpush1.msra.mxu0 0.0
      %1827 = vmatprep.subr.mxu0 0.0
      %1828 = vmatpush1.msra.mxu0 0.0
      %1829 = vmatprep.subr.mxu0 0.0
      %1830 = vmatpush1.msra.mxu0 0.0
      %1831 = vmatprep.subr.mxu0 0.0
      %1832 = vmatpush1.msra.mxu0 0.0
      %1833 = vmatprep.subr.mxu0 0.0
      %1834 = vmatpush1.msra.mxu0 0.0
      %1835 = vmatprep.subr.mxu0 0.0
      %1836 = vmatpush1.msra.mxu0 0.0
      %1837 = vmatprep.subr.mxu0 0.0
      %1838 = vmatpush1.msra.mxu0 0.0
      %1839 = vmatprep.subr.mxu0 0.0
      %1840 = vmatpush1.msra.mxu0 0.0
      %1841 = vmatprep.subr.mxu0 0.0
      %1842 = vmatpush1.msra.mxu0 0.0
      %1843 = vmatprep.subr.mxu0 0.0
      %1844 = vmatpush1.msra.mxu0 0.0
      %1845 = vmatprep.subr.mxu0 0.0
      %1846 = vmatpush1.msra.mxu0 0.0
      %1847 = vmatprep.subr.mxu0 0.0
      %1848 = vmatpush1.msra.mxu0 0.0
      %1849 = vmatprep.subr.mxu0 0.0
      %1850 = vmatpush1.msra.mxu0 0.0
      %1851 = vmatprep.subr.mxu0 0.0
      %1852 = vmatpush1.msra.mxu0 0.0
      %1853 = vmatprep.subr.mxu0 0.0
      %1854 = vmatpush1.msra.mxu0 0.0
      %1855 = vmatprep.subr.mxu0 0.0
      %1856 = vmatpush1.msra.mxu0 0.0
      %1857 = vmatprep.subr.mxu0 0.0
      %1858 = vmatpush1.msra.mxu0 0.0
      %1859 = vmatprep.subr.mxu0 0.0
      %1860 = vmatpush1.msra.mxu0 0.0
      %1861 = vmatprep.subr.mxu0 0.0
      %1862 = vmatpush1.msra.mxu0 0.0
      %1863 = vmatprep.mubr.f32.mxu0 0.0
      %v1864 = vand.u32 %v1619, 4294901760
      %v1865 = vsub.f32 %v1619, %v1864
      %1866 = vmatmul.mubr.f32.gmra.mrb[0].mxu0 %v1865
      %v1867 = vpop.f32.mrb[0].mxu0
      %v1868 = vadd.f32 %v1788, %v1867
      %v1869 = vpop.f32.mrb[0].mxu0
      %1870 = vdwg.mxu0
      %1871 = vmatprep.subr.mxu0 0.0
      %v1872 = vand.u32 %v72, 4294901760
      %1873 = vmatpush1.msra.mxu0 %v1872
      %1874 = vmatprep.subr.mxu0 0.0
      %v1875 = vand.u32 %v73, 4294901760
      %1876 = vmatpush1.msra.mxu0 %v1875
      %1877 = vmatprep.subr.mxu0 0.0
      %v1878 = vand.u32 %v74, 4294901760
      %1879 = vmatpush1.msra.mxu0 %v1878
      %1880 = vmatprep.subr.mxu0 0.0
      %v1881 = vand.u32 %v75, 4294901760
      %1882 = vmatpush1.msra.mxu0 %v1881
      %1883 = vmatprep.subr.mxu0 0.0
      %1884 = vmatpush1.msra.mxu0 0.0
      %1885 = vmatprep.subr.mxu0 0.0
      %1886 = vmatpush1.msra.mxu0 0.0
      %1887 = vmatprep.subr.mxu0 0.0
      %1888 = vmatpush1.msra.mxu0 0.0
      %1889 = vmatprep.subr.mxu0 0.0
      %1890 = vmatpush1.msra.mxu0 0.0
      %1891 = vmatprep.subr.mxu0 0.0
      %1892 = vmatpush1.msra.mxu0 0.0
      %1893 = vmatprep.subr.mxu0 0.0
      %1894 = vmatpush1.msra.mxu0 0.0
      %1895 = vmatprep.subr.mxu0 0.0
      %1896 = vmatpush1.msra.mxu0 0.0
      %1897 = vmatprep.subr.mxu0 0.0
      %1898 = vmatpush1.msra.mxu0 0.0
      %1899 = vmatprep.subr.mxu0 0.0
      %1900 = vmatpush1.msra.mxu0 0.0
      %1901 = vmatprep.subr.mxu0 0.0
      %1902 = vmatpush1.msra.mxu0 0.0
      %1903 = vmatprep.subr.mxu0 0.0
      %1904 = vmatpush1.msra.mxu0 0.0
      %1905 = vmatprep.subr.mxu0 0.0
      %1906 = vmatpush1.msra.mxu0 0.0
      %1907 = vmatprep.subr.mxu0 0.0
      %1908 = vmatpush1.msra.mxu0 0.0
      %1909 = vmatprep.subr.mxu0 0.0
      %1910 = vmatpush1.msra.mxu0 0.0
      %1911 = vmatprep.subr.mxu0 0.0
      %1912 = vmatpush1.msra.mxu0 0.0
      %1913 = vmatprep.subr.mxu0 0.0
      %1914 = vmatpush1.msra.mxu0 0.0
      %1915 = vmatprep.subr.mxu0 0.0
      %1916 = vmatpush1.msra.mxu0 0.0
      %1917 = vmatprep.subr.mxu0 0.0
      %1918 = vmatpush1.msra.mxu0 0.0
      %1919 = vmatprep.subr.mxu0 0.0
      %1920 = vmatpush1.msra.mxu0 0.0
      %1921 = vmatprep.subr.mxu0 0.0
      %1922 = vmatpush1.msra.mxu0 0.0
      %1923 = vmatprep.subr.mxu0 0.0
      %1924 = vmatpush1.msra.mxu0 0.0
      %1925 = vmatprep.subr.mxu0 0.0
      %1926 = vmatpush1.msra.mxu0 0.0
      %1927 = vmatprep.subr.mxu0 0.0
      %1928 = vmatpush1.msra.mxu0 0.0
      %1929 = vmatprep.subr.mxu0 0.0
      %1930 = vmatpush1.msra.mxu0 0.0
      %1931 = vmatprep.subr.mxu0 0.0
      %1932 = vmatpush1.msra.mxu0 0.0
      %1933 = vmatprep.subr.mxu0 0.0
      %1934 = vmatpush1.msra.mxu0 0.0
      %1935 = vmatprep.subr.mxu0 0.0
      %1936 = vmatpush1.msra.mxu0 0.0
      %1937 = vmatprep.subr.mxu0 0.0
      %1938 = vmatpush1.msra.mxu0 0.0
      %1939 = vmatprep.mubr.f32.mxu0 0.0
      %v1940 = vand.u32 %v1619, 4294901760
      %v1941 = vsub.f32 %v1619, %v1940
      %v1942 = vand.u32 %v1941, 4294901760
      %1943 = vmatmul.mubr.f32.gmra.mrb[0].mxu0 %v1942
      %v1944 = vpop.f32.mrb[0].mxu0
      %v1945 = vadd.f32 %v1868, %v1944
      %v1946 = vpop.f32.mrb[0].mxu0
      %1947 = vdwg.mxu0
      %1948 = vmatprep.subr.mxu0 0.0
      %v1949 = vand.u32 %v72, 4294901760
      %v1950 = vsub.f32 %v72, %v1949
      %v1951 = vand.u32 %v1950, 4294901760
      %1952 = vmatpush1.msra.mxu0 %v1951
      %1953 = vmatprep.subr.mxu0 0.0
      %v1954 = vand.u32 %v73, 4294901760
      %v1955 = vsub.f32 %v73, %v1954
      %v1956 = vand.u32 %v1955, 4294901760
      %1957 = vmatpush1.msra.mxu0 %v1956
      %1958 = vmatprep.subr.mxu0 0.0
      %v1959 = vand.u32 %v74, 4294901760
      %v1960 = vsub.f32 %v74, %v1959
      %v1961 = vand.u32 %v1960, 4294901760
      %1962 = vmatpush1.msra.mxu0 %v1961
      %1963 = vmatprep.subr.mxu0 0.0
      %v1964 = vand.u32 %v75, 4294901760
      %v1965 = vsub.f32 %v75, %v1964
      %v1966 = vand.u32 %v1965, 4294901760
      %1967 = vmatpush1.msra.mxu0 %v1966
      %1968 = vmatprep.subr.mxu0 0.0
      %1969 = vmatpush1.msra.mxu0 0.0
      %1970 = vmatprep.subr.mxu0 0.0
      %1971 = vmatpush1.msra.mxu0 0.0
      %1972 = vmatprep.subr.mxu0 0.0
      %1973 = vmatpush1.msra.mxu0 0.0
      %1974 = vmatprep.subr.mxu0 0.0
      %1975 = vmatpush1.msra.mxu0 0.0
      %1976 = vmatprep.subr.mxu0 0.0
      %1977 = vmatpush1.msra.mxu0 0.0
      %1978 = vmatprep.subr.mxu0 0.0
      %1979 = vmatpush1.msra.mxu0 0.0
      %1980 = vmatprep.subr.mxu0 0.0
      %1981 = vmatpush1.msra.mxu0 0.0
      %1982 = vmatprep.subr.mxu0 0.0
      %1983 = vmatpush1.msra.mxu0 0.0
      %1984 = vmatprep.subr.mxu0 0.0
      %1985 = vmatpush1.msra.mxu0 0.0
      %1986 = vmatprep.subr.mxu0 0.0
      %1987 = vmatpush1.msra.mxu0 0.0
      %1988 = vmatprep.subr.mxu0 0.0
      %1989 = vmatpush1.msra.mxu0 0.0
      %1990 = vmatprep.subr.mxu0 0.0
      %1991 = vmatpush1.msra.mxu0 0.0
      %1992 = vmatprep.subr.mxu0 0.0
      %1993 = vmatpush1.msra.mxu0 0.0
      %1994 = vmatprep.subr.mxu0 0.0
      %1995 = vmatpush1.msra.mxu0 0.0
      %1996 = vmatprep.subr.mxu0 0.0
      %1997 = vmatpush1.msra.mxu0 0.0
      %1998 = vmatprep.subr.mxu0 0.0
      %1999 = vmatpush1.msra.mxu0 0.0
      %2000 = vmatprep.subr.mxu0 0.0
      %2001 = vmatpush1.msra.mxu0 0.0
      %2002 = vmatprep.subr.mxu0 0.0
      %2003 = vmatpush1.msra.mxu0 0.0
      %2004 = vmatprep.subr.mxu0 0.0
      %2005 = vmatpush1.msra.mxu0 0.0
      %2006 = vmatprep.subr.mxu0 0.0
      %2007 = vmatpush1.msra.mxu0 0.0
      %2008 = vmatprep.subr.mxu0 0.0
      %2009 = vmatpush1.msra.mxu0 0.0
      %2010 = vmatprep.subr.mxu0 0.0
      %2011 = vmatpush1.msra.mxu0 0.0
      %2012 = vmatprep.subr.mxu0 0.0
      %2013 = vmatpush1.msra.mxu0 0.0
      %2014 = vmatprep.subr.mxu0 0.0
      %2015 = vmatpush1.msra.mxu0 0.0
      %2016 = vmatprep.subr.mxu0 0.0
      %2017 = vmatpush1.msra.mxu0 0.0
      %2018 = vmatprep.subr.mxu0 0.0
      %2019 = vmatpush1.msra.mxu0 0.0
      %2020 = vmatprep.subr.mxu0 0.0
      %2021 = vmatpush1.msra.mxu0 0.0
      %2022 = vmatprep.subr.mxu0 0.0
      %2023 = vmatpush1.msra.mxu0 0.0
      %2024 = vmatprep.mubr.f32.mxu0 0.0
      %v2025 = vand.u32 %v1619, 4294901760
      %2026 = vmatmul.mubr.f32.gmra.mrb[0].mxu0 %v2025
      %v2027 = vpop.f32.mrb[0].mxu0
      %v2028 = vadd.f32 %v1945, %v2027
      %v2029 = vpop.f32.mrb[0].mxu0
      %2030 = vdwg.mxu0
      %2031 = vmatprep.subr.mxu0 0.0
      %v2032 = vand.u32 %v72, 4294901760
      %2033 = vmatpush1.msra.mxu0 %v2032
      %2034 = vmatprep.subr.mxu0 0.0
      %v2035 = vand.u32 %v73, 4294901760
      %2036 = vmatpush1.msra.mxu0 %v2035
      %2037 = vmatprep.subr.mxu0 0.0
      %v2038 = vand.u32 %v74, 4294901760
      %2039 = vmatpush1.msra.mxu0 %v2038
      %2040 = vmatprep.subr.mxu0 0.0
      %v2041 = vand.u32 %v75, 4294901760
      %2042 = vmatpush1.msra.mxu0 %v2041
      %2043 = vmatprep.subr.mxu0 0.0
      %2044 = vmatpush1.msra.mxu0 0.0
      %2045 = vmatprep.subr.mxu0 0.0
      %2046 = vmatpush1.msra.mxu0 0.0
      %2047 = vmatprep.subr.mxu0 0.0
      %2048 = vmatpush1.msra.mxu0 0.0
      %2049 = vmatprep.subr.mxu0 0.0
      %2050 = vmatpush1.msra.mxu0 0.0
      %2051 = vmatprep.subr.mxu0 0.0
      %2052 = vmatpush1.msra.mxu0 0.0
      %2053 = vmatprep.subr.mxu0 0.0
      %2054 = vmatpush1.msra.mxu0 0.0
      %2055 = vmatprep.subr.mxu0 0.0
      %2056 = vmatpush1.msra.mxu0 0.0
      %2057 = vmatprep.subr.mxu0 0.0
      %2058 = vmatpush1.msra.mxu0 0.0
      %2059 = vmatprep.subr.mxu0 0.0
      %2060 = vmatpush1.msra.mxu0 0.0
      %2061 = vmatprep.subr.mxu0 0.0
      %2062 = vmatpush1.msra.mxu0 0.0
      %2063 = vmatprep.subr.mxu0 0.0
      %2064 = vmatpush1.msra.mxu0 0.0
      %2065 = vmatprep.subr.mxu0 0.0
      %2066 = vmatpush1.msra.mxu0 0.0
      %2067 = vmatprep.subr.mxu0 0.0
      %2068 = vmatpush1.msra.mxu0 0.0
      %2069 = vmatprep.subr.mxu0 0.0
      %2070 = vmatpush1.msra.mxu0 0.0
      %2071 = vmatprep.subr.mxu0 0.0
      %2072 = vmatpush1.msra.mxu0 0.0
      %2073 = vmatprep.subr.mxu0 0.0
      %2074 = vmatpush1.msra.mxu0 0.0
      %2075 = vmatprep.subr.mxu0 0.0
      %2076 = vmatpush1.msra.mxu0 0.0
      %2077 = vmatprep.subr.mxu0 0.0
      %2078 = vmatpush1.msra.mxu0 0.0
      %2079 = vmatprep.subr.mxu0 0.0
      %2080 = vmatpush1.msra.mxu0 0.0
      %2081 = vmatprep.subr.mxu0 0.0
      %2082 = vmatpush1.msra.mxu0 0.0
      %2083 = vmatprep.subr.mxu0 0.0
      %2084 = vmatpush1.msra.mxu0 0.0
      %2085 = vmatprep.subr.mxu0 0.0
      %2086 = vmatpush1.msra.mxu0 0.0
      %2087 = vmatprep.subr.mxu0 0.0
      %2088 = vmatpush1.msra.mxu0 0.0
      %2089 = vmatprep.subr.mxu0 0.0
      %2090 = vmatpush1.msra.mxu0 0.0
      %2091 = vmatprep.subr.mxu0 0.0
      %2092 = vmatpush1.msra.mxu0 0.0
      %2093 = vmatprep.subr.mxu0 0.0
      %2094 = vmatpush1.msra.mxu0 0.0
      %2095 = vmatprep.subr.mxu0 0.0
      %2096 = vmatpush1.msra.mxu0 0.0
      %2097 = vmatprep.subr.mxu0 0.0
      %2098 = vmatpush1.msra.mxu0 0.0
      %2099 = vmatprep.mubr.f32.mxu0 0.0
      %v2100 = vand.u32 %v1619, 4294901760
      %2101 = vmatmul.mubr.f32.gmra.mrb[0].mxu0 %v2100
      %v2102 = vpop.f32.mrb[0].mxu0
      %v2103 = vadd.f32 %v2028, %v2102
      %v2104 = vpop.f32.mrb[0].mxu0
      %2105 = vdwg.mxu0
      %2107 = vrot.lane.b32.xlu0 %v1615, 32
      %v2108 = vpop.permute.xlu0 %2107
      %v2109 = vsel %vm95, %v2108, 0
      %2111 = vmatprep.subr.mxu0 0.0
      %v2112 = vand.u32 %v68, 4294901760
      %2113 = vmatpush1.msra.mxu0 %v2112
      %2114 = vmatprep.subr.mxu0 0.0
      %v2115 = vand.u32 %v69, 4294901760
      %2116 = vmatpush1.msra.mxu0 %v2115
      %2117 = vmatprep.subr.mxu0 0.0
      %v2118 = vand.u32 %v70, 4294901760
      %2119 = vmatpush1.msra.mxu0 %v2118
      %2120 = vmatprep.subr.mxu0 0.0
      %v2121 = vand.u32 %v71, 4294901760
      %2122 = vmatpush1.msra.mxu0 %v2121
      %2123 = vmatprep.subr.mxu0 0.0
      %2124 = vmatpush1.msra.mxu0 0.0
      %2125 = vmatprep.subr.mxu0 0.0
      %2126 = vmatpush1.msra.mxu0 0.0
      %2127 = vmatprep.subr.mxu0 0.0
      %2128 = vmatpush1.msra.mxu0 0.0
      %2129 = vmatprep.subr.mxu0 0.0
      %2130 = vmatpush1.msra.mxu0 0.0
      %2131 = vmatprep.subr.mxu0 0.0
      %2132 = vmatpush1.msra.mxu0 0.0
      %2133 = vmatprep.subr.mxu0 0.0
      %2134 = vmatpush1.msra.mxu0 0.0
      %2135 = vmatprep.subr.mxu0 0.0
      %2136 = vmatpush1.msra.mxu0 0.0
      %2137 = vmatprep.subr.mxu0 0.0
      %2138 = vmatpush1.msra.mxu0 0.0
      %2139 = vmatprep.subr.mxu0 0.0
      %2140 = vmatpush1.msra.mxu0 0.0
      %2141 = vmatprep.subr.mxu0 0.0
      %2142 = vmatpush1.msra.mxu0 0.0
      %2143 = vmatprep.subr.mxu0 0.0
      %2144 = vmatpush1.msra.mxu0 0.0
      %2145 = vmatprep.subr.mxu0 0.0
      %2146 = vmatpush1.msra.mxu0 0.0
      %2147 = vmatprep.subr.mxu0 0.0
      %2148 = vmatpush1.msra.mxu0 0.0
      %2149 = vmatprep.subr.mxu0 0.0
      %2150 = vmatpush1.msra.mxu0 0.0
      %2151 = vmatprep.subr.mxu0 0.0
      %2152 = vmatpush1.msra.mxu0 0.0
      %2153 = vmatprep.subr.mxu0 0.0
      %2154 = vmatpush1.msra.mxu0 0.0
      %2155 = vmatprep.subr.mxu0 0.0
      %2156 = vmatpush1.msra.mxu0 0.0
      %2157 = vmatprep.subr.mxu0 0.0
      %2158 = vmatpush1.msra.mxu0 0.0
      %2159 = vmatprep.subr.mxu0 0.0
      %2160 = vmatpush1.msra.mxu0 0.0
      %2161 = vmatprep.subr.mxu0 0.0
      %2162 = vmatpush1.msra.mxu0 0.0
      %2163 = vmatprep.subr.mxu0 0.0
      %2164 = vmatpush1.msra.mxu0 0.0
      %2165 = vmatprep.subr.mxu0 0.0
      %2166 = vmatpush1.msra.mxu0 0.0
      %2167 = vmatprep.subr.mxu0 0.0
      %2168 = vmatpush1.msra.mxu0 0.0
      %2169 = vmatprep.subr.mxu0 0.0
      %2170 = vmatpush1.msra.mxu0 0.0
      %2171 = vmatprep.subr.mxu0 0.0
      %2172 = vmatpush1.msra.mxu0 0.0
      %2173 = vmatprep.subr.mxu0 0.0
      %2174 = vmatpush1.msra.mxu0 0.0
      %2175 = vmatprep.subr.mxu0 0.0
      %2176 = vmatpush1.msra.mxu0 0.0
      %2177 = vmatprep.subr.mxu0 0.0
      %2178 = vmatpush1.msra.mxu0 0.0
      %2179 = vmatprep.mubr.f32.mxu0 0.0
      %v2180 = vand.u32 %v2109, 4294901760
      %v2181 = vsub.f32 %v2109, %v2180
      %v2182 = vand.u32 %v2181, 4294901760
      %v2183 = vsub.f32 %v2181, %v2182
      %v2184 = vand.u32 %v2183, 4294901760
      %2185 = vmatmul.mubr.f32.gmra.mrb[0].mxu0 %v2184
      %v2186 = vpop.f32.mrb[0].mxu0
      %v2187 = vadd.f32 %v2103, %v2186
      %v2188 = vpop.f32.mrb[0].mxu0
      %2189 = vdwg.mxu0
      %2190 = vmatprep.subr.mxu0 0.0
      %v2191 = vand.u32 %v68, 4294901760
      %v2192 = vsub.f32 %v68, %v2191
      %v2193 = vand.u32 %v2192, 4294901760
      %v2194 = vsub.f32 %v2192, %v2193
      %v2195 = vand.u32 %v2194, 4294901760
      %2196 = vmatpush1.msra.mxu0 %v2195
      %2197 = vmatprep.subr.mxu0 0.0
      %v2198 = vand.u32 %v69, 4294901760
      %v2199 = vsub.f32 %v69, %v2198
      %v2200 = vand.u32 %v2199, 4294901760
      %v2201 = vsub.f32 %v2199, %v2200
      %v2202 = vand.u32 %v2201, 4294901760
      %2203 = vmatpush1.msra.mxu0 %v2202
      %2204 = vmatprep.subr.mxu0 0.0
      %v2205 = vand.u32 %v70, 4294901760
      %v2206 = vsub.f32 %v70, %v2205
      %v2207 = vand.u32 %v2206, 4294901760
      %v2208 = vsub.f32 %v2206, %v2207
      %v2209 = vand.u32 %v2208, 4294901760
      %2210 = vmatpush1.msra.mxu0 %v2209
      %2211 = vmatprep.subr.mxu0 0.0
      %v2212 = vand.u32 %v71, 4294901760
      %v2213 = vsub.f32 %v71, %v2212
      %v2214 = vand.u32 %v2213, 4294901760
      %v2215 = vsub.f32 %v2213, %v2214
      %v2216 = vand.u32 %v2215, 4294901760
      %2217 = vmatpush1.msra.mxu0 %v2216
      %2218 = vmatprep.subr.mxu0 0.0
      %2219 = vmatpush1.msra.mxu0 0.0
      %2220 = vmatprep.subr.mxu0 0.0
      %2221 = vmatpush1.msra.mxu0 0.0
      %2222 = vmatprep.subr.mxu0 0.0
      %2223 = vmatpush1.msra.mxu0 0.0
      %2224 = vmatprep.subr.mxu0 0.0
      %2225 = vmatpush1.msra.mxu0 0.0
      %2226 = vmatprep.subr.mxu0 0.0
      %2227 = vmatpush1.msra.mxu0 0.0
      %2228 = vmatprep.subr.mxu0 0.0
      %2229 = vmatpush1.msra.mxu0 0.0
      %2230 = vmatprep.subr.mxu0 0.0
      %2231 = vmatpush1.msra.mxu0 0.0
      %2232 = vmatprep.subr.mxu0 0.0
      %2233 = vmatpush1.msra.mxu0 0.0
      %2234 = vmatprep.subr.mxu0 0.0
      %2235 = vmatpush1.msra.mxu0 0.0
      %2236 = vmatprep.subr.mxu0 0.0
      %2237 = vmatpush1.msra.mxu0 0.0
      %2238 = vmatprep.subr.mxu0 0.0
      %2239 = vmatpush1.msra.mxu0 0.0
      %2240 = vmatprep.subr.mxu0 0.0
      %2241 = vmatpush1.msra.mxu0 0.0
      %2242 = vmatprep.subr.mxu0 0.0
      %2243 = vmatpush1.msra.mxu0 0.0
      %2244 = vmatprep.subr.mxu0 0.0
      %2245 = vmatpush1.msra.mxu0 0.0
      %2246 = vmatprep.subr.mxu0 0.0
      %2247 = vmatpush1.msra.mxu0 0.0
      %2248 = vmatprep.subr.mxu0 0.0
      %2249 = vmatpush1.msra.mxu0 0.0
      %2250 = vmatprep.subr.mxu0 0.0
      %2251 = vmatpush1.msra.mxu0 0.0
      %2252 = vmatprep.subr.mxu0 0.0
      %2253 = vmatpush1.msra.mxu0 0.0
      %2254 = vmatprep.subr.mxu0 0.0
      %2255 = vmatpush1.msra.mxu0 0.0
      %2256 = vmatprep.subr.mxu0 0.0
      %2257 = vmatpush1.msra.mxu0 0.0
      %2258 = vmatprep.subr.mxu0 0.0
      %2259 = vmatpush1.msra.mxu0 0.0
      %2260 = vmatprep.subr.mxu0 0.0
      %2261 = vmatpush1.msra.mxu0 0.0
      %2262 = vmatprep.subr.mxu0 0.0
      %2263 = vmatpush1.msra.mxu0 0.0
      %2264 = vmatprep.subr.mxu0 0.0
      %2265 = vmatpush1.msra.mxu0 0.0
      %2266 = vmatprep.subr.mxu0 0.0
      %2267 = vmatpush1.msra.mxu0 0.0
      %2268 = vmatprep.subr.mxu0 0.0
      %2269 = vmatpush1.msra.mxu0 0.0
      %2270 = vmatprep.subr.mxu0 0.0
      %2271 = vmatpush1.msra.mxu0 0.0
      %2272 = vmatprep.subr.mxu0 0.0
      %2273 = vmatpush1.msra.mxu0 0.0
      %2274 = vmatprep.mubr.f32.mxu0 0.0
      %v2275 = vand.u32 %v2109, 4294901760
      %2276 = vmatmul.mubr.f32.gmra.mrb[0].mxu0 %v2275
      %v2277 = vpop.f32.mrb[0].mxu0
      %v2278 = vadd.f32 %v2187, %v2277
      %v2279 = vpop.f32.mrb[0].mxu0
      %2280 = vdwg.mxu0
      %2281 = vmatprep.subr.mxu0 0.0
      %v2282 = vand.u32 %v68, 4294901760
      %v2283 = vsub.f32 %v68, %v2282
      %2284 = vmatpush1.msra.mxu0 %v2283
      %2285 = vmatprep.subr.mxu0 0.0
      %v2286 = vand.u32 %v69, 4294901760
      %v2287 = vsub.f32 %v69, %v2286
      %2288 = vmatpush1.msra.mxu0 %v2287
      %2289 = vmatprep.subr.mxu0 0.0
      %v2290 = vand.u32 %v70, 4294901760
      %v2291 = vsub.f32 %v70, %v2290
      %2292 = vmatpush1.msra.mxu0 %v2291
      %2293 = vmatprep.subr.mxu0 0.0
      %v2294 = vand.u32 %v71, 4294901760
      %v2295 = vsub.f32 %v71, %v2294
      %2296 = vmatpush1.msra.mxu0 %v2295
      %2297 = vmatprep.subr.mxu0 0.0
      %2298 = vmatpush1.msra.mxu0 0.0
      %2299 = vmatprep.subr.mxu0 0.0
      %2300 = vmatpush1.msra.mxu0 0.0
      %2301 = vmatprep.subr.mxu0 0.0
      %2302 = vmatpush1.msra.mxu0 0.0
      %2303 = vmatprep.subr.mxu0 0.0
      %2304 = vmatpush1.msra.mxu0 0.0
      %2305 = vmatprep.subr.mxu0 0.0
      %2306 = vmatpush1.msra.mxu0 0.0
      %2307 = vmatprep.subr.mxu0 0.0
      %2308 = vmatpush1.msra.mxu0 0.0
      %2309 = vmatprep.subr.mxu0 0.0
      %2310 = vmatpush1.msra.mxu0 0.0
      %2311 = vmatprep.subr.mxu0 0.0
      %2312 = vmatpush1.msra.mxu0 0.0
      %2313 = vmatprep.subr.mxu0 0.0
      %2314 = vmatpush1.msra.mxu0 0.0
      %2315 = vmatprep.subr.mxu0 0.0
      %2316 = vmatpush1.msra.mxu0 0.0
      %2317 = vmatprep.subr.mxu0 0.0
      %2318 = vmatpush1.msra.mxu0 0.0
      %2319 = vmatprep.subr.mxu0 0.0
      %2320 = vmatpush1.msra.mxu0 0.0
      %2321 = vmatprep.subr.mxu0 0.0
      %2322 = vmatpush1.msra.mxu0 0.0
      %2323 = vmatprep.subr.mxu0 0.0
      %2324 = vmatpush1.msra.mxu0 0.0
      %2325 = vmatprep.subr.mxu0 0.0
      %2326 = vmatpush1.msra.mxu0 0.0
      %2327 = vmatprep.subr.mxu0 0.0
      %2328 = vmatpush1.msra.mxu0 0.0
      %2329 = vmatprep.subr.mxu0 0.0
      %2330 = vmatpush1.msra.mxu0 0.0
      %2331 = vmatprep.subr.mxu0 0.0
      %2332 = vmatpush1.msra.mxu0 0.0
      %2333 = vmatprep.subr.mxu0 0.0
      %2334 = vmatpush1.msra.mxu0 0.0
      %2335 = vmatprep.subr.mxu0 0.0
      %2336 = vmatpush1.msra.mxu0 0.0
      %2337 = vmatprep.subr.mxu0 0.0
      %2338 = vmatpush1.msra.mxu0 0.0
      %2339 = vmatprep.subr.mxu0 0.0
      %2340 = vmatpush1.msra.mxu0 0.0
      %2341 = vmatprep.subr.mxu0 0.0
      %2342 = vmatpush1.msra.mxu0 0.0
      %2343 = vmatprep.subr.mxu0 0.0
      %2344 = vmatpush1.msra.mxu0 0.0
      %2345 = vmatprep.subr.mxu0 0.0
      %2346 = vmatpush1.msra.mxu0 0.0
      %2347 = vmatprep.subr.mxu0 0.0
      %2348 = vmatpush1.msra.mxu0 0.0
      %2349 = vmatprep.subr.mxu0 0.0
      %2350 = vmatpush1.msra.mxu0 0.0
      %2351 = vmatprep.subr.mxu0 0.0
      %2352 = vmatpush1.msra.mxu0 0.0
      %2353 = vmatprep.mubr.f32.mxu0 0.0
      %v2354 = vand.u32 %v2109, 4294901760
      %v2355 = vsub.f32 %v2109, %v2354
      %2356 = vmatmul.mubr.f32.gmra.mrb[0].mxu0 %v2355
      %v2357 = vpop.f32.mrb[0].mxu0
      %v2358 = vadd.f32 %v2278, %v2357
      %v2359 = vpop.f32.mrb[0].mxu0
      %2360 = vdwg.mxu0
      %2361 = vmatprep.subr.mxu0 0.0
      %v2362 = vand.u32 %v68, 4294901760
      %2363 = vmatpush1.msra.mxu0 %v2362
      %2364 = vmatprep.subr.mxu0 0.0
      %v2365 = vand.u32 %v69, 4294901760
      %2366 = vmatpush1.msra.mxu0 %v2365
      %2367 = vmatprep.subr.mxu0 0.0
      %v2368 = vand.u32 %v70, 4294901760
      %2369 = vmatpush1.msra.mxu0 %v2368
      %2370 = vmatprep.subr.mxu0 0.0
      %v2371 = vand.u32 %v71, 4294901760
      %2372 = vmatpush1.msra.mxu0 %v2371
      %2373 = vmatprep.subr.mxu0 0.0
      %2374 = vmatpush1.msra.mxu0 0.0
      %2375 = vmatprep.subr.mxu0 0.0
      %2376 = vmatpush1.msra.mxu0 0.0
      %2377 = vmatprep.subr.mxu0 0.0
      %2378 = vmatpush1.msra.mxu0 0.0
      %2379 = vmatprep.subr.mxu0 0.0
      %2380 = vmatpush1.msra.mxu0 0.0
      %2381 = vmatprep.subr.mxu0 0.0
      %2382 = vmatpush1.msra.mxu0 0.0
      %2383 = vmatprep.subr.mxu0 0.0
      %2384 = vmatpush1.msra.mxu0 0.0
      %2385 = vmatprep.subr.mxu0 0.0
      %2386 = vmatpush1.msra.mxu0 0.0
      %2387 = vmatprep.subr.mxu0 0.0
      %2388 = vmatpush1.msra.mxu0 0.0
      %2389 = vmatprep.subr.mxu0 0.0
      %2390 = vmatpush1.msra.mxu0 0.0
      %2391 = vmatprep.subr.mxu0 0.0
      %2392 = vmatpush1.msra.mxu0 0.0
      %2393 = vmatprep.subr.mxu0 0.0
      %2394 = vmatpush1.msra.mxu0 0.0
      %2395 = vmatprep.subr.mxu0 0.0
      %2396 = vmatpush1.msra.mxu0 0.0
      %2397 = vmatprep.subr.mxu0 0.0
      %2398 = vmatpush1.msra.mxu0 0.0
      %2399 = vmatprep.subr.mxu0 0.0
      %2400 = vmatpush1.msra.mxu0 0.0
      %2401 = vmatprep.subr.mxu0 0.0
      %2402 = vmatpush1.msra.mxu0 0.0
      %2403 = vmatprep.subr.mxu0 0.0
      %2404 = vmatpush1.msra.mxu0 0.0
      %2405 = vmatprep.subr.mxu0 0.0
      %2406 = vmatpush1.msra.mxu0 0.0
      %2407 = vmatprep.subr.mxu0 0.0
      %2408 = vmatpush1.msra.mxu0 0.0
      %2409 = vmatprep.subr.mxu0 0.0
      %2410 = vmatpush1.msra.mxu0 0.0
      %2411 = vmatprep.subr.mxu0 0.0
      %2412 = vmatpush1.msra.mxu0 0.0
      %2413 = vmatprep.subr.mxu0 0.0
      %2414 = vmatpush1.msra.mxu0 0.0
      %2415 = vmatprep.subr.mxu0 0.0
      %2416 = vmatpush1.msra.mxu0 0.0
      %2417 = vmatprep.subr.mxu0 0.0
      %2418 = vmatpush1.msra.mxu0 0.0
      %2419 = vmatprep.subr.mxu0 0.0
      %2420 = vmatpush1.msra.mxu0 0.0
      %2421 = vmatprep.subr.mxu0 0.0
      %2422 = vmatpush1.msra.mxu0 0.0
      %2423 = vmatprep.subr.mxu0 0.0
      %2424 = vmatpush1.msra.mxu0 0.0
      %2425 = vmatprep.subr.mxu0 0.0
      %2426 = vmatpush1.msra.mxu0 0.0
      %2427 = vmatprep.subr.mxu0 0.0
      %2428 = vmatpush1.msra.mxu0 0.0
      %2429 = vmatprep.mubr.f32.mxu0 0.0
      %v2430 = vand.u32 %v2109, 4294901760
      %v2431 = vsub.f32 %v2109, %v2430
      %v2432 = vand.u32 %v2431, 4294901760
      %2433 = vmatmul.mubr.f32.gmra.mrb[0].mxu0 %v2432
      %v2434 = vpop.f32.mrb[0].mxu0
      %v2435 = vadd.f32 %v2358, %v2434
      %v2436 = vpop.f32.mrb[0].mxu0
      %2437 = vdwg.mxu0
      %2438 = vmatprep.subr.mxu0 0.0
      %v2439 = vand.u32 %v68, 4294901760
      %v2440 = vsub.f32 %v68, %v2439
      %v2441 = vand.u32 %v2440, 4294901760
      %2442 = vmatpush1.msra.mxu0 %v2441
      %2443 = vmatprep.subr.mxu0 0.0
      %v2444 = vand.u32 %v69, 4294901760
      %v2445 = vsub.f32 %v69, %v2444
      %v2446 = vand.u32 %v2445, 4294901760
      %2447 = vmatpush1.msra.mxu0 %v2446
      %2448 = vmatprep.subr.mxu0 0.0
      %v2449 = vand.u32 %v70, 4294901760
      %v2450 = vsub.f32 %v70, %v2449
      %v2451 = vand.u32 %v2450, 4294901760
      %2452 = vmatpush1.msra.mxu0 %v2451
      %2453 = vmatprep.subr.mxu0 0.0
      %v2454 = vand.u32 %v71, 4294901760
      %v2455 = vsub.f32 %v71, %v2454
      %v2456 = vand.u32 %v2455, 4294901760
      %2457 = vmatpush1.msra.mxu0 %v2456
      %2458 = vmatprep.subr.mxu0 0.0
      %2459 = vmatpush1.msra.mxu0 0.0
      %2460 = vmatprep.subr.mxu0 0.0
      %2461 = vmatpush1.msra.mxu0 0.0
      %2462 = vmatprep.subr.mxu0 0.0
      %2463 = vmatpush1.msra.mxu0 0.0
      %2464 = vmatprep.subr.mxu0 0.0
      %2465 = vmatpush1.msra.mxu0 0.0
      %2466 = vmatprep.subr.mxu0 0.0
      %2467 = vmatpush1.msra.mxu0 0.0
      %2468 = vmatprep.subr.mxu0 0.0
      %2469 = vmatpush1.msra.mxu0 0.0
      %2470 = vmatprep.subr.mxu0 0.0
      %2471 = vmatpush1.msra.mxu0 0.0
      %2472 = vmatprep.subr.mxu0 0.0
      %2473 = vmatpush1.msra.mxu0 0.0
      %2474 = vmatprep.subr.mxu0 0.0
      %2475 = vmatpush1.msra.mxu0 0.0
      %2476 = vmatprep.subr.mxu0 0.0
      %2477 = vmatpush1.msra.mxu0 0.0
      %2478 = vmatprep.subr.mxu0 0.0
      %2479 = vmatpush1.msra.mxu0 0.0
      %2480 = vmatprep.subr.mxu0 0.0
      %2481 = vmatpush1.msra.mxu0 0.0
      %2482 = vmatprep.subr.mxu0 0.0
      %2483 = vmatpush1.msra.mxu0 0.0
      %2484 = vmatprep.subr.mxu0 0.0
      %2485 = vmatpush1.msra.mxu0 0.0
      %2486 = vmatprep.subr.mxu0 0.0
      %2487 = vmatpush1.msra.mxu0 0.0
      %2488 = vmatprep.subr.mxu0 0.0
      %2489 = vmatpush1.msra.mxu0 0.0
      %2490 = vmatprep.subr.mxu0 0.0
      %2491 = vmatpush1.msra.mxu0 0.0
      %2492 = vmatprep.subr.mxu0 0.0
      %2493 = vmatpush1.msra.mxu0 0.0
      %2494 = vmatprep.subr.mxu0 0.0
      %2495 = vmatpush1.msra.mxu0 0.0
      %2496 = vmatprep.subr.mxu0 0.0
      %2497 = vmatpush1.msra.mxu0 0.0
      %2498 = vmatprep.subr.mxu0 0.0
      %2499 = vmatpush1.msra.mxu0 0.0
      %2500 = vmatprep.subr.mxu0 0.0
      %2501 = vmatpush1.msra.mxu0 0.0
      %2502 = vmatprep.subr.mxu0 0.0
      %2503 = vmatpush1.msra.mxu0 0.0
      %2504 = vmatprep.subr.mxu0 0.0
      %2505 = vmatpush1.msra.mxu0 0.0
      %2506 = vmatprep.subr.mxu0 0.0
      %2507 = vmatpush1.msra.mxu0 0.0
      %2508 = vmatprep.subr.mxu0 0.0
      %2509 = vmatpush1.msra.mxu0 0.0
      %2510 = vmatprep.subr.mxu0 0.0
      %2511 = vmatpush1.msra.mxu0 0.0
      %2512 = vmatprep.subr.mxu0 0.0
      %2513 = vmatpush1.msra.mxu0 0.0
      %2514 = vmatprep.mubr.f32.mxu0 0.0
      %v2515 = vand.u32 %v2109, 4294901760
      %2516 = vmatmul.mubr.f32.gmra.mrb[0].mxu0 %v2515
      %v2517 = vpop.f32.mrb[0].mxu0
      %v2518 = vadd.f32 %v2435, %v2517
      %v2519 = vpop.f32.mrb[0].mxu0
      %2520 = vdwg.mxu0
      %2521 = vmatprep.subr.mxu0 0.0
      %v2522 = vand.u32 %v68, 4294901760
      %2523 = vmatpush1.msra.mxu0 %v2522
      %2524 = vmatprep.subr.mxu0 0.0
      %v2525 = vand.u32 %v69, 4294901760
      %2526 = vmatpush1.msra.mxu0 %v2525
      %2527 = vmatprep.subr.mxu0 0.0
      %v2528 = vand.u32 %v70, 4294901760
      %2529 = vmatpush1.msra.mxu0 %v2528
      %2530 = vmatprep.subr.mxu0 0.0
      %v2531 = vand.u32 %v71, 4294901760
      %2532 = vmatpush1.msra.mxu0 %v2531
      %2533 = vmatprep.subr.mxu0 0.0
      %2534 = vmatpush1.msra.mxu0 0.0
      %2535 = vmatprep.subr.mxu0 0.0
      %2536 = vmatpush1.msra.mxu0 0.0
      %2537 = vmatprep.subr.mxu0 0.0
      %2538 = vmatpush1.msra.mxu0 0.0
      %2539 = vmatprep.subr.mxu0 0.0
      %2540 = vmatpush1.msra.mxu0 0.0
      %2541 = vmatprep.subr.mxu0 0.0
      %2542 = vmatpush1.msra.mxu0 0.0
      %2543 = vmatprep.subr.mxu0 0.0
      %2544 = vmatpush1.msra.mxu0 0.0
      %2545 = vmatprep.subr.mxu0 0.0
      %2546 = vmatpush1.msra.mxu0 0.0
      %2547 = vmatprep.subr.mxu0 0.0
      %2548 = vmatpush1.msra.mxu0 0.0
      %2549 = vmatprep.subr.mxu0 0.0
      %2550 = vmatpush1.msra.mxu0 0.0
      %2551 = vmatprep.subr.mxu0 0.0
      %2552 = vmatpush1.msra.mxu0 0.0
      %2553 = vmatprep.subr.mxu0 0.0
      %2554 = vmatpush1.msra.mxu0 0.0
      %2555 = vmatprep.subr.mxu0 0.0
      %2556 = vmatpush1.msra.mxu0 0.0
      %2557 = vmatprep.subr.mxu0 0.0
      %2558 = vmatpush1.msra.mxu0 0.0
      %2559 = vmatprep.subr.mxu0 0.0
      %2560 = vmatpush1.msra.mxu0 0.0
      %2561 = vmatprep.subr.mxu0 0.0
      %2562 = vmatpush1.msra.mxu0 0.0
      %2563 = vmatprep.subr.mxu0 0.0
      %2564 = vmatpush1.msra.mxu0 0.0
      %2565 = vmatprep.subr.mxu0 0.0
      %2566 = vmatpush1.msra.mxu0 0.0
      %2567 = vmatprep.subr.mxu0 0.0
      %2568 = vmatpush1.msra.mxu0 0.0
      %2569 = vmatprep.subr.mxu0 0.0
      %2570 = vmatpush1.msra.mxu0 0.0
      %2571 = vmatprep.subr.mxu0 0.0
      %2572 = vmatpush1.msra.mxu0 0.0
      %2573 = vmatprep.subr.mxu0 0.0
      %2574 = vmatpush1.msra.mxu0 0.0
      %2575 = vmatprep.subr.mxu0 0.0
      %2576 = vmatpush1.msra.mxu0 0.0
      %2577 = vmatprep.subr.mxu0 0.0
      %2578 = vmatpush1.msra.mxu0 0.0
      %2579 = vmatprep.subr.mxu0 0.0
      %2580 = vmatpush1.msra.mxu0 0.0
      %2581 = vmatprep.subr.mxu0 0.0
      %2582 = vmatpush1.msra.mxu0 0.0
      %2583 = vmatprep.subr.mxu0 0.0
      %2584 = vmatpush1.msra.mxu0 0.0
      %2585 = vmatprep.subr.mxu0 0.0
      %2586 = vmatpush1.msra.mxu0 0.0
      %2587 = vmatprep.subr.mxu0 0.0
      %2588 = vmatpush1.msra.mxu0 0.0
      %2589 = vmatprep.mubr.f32.mxu0 0.0
      %v2590 = vand.u32 %v2109, 4294901760
      %2591 = vmatmul.mubr.f32.gmra.mrb[0].mxu0 %v2590
      %v2592 = vpop.f32.mrb[0].mxu0
      %v2593 = vadd.f32 %v2518, %v2592
      %v2594 = vpop.f32.mrb[0].mxu0
      %2595 = vdwg.mxu0
      %v2597 = vlaneseq
      %v2598 = vshrl.u32 %v2597, 7
      %v2599 = vsub.s32 0, %v2598
      %v2600 = vrot.slane %v76, %v2599
      %v2602 = vadd.f32 %v2593, %v2600
      %v2603 = vxor.u32 %v2602, 2147483648
      %v2604 = vmul.f32 %v2603, 1.442695
      %v2605 = vpow.pop %v2604
      %v2606 = vadd.f32 %v2605, 1.0
      %v2607 = vrcp.pop %v2606
      %v2608 = vmul.f32 1.0, %v2607
      %v2609 = vtanh.pop %v2602
      %v2610 = vmul.f32 %v2608, %v88
      %2612 = vrot.lane.b32.xlu0 %v2609, 64
      %v2613 = vpop.permute.xlu0 %2612
      %v2615 = vmul.f32 %v2608, %v2613
      %2617 = vrot.lane.b32.xlu0 %v2615, 32
      %v2618 = vpop.permute.xlu0 %2617
      %v2620 = vadd.f32 %v2610, %v2618
      %v2621 = vtanh.pop %v2620
      %2623 = vrot.lane.b32.xlu0 %v2621, 64
      %v2624 = vpop.permute.xlu0 %2623
      %v2626 = vmul.f32 %v2608, %v2624
      %s2627 = scalar_lea.vmem %s2, %s89
      %v2628 = vld [vmem:[%s2627] sm:$0x3]
      %2630 = vset.pattern.permute.xlu0 0
      %2631 = vperm.xlu0 %2630, %v2628
      %v2632 = vpop.permute.xlu0 %2631
      %v2634 = vmul.f32 %v2626, %v2632
      %2636 = vrot.lane.b32.xlu0 %v2634, 32
      %v2637 = vpop.permute.xlu0 %2636
      %s2639 = scalar_lea.vmem [#allocation2], %s89
      %vm2640 = vcmask 254976
      %2641 = vst.msk [vmem:[%s2639] sm:$0x3] %vm2640, %v2637
    $region70: #{ar_back_step_forward.1} parent=1 // loop_footer
      %s82 = sadd.s32 1, %s78
    $region71: #{ar_back_step_forward.1} parent=1 // loop_footer_branch
      %77 = sbr.rel target = $region67
    $region72: #{ar_back_step_forward.1} parent=1 // loop_exit
      _
    %v2642 = vld [vmem:[#allocation2] sm:$0xff]
    %v2643 = vld [vmem:[#allocation2 + $0x8] sm:$0xff]
    %v2644 = vld [vmem:[%s10] sm:$0xff]
    %v2645 = vld [vmem:[%s10 + $0x8] sm:$0xff]
    %v2646 = vld [vmem:[%s10 + $0x10] sm:$0xff]
    %v2647 = vld [vmem:[%s10 + $0x18] sm:$0xff]
    %v2648 = vld [vmem:[%s11] sm:$0x1]
    %v2650 = vlaneseq
    %v2651 = vshrl.u32 %v2650, 7
    %v2652 = vsub.s32 0, %v2651
    %v2653 = vrot.slane %v2648, %v2652
    %vm2655 = vcmask 261120
    %v2657 = vsel %vm2655, %v2642, 0
    %v2660 = vsel %vm2655, %v2643, 0
    %2662 = vmatprep.subr.mxu0 0.0
    %v2663 = vand.u32 %v2644, 4294901760
    %2664 = vmatpush1.msra.mxu0 %v2663
    %2665 = vmatprep.subr.mxu0 0.0
    %v2666 = vand.u32 %v2645, 4294901760
    %2667 = vmatpush1.msra.mxu0 %v2666
    %2668 = vmatprep.subr.mxu0 0.0
    %v2669 = vand.u32 %v2646, 4294901760
    %2670 = vmatpush1.msra.mxu0 %v2669
    %2671 = vmatprep.subr.mxu0 0.0
    %v2672 = vand.u32 %v2647, 4294901760
    %2673 = vmatpush1.msra.mxu0 %v2672
    %2674 = vmatprep.subr.mxu0 0.0
    %2675 = vmatpush1.msra.mxu0 0.0
    %2676 = vmatprep.subr.mxu0 0.0
    %2677 = vmatpush1.msra.mxu0 0.0
    %2678 = vmatprep.subr.mxu0 0.0
    %2679 = vmatpush1.msra.mxu0 0.0
    %2680 = vmatprep.subr.mxu0 0.0
    %2681 = vmatpush1.msra.mxu0 0.0
    %2682 = vmatprep.subr.mxu0 0.0
    %2683 = vmatpush1.msra.mxu0 0.0
    %2684 = vmatprep.subr.mxu0 0.0
    %2685 = vmatpush1.msra.mxu0 0.0
    %2686 = vmatprep.subr.mxu0 0.0
    %2687 = vmatpush1.msra.mxu0 0.0
    %2688 = vmatprep.subr.mxu0 0.0
    %2689 = vmatpush1.msra.mxu0 0.0
    %2690 = vmatprep.subr.mxu0 0.0
    %2691 = vmatpush1.msra.mxu0 0.0
    %2692 = vmatprep.subr.mxu0 0.0
    %2693 = vmatpush1.msra.mxu0 0.0
    %2694 = vmatprep.subr.mxu0 0.0
    %2695 = vmatpush1.msra.mxu0 0.0
    %2696 = vmatprep.subr.mxu0 0.0
    %2697 = vmatpush1.msra.mxu0 0.0
    %2698 = vmatprep.subr.mxu0 0.0
    %2699 = vmatpush1.msra.mxu0 0.0
    %2700 = vmatprep.subr.mxu0 0.0
    %2701 = vmatpush1.msra.mxu0 0.0
    %2702 = vmatprep.subr.mxu0 0.0
    %2703 = vmatpush1.msra.mxu0 0.0
    %2704 = vmatprep.subr.mxu0 0.0
    %2705 = vmatpush1.msra.mxu0 0.0
    %2706 = vmatprep.subr.mxu0 0.0
    %2707 = vmatpush1.msra.mxu0 0.0
    %2708 = vmatprep.subr.mxu0 0.0
    %2709 = vmatpush1.msra.mxu0 0.0
    %2710 = vmatprep.subr.mxu0 0.0
    %2711 = vmatpush1.msra.mxu0 0.0
    %2712 = vmatprep.subr.mxu0 0.0
    %2713 = vmatpush1.msra.mxu0 0.0
    %2714 = vmatprep.subr.mxu0 0.0
    %2715 = vmatpush1.msra.mxu0 0.0
    %2716 = vmatprep.subr.mxu0 0.0
    %2717 = vmatpush1.msra.mxu0 0.0
    %2718 = vmatprep.subr.mxu0 0.0
    %2719 = vmatpush1.msra.mxu0 0.0
    %2720 = vmatprep.subr.mxu0 0.0
    %2721 = vmatpush1.msra.mxu0 0.0
    %2722 = vmatprep.subr.mxu0 0.0
    %2723 = vmatpush1.msra.mxu0 0.0
    %2724 = vmatprep.subr.mxu0 0.0
    %2725 = vmatpush1.msra.mxu0 0.0
    %2726 = vmatprep.subr.mxu0 0.0
    %2727 = vmatpush1.msra.mxu0 0.0
    %2728 = vmatprep.subr.mxu0 0.0
    %2729 = vmatpush1.msra.mxu0 0.0
    %2730 = vmatprep.mubr.f32.mxu0 0.0
    %v2731 = vand.u32 %v2657, 4294901760
    %v2732 = vsub.f32 %v2657, %v2731
    %v2733 = vand.u32 %v2732, 4294901760
    %v2734 = vsub.f32 %v2732, %v2733
    %v2735 = vand.u32 %v2734, 4294901760
    %2736 = vmatmul.mubr.f32.gmra.mrb[0].mxu0 %v2735
    %v2737 = vpop.f32.mrb[0].mxu0
    %v2738 = vadd.f32 %v2653, %v2737
    %v2739 = vpop.f32.mrb[0].mxu0
    %2740 = vmatprep.mubr.f32.mxu0 0.0
    %v2741 = vand.u32 %v2660, 4294901760
    %v2742 = vsub.f32 %v2660, %v2741
    %v2743 = vand.u32 %v2742, 4294901760
    %v2744 = vsub.f32 %v2742, %v2743
    %v2745 = vand.u32 %v2744, 4294901760
    %2746 = vmatmul.mubr.f32.gmra.mrb[0].mxu0 %v2745
    %v2747 = vpop.f32.mrb[0].mxu0
    %v2748 = vadd.f32 %v2653, %v2747
    %v2749 = vpop.f32.mrb[0].mxu0
    %2750 = vdwg.mxu0
    %2751 = vmatprep.subr.mxu0 0.0
    %v2752 = vand.u32 %v2644, 4294901760
    %v2753 = vsub.f32 %v2644, %v2752
    %v2754 = vand.u32 %v2753, 4294901760
    %v2755 = vsub.f32 %v2753, %v2754
    %v2756 = vand.u32 %v2755, 4294901760
    %2757 = vmatpush1.msra.mxu0 %v2756
    %2758 = vmatprep.subr.mxu0 0.0
    %v2759 = vand.u32 %v2645, 4294901760
    %v2760 = vsub.f32 %v2645, %v2759
    %v2761 = vand.u32 %v2760, 4294901760
    %v2762 = vsub.f32 %v2760, %v2761
    %v2763 = vand.u32 %v2762, 4294901760
    %2764 = vmatpush1.msra.mxu0 %v2763
    %2765 = vmatprep.subr.mxu0 0.0
    %v2766 = vand.u32 %v2646, 4294901760
    %v2767 = vsub.f32 %v2646, %v2766
    %v2768 = vand.u32 %v2767, 4294901760
    %v2769 = vsub.f32 %v2767, %v2768
    %v2770 = vand.u32 %v2769, 4294901760
    %2771 = vmatpush1.msra.mxu0 %v2770
    %2772 = vmatprep.subr.mxu0 0.0
    %v2773 = vand.u32 %v2647, 4294901760
    %v2774 = vsub.f32 %v2647, %v2773
    %v2775 = vand.u32 %v2774, 4294901760
    %v2776 = vsub.f32 %v2774, %v2775
    %v2777 = vand.u32 %v2776, 4294901760
    %2778 = vmatpush1.msra.mxu0 %v2777
    %2779 = vmatprep.subr.mxu0 0.0
    %2780 = vmatpush1.msra.mxu0 0.0
    %2781 = vmatprep.subr.mxu0 0.0
    %2782 = vmatpush1.msra.mxu0 0.0
    %2783 = vmatprep.subr.mxu0 0.0
    %2784 = vmatpush1.msra.mxu0 0.0
    %2785 = vmatprep.subr.mxu0 0.0
    %2786 = vmatpush1.msra.mxu0 0.0
    %2787 = vmatprep.subr.mxu0 0.0
    %2788 = vmatpush1.msra.mxu0 0.0
    %2789 = vmatprep.subr.mxu0 0.0
    %2790 = vmatpush1.msra.mxu0 0.0
    %2791 = vmatprep.subr.mxu0 0.0
    %2792 = vmatpush1.msra.mxu0 0.0
    %2793 = vmatprep.subr.mxu0 0.0
    %2794 = vmatpush1.msra.mxu0 0.0
    %2795 = vmatprep.subr.mxu0 0.0
    %2796 = vmatpush1.msra.mxu0 0.0
    %2797 = vmatprep.subr.mxu0 0.0
    %2798 = vmatpush1.msra.mxu0 0.0
    %2799 = vmatprep.subr.mxu0 0.0
    %2800 = vmatpush1.msra.mxu0 0.0
    %2801 = vmatprep.subr.mxu0 0.0
    %2802 = vmatpush1.msra.mxu0 0.0
    %2803 = vmatprep.subr.mxu0 0.0
    %2804 = vmatpush1.msra.mxu0 0.0
    %2805 = vmatprep.subr.mxu0 0.0
    %2806 = vmatpush1.msra.mxu0 0.0
    %2807 = vmatprep.subr.mxu0 0.0
    %2808 = vmatpush1.msra.mxu0 0.0
    %2809 = vmatprep.subr.mxu0 0.0
    %2810 = vmatpush1.msra.mxu0 0.0
    %2811 = vmatprep.subr.mxu0 0.0
    %2812 = vmatpush1.msra.mxu0 0.0
    %2813 = vmatprep.subr.mxu0 0.0
    %2814 = vmatpush1.msra.mxu0 0.0
    %2815 = vmatprep.subr.mxu0 0.0
    %2816 = vmatpush1.msra.mxu0 0.0
    %2817 = vmatprep.subr.mxu0 0.0
    %2818 = vmatpush1.msra.mxu0 0.0
    %2819 = vmatprep.subr.mxu0 0.0
    %2820 = vmatpush1.msra.mxu0 0.0
    %2821 = vmatprep.subr.mxu0 0.0
    %2822 = vmatpush1.msra.mxu0 0.0
    %2823 = vmatprep.subr.mxu0 0.0
    %2824 = vmatpush1.msra.mxu0 0.0
    %2825 = vmatprep.subr.mxu0 0.0
    %2826 = vmatpush1.msra.mxu0 0.0
    %2827 = vmatprep.subr.mxu0 0.0
    %2828 = vmatpush1.msra.mxu0 0.0
    %2829 = vmatprep.subr.mxu0 0.0
    %2830 = vmatpush1.msra.mxu0 0.0
    %2831 = vmatprep.subr.mxu0 0.0
    %2832 = vmatpush1.msra.mxu0 0.0
    %2833 = vmatprep.subr.mxu0 0.0
    %2834 = vmatpush1.msra.mxu0 0.0
    %2835 = vmatprep.mubr.f32.mxu0 0.0
    %v2836 = vand.u32 %v2657, 4294901760
    %2837 = vmatmul.mubr.f32.gmra.mrb[0].mxu0 %v2836
    %v2838 = vpop.f32.mrb[0].mxu0
    %v2839 = vadd.f32 %v2738, %v2838
    %v2840 = vpop.f32.mrb[0].mxu0
    %2841 = vmatprep.mubr.f32.mxu0 0.0
    %v2842 = vand.u32 %v2660, 4294901760
    %2843 = vmatmul.mubr.f32.gmra.mrb[0].mxu0 %v2842
    %v2844 = vpop.f32.mrb[0].mxu0
    %v2845 = vadd.f32 %v2748, %v2844
    %v2846 = vpop.f32.mrb[0].mxu0
    %2847 = vdwg.mxu0
    %2848 = vmatprep.subr.mxu0 0.0
    %v2849 = vand.u32 %v2644, 4294901760
    %v2850 = vsub.f32 %v2644, %v2849
    %2851 = vmatpush1.msra.mxu0 %v2850
    %2852 = vmatprep.subr.mxu0 0.0
    %v2853 = vand.u32 %v2645, 4294901760
    %v2854 = vsub.f32 %v2645, %v2853
    %2855 = vmatpush1.msra.mxu0 %v2854
    %2856 = vmatprep.subr.mxu0 0.0
    %v2857 = vand.u32 %v2646, 4294901760
    %v2858 = vsub.f32 %v2646, %v2857
    %2859 = vmatpush1.msra.mxu0 %v2858
    %2860 = vmatprep.subr.mxu0 0.0
    %v2861 = vand.u32 %v2647, 4294901760
    %v2862 = vsub.f32 %v2647, %v2861
    %2863 = vmatpush1.msra.mxu0 %v2862
    %2864 = vmatprep.subr.mxu0 0.0
    %2865 = vmatpush1.msra.mxu0 0.0
    %2866 = vmatprep.subr.mxu0 0.0
    %2867 = vmatpush1.msra.mxu0 0.0
    %2868 = vmatprep.subr.mxu0 0.0
    %2869 = vmatpush1.msra.mxu0 0.0
    %2870 = vmatprep.subr.mxu0 0.0
    %2871 = vmatpush1.msra.mxu0 0.0
    %2872 = vmatprep.subr.mxu0 0.0
    %2873 = vmatpush1.msra.mxu0 0.0
    %2874 = vmatprep.subr.mxu0 0.0
    %2875 = vmatpush1.msra.mxu0 0.0
    %2876 = vmatprep.subr.mxu0 0.0
    %2877 = vmatpush1.msra.mxu0 0.0
    %2878 = vmatprep.subr.mxu0 0.0
    %2879 = vmatpush1.msra.mxu0 0.0
    %2880 = vmatprep.subr.mxu0 0.0
    %2881 = vmatpush1.msra.mxu0 0.0
    %2882 = vmatprep.subr.mxu0 0.0
    %2883 = vmatpush1.msra.mxu0 0.0
    %2884 = vmatprep.subr.mxu0 0.0
    %2885 = vmatpush1.msra.mxu0 0.0
    %2886 = vmatprep.subr.mxu0 0.0
    %2887 = vmatpush1.msra.mxu0 0.0
    %2888 = vmatprep.subr.mxu0 0.0
    %2889 = vmatpush1.msra.mxu0 0.0
    %2890 = vmatprep.subr.mxu0 0.0
    %2891 = vmatpush1.msra.mxu0 0.0
    %2892 = vmatprep.subr.mxu0 0.0
    %2893 = vmatpush1.msra.mxu0 0.0
    %2894 = vmatprep.subr.mxu0 0.0
    %2895 = vmatpush1.msra.mxu0 0.0
    %2896 = vmatprep.subr.mxu0 0.0
    %2897 = vmatpush1.msra.mxu0 0.0
    %2898 = vmatprep.subr.mxu0 0.0
    %2899 = vmatpush1.msra.mxu0 0.0
    %2900 = vmatprep.subr.mxu0 0.0
    %2901 = vmatpush1.msra.mxu0 0.0
    %2902 = vmatprep.subr.mxu0 0.0
    %2903 = vmatpush1.msra.mxu0 0.0
    %2904 = vmatprep.subr.mxu0 0.0
    %2905 = vmatpush1.msra.mxu0 0.0
    %2906 = vmatprep.subr.mxu0 0.0
    %2907 = vmatpush1.msra.mxu0 0.0
    %2908 = vmatprep.subr.mxu0 0.0
    %2909 = vmatpush1.msra.mxu0 0.0
    %2910 = vmatprep.subr.mxu0 0.0
    %2911 = vmatpush1.msra.mxu0 0.0
    %2912 = vmatprep.subr.mxu0 0.0
    %2913 = vmatpush1.msra.mxu0 0.0
    %2914 = vmatprep.subr.mxu0 0.0
    %2915 = vmatpush1.msra.mxu0 0.0
    %2916 = vmatprep.subr.mxu0 0.0
    %2917 = vmatpush1.msra.mxu0 0.0
    %2918 = vmatprep.subr.mxu0 0.0
    %2919 = vmatpush1.msra.mxu0 0.0
    %2920 = vmatprep.mubr.f32.mxu0 0.0
    %v2921 = vand.u32 %v2657, 4294901760
    %v2922 = vsub.f32 %v2657, %v2921
    %2923 = vmatmul.mubr.f32.gmra.mrb[0].mxu0 %v2922
    %v2924 = vpop.f32.mrb[0].mxu0
    %v2925 = vadd.f32 %v2839, %v2924
    %v2926 = vpop.f32.mrb[0].mxu0
    %2927 = vmatprep.mubr.f32.mxu0 0.0
    %v2928 = vand.u32 %v2660, 4294901760
    %v2929 = vsub.f32 %v2660, %v2928
    %2930 = vmatmul.mubr.f32.gmra.mrb[0].mxu0 %v2929
    %v2931 = vpop.f32.mrb[0].mxu0
    %v2932 = vadd.f32 %v2845, %v2931
    %v2933 = vpop.f32.mrb[0].mxu0
    %2934 = vdwg.mxu0
    %2935 = vmatprep.subr.mxu0 0.0
    %v2936 = vand.u32 %v2644, 4294901760
    %2937 = vmatpush1.msra.mxu0 %v2936
    %2938 = vmatprep.subr.mxu0 0.0
    %v2939 = vand.u32 %v2645, 4294901760
    %2940 = vmatpush1.msra.mxu0 %v2939
    %2941 = vmatprep.subr.mxu0 0.0
    %v2942 = vand.u32 %v2646, 4294901760
    %2943 = vmatpush1.msra.mxu0 %v2942
    %2944 = vmatprep.subr.mxu0 0.0
    %v2945 = vand.u32 %v2647, 4294901760
    %2946 = vmatpush1.msra.mxu0 %v2945
    %2947 = vmatprep.subr.mxu0 0.0
    %2948 = vmatpush1.msra.mxu0 0.0
    %2949 = vmatprep.subr.mxu0 0.0
    %2950 = vmatpush1.msra.mxu0 0.0
    %2951 = vmatprep.subr.mxu0 0.0
    %2952 = vmatpush1.msra.mxu0 0.0
    %2953 = vmatprep.subr.mxu0 0.0
    %2954 = vmatpush1.msra.mxu0 0.0
    %2955 = vmatprep.subr.mxu0 0.0
    %2956 = vmatpush1.msra.mxu0 0.0
    %2957 = vmatprep.subr.mxu0 0.0
    %2958 = vmatpush1.msra.mxu0 0.0
    %2959 = vmatprep.subr.mxu0 0.0
    %2960 = vmatpush1.msra.mxu0 0.0
    %2961 = vmatprep.subr.mxu0 0.0
    %2962 = vmatpush1.msra.mxu0 0.0
    %2963 = vmatprep.subr.mxu0 0.0
    %2964 = vmatpush1.msra.mxu0 0.0
    %2965 = vmatprep.subr.mxu0 0.0
    %2966 = vmatpush1.msra.mxu0 0.0
    %2967 = vmatprep.subr.mxu0 0.0
    %2968 = vmatpush1.msra.mxu0 0.0
    %2969 = vmatprep.subr.mxu0 0.0
    %2970 = vmatpush1.msra.mxu0 0.0
    %2971 = vmatprep.subr.mxu0 0.0
    %2972 = vmatpush1.msra.mxu0 0.0
    %2973 = vmatprep.subr.mxu0 0.0
    %2974 = vmatpush1.msra.mxu0 0.0
    %2975 = vmatprep.subr.mxu0 0.0
    %2976 = vmatpush1.msra.mxu0 0.0
    %2977 = vmatprep.subr.mxu0 0.0
    %2978 = vmatpush1.msra.mxu0 0.0
    %2979 = vmatprep.subr.mxu0 0.0
    %2980 = vmatpush1.msra.mxu0 0.0
    %2981 = vmatprep.subr.mxu0 0.0
    %2982 = vmatpush1.msra.mxu0 0.0
    %2983 = vmatprep.subr.mxu0 0.0
    %2984 = vmatpush1.msra.mxu0 0.0
    %2985 = vmatprep.subr.mxu0 0.0
    %2986 = vmatpush1.msra.mxu0 0.0
    %2987 = vmatprep.subr.mxu0 0.0
    %2988 = vmatpush1.msra.mxu0 0.0
    %2989 = vmatprep.subr.mxu0 0.0
    %2990 = vmatpush1.msra.mxu0 0.0
    %2991 = vmatprep.subr.mxu0 0.0
    %2992 = vmatpush1.msra.mxu0 0.0
    %2993 = vmatprep.subr.mxu0 0.0
    %2994 = vmatpush1.msra.mxu0 0.0
    %2995 = vmatprep.subr.mxu0 0.0
    %2996 = vmatpush1.msra.mxu0 0.0
    %2997 = vmatprep.subr.mxu0 0.0
    %2998 = vmatpush1.msra.mxu0 0.0
    %2999 = vmatprep.subr.mxu0 0.0
    %3000 = vmatpush1.msra.mxu0 0.0
    %3001 = vmatprep.subr.mxu0 0.0
    %3002 = vmatpush1.msra.mxu0 0.0
    %3003 = vmatprep.mubr.f32.mxu0 0.0
    %v3004 = vand.u32 %v2657, 4294901760
    %v3005 = vsub.f32 %v2657, %v3004
    %v3006 = vand.u32 %v3005, 4294901760
    %3007 = vmatmul.mubr.f32.gmra.mrb[0].mxu0 %v3006
    %v3008 = vpop.f32.mrb[0].mxu0
    %v3009 = vadd.f32 %v2925, %v3008
    %v3010 = vpop.f32.mrb[0].mxu0
    %3011 = vmatprep.mubr.f32.mxu0 0.0
    %v3012 = vand.u32 %v2660, 4294901760
    %v3013 = vsub.f32 %v2660, %v3012
    %v3014 = vand.u32 %v3013, 4294901760
    %3015 = vmatmul.mubr.f32.gmra.mrb[0].mxu0 %v3014
    %v3016 = vpop.f32.mrb[0].mxu0
    %v3017 = vadd.f32 %v2932, %v3016
    %v3018 = vpop.f32.mrb[0].mxu0
    %3019 = vdwg.mxu0
    %3020 = vmatprep.subr.mxu0 0.0
    %v3021 = vand.u32 %v2644, 4294901760
    %v3022 = vsub.f32 %v2644, %v3021
    %v3023 = vand.u32 %v3022, 4294901760
    %3024 = vmatpush1.msra.mxu0 %v3023
    %3025 = vmatprep.subr.mxu0 0.0
    %v3026 = vand.u32 %v2645, 4294901760
    %v3027 = vsub.f32 %v2645, %v3026
    %v3028 = vand.u32 %v3027, 4294901760
    %3029 = vmatpush1.msra.mxu0 %v3028
    %3030 = vmatprep.subr.mxu0 0.0
    %v3031 = vand.u32 %v2646, 4294901760
    %v3032 = vsub.f32 %v2646, %v3031
    %v3033 = vand.u32 %v3032, 4294901760
    %3034 = vmatpush1.msra.mxu0 %v3033
    %3035 = vmatprep.subr.mxu0 0.0
    %v3036 = vand.u32 %v2647, 4294901760
    %v3037 = vsub.f32 %v2647, %v3036
    %v3038 = vand.u32 %v3037, 4294901760
    %3039 = vmatpush1.msra.mxu0 %v3038
    %3040 = vmatprep.subr.mxu0 0.0
    %3041 = vmatpush1.msra.mxu0 0.0
    %3042 = vmatprep.subr.mxu0 0.0
    %3043 = vmatpush1.msra.mxu0 0.0
    %3044 = vmatprep.subr.mxu0 0.0
    %3045 = vmatpush1.msra.mxu0 0.0
    %3046 = vmatprep.subr.mxu0 0.0
    %3047 = vmatpush1.msra.mxu0 0.0
    %3048 = vmatprep.subr.mxu0 0.0
    %3049 = vmatpush1.msra.mxu0 0.0
    %3050 = vmatprep.subr.mxu0 0.0
    %3051 = vmatpush1.msra.mxu0 0.0
    %3052 = vmatprep.subr.mxu0 0.0
    %3053 = vmatpush1.msra.mxu0 0.0
    %3054 = vmatprep.subr.mxu0 0.0
    %3055 = vmatpush1.msra.mxu0 0.0
    %3056 = vmatprep.subr.mxu0 0.0
    %3057 = vmatpush1.msra.mxu0 0.0
    %3058 = vmatprep.subr.mxu0 0.0
    %3059 = vmatpush1.msra.mxu0 0.0
    %3060 = vmatprep.subr.mxu0 0.0
    %3061 = vmatpush1.msra.mxu0 0.0
    %3062 = vmatprep.subr.mxu0 0.0
    %3063 = vmatpush1.msra.mxu0 0.0
    %3064 = vmatprep.subr.mxu0 0.0
    %3065 = vmatpush1.msra.mxu0 0.0
    %3066 = vmatprep.subr.mxu0 0.0
    %3067 = vmatpush1.msra.mxu0 0.0
    %3068 = vmatprep.subr.mxu0 0.0
    %3069 = vmatpush1.msra.mxu0 0.0
    %3070 = vmatprep.subr.mxu0 0.0
    %3071 = vmatpush1.msra.mxu0 0.0
    %3072 = vmatprep.subr.mxu0 0.0
    %3073 = vmatpush1.msra.mxu0 0.0
    %3074 = vmatprep.subr.mxu0 0.0
    %3075 = vmatpush1.msra.mxu0 0.0
    %3076 = vmatprep.subr.mxu0 0.0
    %3077 = vmatpush1.msra.mxu0 0.0
    %3078 = vmatprep.subr.mxu0 0.0
    %3079 = vmatpush1.msra.mxu0 0.0
    %3080 = vmatprep.subr.mxu0 0.0
    %3081 = vmatpush1.msra.mxu0 0.0
    %3082 = vmatprep.subr.mxu0 0.0
    %3083 = vmatpush1.msra.mxu0 0.0
    %3084 = vmatprep.subr.mxu0 0.0
    %3085 = vmatpush1.msra.mxu0 0.0
    %3086 = vmatprep.subr.mxu0 0.0
    %3087 = vmatpush1.msra.mxu0 0.0
    %3088 = vmatprep.subr.mxu0 0.0
    %3089 = vmatpush1.msra.mxu0 0.0
    %3090 = vmatprep.subr.mxu0 0.0
    %3091 = vmatpush1.msra.mxu0 0.0
    %3092 = vmatprep.subr.mxu0 0.0
    %3093 = vmatpush1.msra.mxu0 0.0
    %3094 = vmatprep.subr.mxu0 0.0
    %3095 = vmatpush1.msra.mxu0 0.0
    %3096 = vmatprep.mubr.f32.mxu0 0.0
    %v3097 = vand.u32 %v2657, 4294901760
    %3098 = vmatmul.mubr.f32.gmra.mrb[0].mxu0 %v3097
    %v3099 = vpop.f32.mrb[0].mxu0
    %v3100 = vadd.f32 %v3009, %v3099
    %v3101 = vpop.f32.mrb[0].mxu0
    %3102 = vmatprep.mubr.f32.mxu0 0.0
    %v3103 = vand.u32 %v2660, 4294901760
    %3104 = vmatmul.mubr.f32.gmra.mrb[0].mxu0 %v3103
    %v3105 = vpop.f32.mrb[0].mxu0
    %v3106 = vadd.f32 %v3017, %v3105
    %v3107 = vpop.f32.mrb[0].mxu0
    %3108 = vdwg.mxu0
    %3109 = vmatprep.subr.mxu0 0.0
    %v3110 = vand.u32 %v2644, 4294901760
    %3111 = vmatpush1.msra.mxu0 %v3110
    %3112 = vmatprep.subr.mxu0 0.0
    %v3113 = vand.u32 %v2645, 4294901760
    %3114 = vmatpush1.msra.mxu0 %v3113
    %3115 = vmatprep.subr.mxu0 0.0
    %v3116 = vand.u32 %v2646, 4294901760
    %3117 = vmatpush1.msra.mxu0 %v3116
    %3118 = vmatprep.subr.mxu0 0.0
    %v3119 = vand.u32 %v2647, 4294901760
    %3120 = vmatpush1.msra.mxu0 %v3119
    %3121 = vmatprep.subr.mxu0 0.0
    %3122 = vmatpush1.msra.mxu0 0.0
    %3123 = vmatprep.subr.mxu0 0.0
    %3124 = vmatpush1.msra.mxu0 0.0
    %3125 = vmatprep.subr.mxu0 0.0
    %3126 = vmatpush1.msra.mxu0 0.0
    %3127 = vmatprep.subr.mxu0 0.0
    %3128 = vmatpush1.msra.mxu0 0.0
    %3129 = vmatprep.subr.mxu0 0.0
    %3130 = vmatpush1.msra.mxu0 0.0
    %3131 = vmatprep.subr.mxu0 0.0
    %3132 = vmatpush1.msra.mxu0 0.0
    %3133 = vmatprep.subr.mxu0 0.0
    %3134 = vmatpush1.msra.mxu0 0.0
    %3135 = vmatprep.subr.mxu0 0.0
    %3136 = vmatpush1.msra.mxu0 0.0
    %3137 = vmatprep.subr.mxu0 0.0
    %3138 = vmatpush1.msra.mxu0 0.0
    %3139 = vmatprep.subr.mxu0 0.0
    %3140 = vmatpush1.msra.mxu0 0.0
    %3141 = vmatprep.subr.mxu0 0.0
    %3142 = vmatpush1.msra.mxu0 0.0
    %3143 = vmatprep.subr.mxu0 0.0
    %3144 = vmatpush1.msra.mxu0 0.0
    %3145 = vmatprep.subr.mxu0 0.0
    %3146 = vmatpush1.msra.mxu0 0.0
    %3147 = vmatprep.subr.mxu0 0.0
    %3148 = vmatpush1.msra.mxu0 0.0
    %3149 = vmatprep.subr.mxu0 0.0
    %3150 = vmatpush1.msra.mxu0 0.0
    %3151 = vmatprep.subr.mxu0 0.0
    %3152 = vmatpush1.msra.mxu0 0.0
    %3153 = vmatprep.subr.mxu0 0.0
    %3154 = vmatpush1.msra.mxu0 0.0
    %3155 = vmatprep.subr.mxu0 0.0
    %3156 = vmatpush1.msra.mxu0 0.0
    %3157 = vmatprep.subr.mxu0 0.0
    %3158 = vmatpush1.msra.mxu0 0.0
    %3159 = vmatprep.subr.mxu0 0.0
    %3160 = vmatpush1.msra.mxu0 0.0
    %3161 = vmatprep.subr.mxu0 0.0
    %3162 = vmatpush1.msra.mxu0 0.0
    %3163 = vmatprep.subr.mxu0 0.0
    %3164 = vmatpush1.msra.mxu0 0.0
    %3165 = vmatprep.subr.mxu0 0.0
    %3166 = vmatpush1.msra.mxu0 0.0
    %3167 = vmatprep.subr.mxu0 0.0
    %3168 = vmatpush1.msra.mxu0 0.0
    %3169 = vmatprep.subr.mxu0 0.0
    %3170 = vmatpush1.msra.mxu0 0.0
    %3171 = vmatprep.subr.mxu0 0.0
    %3172 = vmatpush1.msra.mxu0 0.0
    %3173 = vmatprep.subr.mxu0 0.0
    %3174 = vmatpush1.msra.mxu0 0.0
    %3175 = vmatprep.subr.mxu0 0.0
    %3176 = vmatpush1.msra.mxu0 0.0
    %3177 = vmatprep.mubr.f32.mxu0 0.0
    %v3178 = vand.u32 %v2657, 4294901760
    %3179 = vmatmul.mubr.f32.gmra.mrb[0].mxu0 %v3178
    %v3180 = vpop.f32.mrb[0].mxu0
    %v3181 = vadd.f32 %v3100, %v3180
    %v3182 = vpop.f32.mrb[0].mxu0
    %3183 = vmatprep.mubr.f32.mxu0 0.0
    %v3184 = vand.u32 %v2660, 4294901760
    %3185 = vmatmul.mubr.f32.gmra.mrb[0].mxu0 %v3184
    %v3186 = vpop.f32.mrb[0].mxu0
    %v3187 = vadd.f32 %v3106, %v3186
    %v3188 = vpop.f32.mrb[0].mxu0
    %3189 = vdwg.mxu0
    %v3190 = vtanh.pop %v3181
    %v3191 = vtanh.pop %v3187
    %v3192 = vld [vmem:[%s12] sm:$0xff]
    %v3193 = vld [vmem:[%s12 + $0x8] sm:$0xff]
    %v3194 = vld [vmem:[%s12 + $0x10] sm:$0xff]
    %v3195 = vld [vmem:[%s12 + $0x18] sm:$0xff]
    %v3196 = vld [vmem:[%s13] sm:$0x1]
    %v3198 = vlaneseq
    %v3199 = vshrl.u32 %v3198, 7
    %v3200 = vsub.s32 0, %v3199
    %v3201 = vrot.slane %v3196, %v3200
    %v3204 = vsel %vm2655, %v3190, 0
    %v3207 = vsel %vm2655, %v3191, 0
    %3209 = vmatprep.subr.mxu0 0.0
    %v3210 = vand.u32 %v3192, 4294901760
    %3211 = vmatpush1.msra.mxu0 %v3210
    %3212 = vmatprep.subr.mxu0 0.0
    %v3213 = vand.u32 %v3193, 4294901760
    %3214 = vmatpush1.msra.mxu0 %v3213
    %3215 = vmatprep.subr.mxu0 0.0
    %v3216 = vand.u32 %v3194, 4294901760
    %3217 = vmatpush1.msra.mxu0 %v3216
    %3218 = vmatprep.subr.mxu0 0.0
    %v3219 = vand.u32 %v3195, 4294901760
    %3220 = vmatpush1.msra.mxu0 %v3219
    %3221 = vmatprep.subr.mxu0 0.0
    %3222 = vmatpush1.msra.mxu0 0.0
    %3223 = vmatprep.subr.mxu0 0.0
    %3224 = vmatpush1.msra.mxu0 0.0
    %3225 = vmatprep.subr.mxu0 0.0
    %3226 = vmatpush1.msra.mxu0 0.0
    %3227 = vmatprep.subr.mxu0 0.0
    %3228 = vmatpush1.msra.mxu0 0.0
    %3229 = vmatprep.subr.mxu0 0.0
    %3230 = vmatpush1.msra.mxu0 0.0
    %3231 = vmatprep.subr.mxu0 0.0
    %3232 = vmatpush1.msra.mxu0 0.0
    %3233 = vmatprep.subr.mxu0 0.0
    %3234 = vmatpush1.msra.mxu0 0.0
    %3235 = vmatprep.subr.mxu0 0.0
    %3236 = vmatpush1.msra.mxu0 0.0
    %3237 = vmatprep.subr.mxu0 0.0
    %3238 = vmatpush1.msra.mxu0 0.0
    %3239 = vmatprep.subr.mxu0 0.0
    %3240 = vmatpush1.msra.mxu0 0.0
    %3241 = vmatprep.subr.mxu0 0.0
    %3242 = vmatpush1.msra.mxu0 0.0
    %3243 = vmatprep.subr.mxu0 0.0
    %3244 = vmatpush1.msra.mxu0 0.0
    %3245 = vmatprep.subr.mxu0 0.0
    %3246 = vmatpush1.msra.mxu0 0.0
    %3247 = vmatprep.subr.mxu0 0.0
    %3248 = vmatpush1.msra.mxu0 0.0
    %3249 = vmatprep.subr.mxu0 0.0
    %3250 = vmatpush1.msra.mxu0 0.0
    %3251 = vmatprep.subr.mxu0 0.0
    %3252 = vmatpush1.msra.mxu0 0.0
    %3253 = vmatprep.subr.mxu0 0.0
    %3254 = vmatpush1.msra.mxu0 0.0
    %3255 = vmatprep.subr.mxu0 0.0
    %3256 = vmatpush1.msra.mxu0 0.0
    %3257 = vmatprep.subr.mxu0 0.0
    %3258 = vmatpush1.msra.mxu0 0.0
    %3259 = vmatprep.subr.mxu0 0.0
    %3260 = vmatpush1.msra.mxu0 0.0
    %3261 = vmatprep.subr.mxu0 0.0
    %3262 = vmatpush1.msra.mxu0 0.0
    %3263 = vmatprep.subr.mxu0 0.0
    %3264 = vmatpush1.msra.mxu0 0.0
    %3265 = vmatprep.subr.mxu0 0.0
    %3266 = vmatpush1.msra.mxu0 0.0
    %3267 = vmatprep.subr.mxu0 0.0
    %3268 = vmatpush1.msra.mxu0 0.0
    %3269 = vmatprep.subr.mxu0 0.0
    %3270 = vmatpush1.msra.mxu0 0.0
    %3271 = vmatprep.subr.mxu0 0.0
    %3272 = vmatpush1.msra.mxu0 0.0
    %3273 = vmatprep.subr.mxu0 0.0
    %3274 = vmatpush1.msra.mxu0 0.0
    %3275 = vmatprep.subr.mxu0 0.0
    %3276 = vmatpush1.msra.mxu0 0.0
    %3277 = vmatprep.mubr.f32.mxu0 0.0
    %v3278 = vand.u32 %v3204, 4294901760
    %v3279 = vsub.f32 %v3204, %v3278
    %v3280 = vand.u32 %v3279, 4294901760
    %v3281 = vsub.f32 %v3279, %v3280
    %v3282 = vand.u32 %v3281, 4294901760
    %3283 = vmatmul.mubr.f32.gmra.mrb[0].mxu0 %v3282
    %v3284 = vpop.f32.mrb[0].mxu0
    %v3285 = vadd.f32 %v3201, %v3284
    %v3286 = vpop.f32.mrb[0].mxu0
    %3287 = vmatprep.mubr.f32.mxu0 0.0
    %v3288 = vand.u32 %v3207, 4294901760
    %v3289 = vsub.f32 %v3207, %v3288
    %v3290 = vand.u32 %v3289, 4294901760
    %v3291 = vsub.f32 %v3289, %v3290
    %v3292 = vand.u32 %v3291, 4294901760
    %3293 = vmatmul.mubr.f32.gmra.mrb[0].mxu0 %v3292
    %v3294 = vpop.f32.mrb[0].mxu0
    %v3295 = vadd.f32 %v3201, %v3294
    %v3296 = vpop.f32.mrb[0].mxu0
    %3297 = vdwg.mxu0
    %3298 = vmatprep.subr.mxu0 0.0
    %v3299 = vand.u32 %v3192, 4294901760
    %v3300 = vsub.f32 %v3192, %v3299
    %v3301 = vand.u32 %v3300, 4294901760
    %v3302 = vsub.f32 %v3300, %v3301
    %v3303 = vand.u32 %v3302, 4294901760
    %3304 = vmatpush1.msra.mxu0 %v3303
    %3305 = vmatprep.subr.mxu0 0.0
    %v3306 = vand.u32 %v3193, 4294901760
    %v3307 = vsub.f32 %v3193, %v3306
    %v3308 = vand.u32 %v3307, 4294901760
    %v3309 = vsub.f32 %v3307, %v3308
    %v3310 = vand.u32 %v3309, 4294901760
    %3311 = vmatpush1.msra.mxu0 %v3310
    %3312 = vmatprep.subr.mxu0 0.0
    %v3313 = vand.u32 %v3194, 4294901760
    %v3314 = vsub.f32 %v3194, %v3313
    %v3315 = vand.u32 %v3314, 4294901760
    %v3316 = vsub.f32 %v3314, %v3315
    %v3317 = vand.u32 %v3316, 4294901760
    %3318 = vmatpush1.msra.mxu0 %v3317
    %3319 = vmatprep.subr.mxu0 0.0
    %v3320 = vand.u32 %v3195, 4294901760
    %v3321 = vsub.f32 %v3195, %v3320
    %v3322 = vand.u32 %v3321, 4294901760
    %v3323 = vsub.f32 %v3321, %v3322
    %v3324 = vand.u32 %v3323, 4294901760
    %3325 = vmatpush1.msra.mxu0 %v3324
    %3326 = vmatprep.subr.mxu0 0.0
    %3327 = vmatpush1.msra.mxu0 0.0
    %3328 = vmatprep.subr.mxu0 0.0
    %3329 = vmatpush1.msra.mxu0 0.0
    %3330 = vmatprep.subr.mxu0 0.0
    %3331 = vmatpush1.msra.mxu0 0.0
    %3332 = vmatprep.subr.mxu0 0.0
    %3333 = vmatpush1.msra.mxu0 0.0
    %3334 = vmatprep.subr.mxu0 0.0
    %3335 = vmatpush1.msra.mxu0 0.0
    %3336 = vmatprep.subr.mxu0 0.0
    %3337 = vmatpush1.msra.mxu0 0.0
    %3338 = vmatprep.subr.mxu0 0.0
    %3339 = vmatpush1.msra.mxu0 0.0
    %3340 = vmatprep.subr.mxu0 0.0
    %3341 = vmatpush1.msra.mxu0 0.0
    %3342 = vmatprep.subr.mxu0 0.0
    %3343 = vmatpush1.msra.mxu0 0.0
    %3344 = vmatprep.subr.mxu0 0.0
    %3345 = vmatpush1.msra.mxu0 0.0
    %3346 = vmatprep.subr.mxu0 0.0
    %3347 = vmatpush1.msra.mxu0 0.0
    %3348 = vmatprep.subr.mxu0 0.0
    %3349 = vmatpush1.msra.mxu0 0.0
    %3350 = vmatprep.subr.mxu0 0.0
    %3351 = vmatpush1.msra.mxu0 0.0
    %3352 = vmatprep.subr.mxu0 0.0
    %3353 = vmatpush1.msra.mxu0 0.0
    %3354 = vmatprep.subr.mxu0 0.0
    %3355 = vmatpush1.msra.mxu0 0.0
    %3356 = vmatprep.subr.mxu0 0.0
    %3357 = vmatpush1.msra.mxu0 0.0
    %3358 = vmatprep.subr.mxu0 0.0
    %3359 = vmatpush1.msra.mxu0 0.0
    %3360 = vmatprep.subr.mxu0 0.0
    %3361 = vmatpush1.msra.mxu0 0.0
    %3362 = vmatprep.subr.mxu0 0.0
    %3363 = vmatpush1.msra.mxu0 0.0
    %3364 = vmatprep.subr.mxu0 0.0
    %3365 = vmatpush1.msra.mxu0 0.0
    %3366 = vmatprep.subr.mxu0 0.0
    %3367 = vmatpush1.msra.mxu0 0.0
    %3368 = vmatprep.subr.mxu0 0.0
    %3369 = vmatpush1.msra.mxu0 0.0
    %3370 = vmatprep.subr.mxu0 0.0
    %3371 = vmatpush1.msra.mxu0 0.0
    %3372 = vmatprep.subr.mxu0 0.0
    %3373 = vmatpush1.msra.mxu0 0.0
    %3374 = vmatprep.subr.mxu0 0.0
    %3375 = vmatpush1.msra.mxu0 0.0
    %3376 = vmatprep.subr.mxu0 0.0
    %3377 = vmatpush1.msra.mxu0 0.0
    %3378 = vmatprep.subr.mxu0 0.0
    %3379 = vmatpush1.msra.mxu0 0.0
    %3380 = vmatprep.subr.mxu0 0.0
    %3381 = vmatpush1.msra.mxu0 0.0
    %3382 = vmatprep.mubr.f32.mxu0 0.0
    %v3383 = vand.u32 %v3204, 4294901760
    %3384 = vmatmul.mubr.f32.gmra.mrb[0].mxu0 %v3383
    %v3385 = vpop.f32.mrb[0].mxu0
    %v3386 = vadd.f32 %v3285, %v3385
    %v3387 = vpop.f32.mrb[0].mxu0
    %3388 = vmatprep.mubr.f32.mxu0 0.0
    %v3389 = vand.u32 %v3207, 4294901760
    %3390 = vmatmul.mubr.f32.gmra.mrb[0].mxu0 %v3389
    %v3391 = vpop.f32.mrb[0].mxu0
    %v3392 = vadd.f32 %v3295, %v3391
    %v3393 = vpop.f32.mrb[0].mxu0
    %3394 = vdwg.mxu0
    %3395 = vmatprep.subr.mxu0 0.0
    %v3396 = vand.u32 %v3192, 4294901760
    %v3397 = vsub.f32 %v3192, %v3396
    %3398 = vmatpush1.msra.mxu0 %v3397
    %3399 = vmatprep.subr.mxu0 0.0
    %v3400 = vand.u32 %v3193, 4294901760
    %v3401 = vsub.f32 %v3193, %v3400
    %3402 = vmatpush1.msra.mxu0 %v3401
    %3403 = vmatprep.subr.mxu0 0.0
    %v3404 = vand.u32 %v3194, 4294901760
    %v3405 = vsub.f32 %v3194, %v3404
    %3406 = vmatpush1.msra.mxu0 %v3405
    %3407 = vmatprep.subr.mxu0 0.0
    %v3408 = vand.u32 %v3195, 4294901760
    %v3409 = vsub.f32 %v3195, %v3408
    %3410 = vmatpush1.msra.mxu0 %v3409
    %3411 = vmatprep.subr.mxu0 0.0
    %3412 = vmatpush1.msra.mxu0 0.0
    %3413 = vmatprep.subr.mxu0 0.0
    %3414 = vmatpush1.msra.mxu0 0.0
    %3415 = vmatprep.subr.mxu0 0.0
    %3416 = vmatpush1.msra.mxu0 0.0
    %3417 = vmatprep.subr.mxu0 0.0
    %3418 = vmatpush1.msra.mxu0 0.0
    %3419 = vmatprep.subr.mxu0 0.0
    %3420 = vmatpush1.msra.mxu0 0.0
    %3421 = vmatprep.subr.mxu0 0.0
    %3422 = vmatpush1.msra.mxu0 0.0
    %3423 = vmatprep.subr.mxu0 0.0
    %3424 = vmatpush1.msra.mxu0 0.0
    %3425 = vmatprep.subr.mxu0 0.0
    %3426 = vmatpush1.msra.mxu0 0.0
    %3427 = vmatprep.subr.mxu0 0.0
    %3428 = vmatpush1.msra.mxu0 0.0
    %3429 = vmatprep.subr.mxu0 0.0
    %3430 = vmatpush1.msra.mxu0 0.0
    %3431 = vmatprep.subr.mxu0 0.0
    %3432 = vmatpush1.msra.mxu0 0.0
    %3433 = vmatprep.subr.mxu0 0.0
    %3434 = vmatpush1.msra.mxu0 0.0
    %3435 = vmatprep.subr.mxu0 0.0
    %3436 = vmatpush1.msra.mxu0 0.0
    %3437 = vmatprep.subr.mxu0 0.0
    %3438 = vmatpush1.msra.mxu0 0.0
    %3439 = vmatprep.subr.mxu0 0.0
    %3440 = vmatpush1.msra.mxu0 0.0
    %3441 = vmatprep.subr.mxu0 0.0
    %3442 = vmatpush1.msra.mxu0 0.0
    %3443 = vmatprep.subr.mxu0 0.0
    %3444 = vmatpush1.msra.mxu0 0.0
    %3445 = vmatprep.subr.mxu0 0.0
    %3446 = vmatpush1.msra.mxu0 0.0
    %3447 = vmatprep.subr.mxu0 0.0
    %3448 = vmatpush1.msra.mxu0 0.0
    %3449 = vmatprep.subr.mxu0 0.0
    %3450 = vmatpush1.msra.mxu0 0.0
    %3451 = vmatprep.subr.mxu0 0.0
    %3452 = vmatpush1.msra.mxu0 0.0
    %3453 = vmatprep.subr.mxu0 0.0
    %3454 = vmatpush1.msra.mxu0 0.0
    %3455 = vmatprep.subr.mxu0 0.0
    %3456 = vmatpush1.msra.mxu0 0.0
    %3457 = vmatprep.subr.mxu0 0.0
    %3458 = vmatpush1.msra.mxu0 0.0
    %3459 = vmatprep.subr.mxu0 0.0
    %3460 = vmatpush1.msra.mxu0 0.0
    %3461 = vmatprep.subr.mxu0 0.0
    %3462 = vmatpush1.msra.mxu0 0.0
    %3463 = vmatprep.subr.mxu0 0.0
    %3464 = vmatpush1.msra.mxu0 0.0
    %3465 = vmatprep.subr.mxu0 0.0
    %3466 = vmatpush1.msra.mxu0 0.0
    %3467 = vmatprep.mubr.f32.mxu0 0.0
    %v3468 = vand.u32 %v3204, 4294901760
    %v3469 = vsub.f32 %v3204, %v3468
    %3470 = vmatmul.mubr.f32.gmra.mrb[0].mxu0 %v3469
    %v3471 = vpop.f32.mrb[0].mxu0
    %v3472 = vadd.f32 %v3386, %v3471
    %v3473 = vpop.f32.mrb[0].mxu0
    %3474 = vmatprep.mubr.f32.mxu0 0.0
    %v3475 = vand.u32 %v3207, 4294901760
    %v3476 = vsub.f32 %v3207, %v3475
    %3477 = vmatmul.mubr.f32.gmra.mrb[0].mxu0 %v3476
    %v3478 = vpop.f32.mrb[0].mxu0
    %v3479 = vadd.f32 %v3392, %v3478
    %v3480 = vpop.f32.mrb[0].mxu0
    %3481 = vdwg.mxu0
    %3482 = vmatprep.subr.mxu0 0.0
    %v3483 = vand.u32 %v3192, 4294901760
    %3484 = vmatpush1.msra.mxu0 %v3483
    %3485 = vmatprep.subr.mxu0 0.0
    %v3486 = vand.u32 %v3193, 4294901760
    %3487 = vmatpush1.msra.mxu0 %v3486
    %3488 = vmatprep.subr.mxu0 0.0
    %v3489 = vand.u32 %v3194, 4294901760
    %3490 = vmatpush1.msra.mxu0 %v3489
    %3491 = vmatprep.subr.mxu0 0.0
    %v3492 = vand.u32 %v3195, 4294901760
    %3493 = vmatpush1.msra.mxu0 %v3492
    %3494 = vmatprep.subr.mxu0 0.0
    %3495 = vmatpush1.msra.mxu0 0.0
    %3496 = vmatprep.subr.mxu0 0.0
    %3497 = vmatpush1.msra.mxu0 0.0
    %3498 = vmatprep.subr.mxu0 0.0
    %3499 = vmatpush1.msra.mxu0 0.0
    %3500 = vmatprep.subr.mxu0 0.0
    %3501 = vmatpush1.msra.mxu0 0.0
    %3502 = vmatprep.subr.mxu0 0.0
    %3503 = vmatpush1.msra.mxu0 0.0
    %3504 = vmatprep.subr.mxu0 0.0
    %3505 = vmatpush1.msra.mxu0 0.0
    %3506 = vmatprep.subr.mxu0 0.0
    %3507 = vmatpush1.msra.mxu0 0.0
    %3508 = vmatprep.subr.mxu0 0.0
    %3509 = vmatpush1.msra.mxu0 0.0
    %3510 = vmatprep.subr.mxu0 0.0
    %3511 = vmatpush1.msra.mxu0 0.0
    %3512 = vmatprep.subr.mxu0 0.0
    %3513 = vmatpush1.msra.mxu0 0.0
    %3514 = vmatprep.subr.mxu0 0.0
    %3515 = vmatpush1.msra.mxu0 0.0
    %3516 = vmatprep.subr.mxu0 0.0
    %3517 = vmatpush1.msra.mxu0 0.0
    %3518 = vmatprep.subr.mxu0 0.0
    %3519 = vmatpush1.msra.mxu0 0.0
    %3520 = vmatprep.subr.mxu0 0.0
    %3521 = vmatpush1.msra.mxu0 0.0
    %3522 = vmatprep.subr.mxu0 0.0
    %3523 = vmatpush1.msra.mxu0 0.0
    %3524 = vmatprep.subr.mxu0 0.0
    %3525 = vmatpush1.msra.mxu0 0.0
    %3526 = vmatprep.subr.mxu0 0.0
    %3527 = vmatpush1.msra.mxu0 0.0
    %3528 = vmatprep.subr.mxu0 0.0
    %3529 = vmatpush1.msra.mxu0 0.0
    %3530 = vmatprep.subr.mxu0 0.0
    %3531 = vmatpush1.msra.mxu0 0.0
    %3532 = vmatprep.subr.mxu0 0.0
    %3533 = vmatpush1.msra.mxu0 0.0
    %3534 = vmatprep.subr.mxu0 0.0
    %3535 = vmatpush1.msra.mxu0 0.0
    %3536 = vmatprep.subr.mxu0 0.0
    %3537 = vmatpush1.msra.mxu0 0.0
    %3538 = vmatprep.subr.mxu0 0.0
    %3539 = vmatpush1.msra.mxu0 0.0
    %3540 = vmatprep.subr.mxu0 0.0
    %3541 = vmatpush1.msra.mxu0 0.0
    %3542 = vmatprep.subr.mxu0 0.0
    %3543 = vmatpush1.msra.mxu0 0.0
    %3544 = vmatprep.subr.mxu0 0.0
    %3545 = vmatpush1.msra.mxu0 0.0
    %3546 = vmatprep.subr.mxu0 0.0
    %3547 = vmatpush1.msra.mxu0 0.0
    %3548 = vmatprep.subr.mxu0 0.0
    %3549 = vmatpush1.msra.mxu0 0.0
    %3550 = vmatprep.mubr.f32.mxu0 0.0
    %v3551 = vand.u32 %v3204, 4294901760
    %v3552 = vsub.f32 %v3204, %v3551
    %v3553 = vand.u32 %v3552, 4294901760
    %3554 = vmatmul.mubr.f32.gmra.mrb[0].mxu0 %v3553
    %v3555 = vpop.f32.mrb[0].mxu0
    %v3556 = vadd.f32 %v3472, %v3555
    %v3557 = vpop.f32.mrb[0].mxu0
    %3558 = vmatprep.mubr.f32.mxu0 0.0
    %v3559 = vand.u32 %v3207, 4294901760
    %v3560 = vsub.f32 %v3207, %v3559
    %v3561 = vand.u32 %v3560, 4294901760
    %3562 = vmatmul.mubr.f32.gmra.mrb[0].mxu0 %v3561
    %v3563 = vpop.f32.mrb[0].mxu0
    %v3564 = vadd.f32 %v3479, %v3563
    %v3565 = vpop.f32.mrb[0].mxu0
    %3566 = vdwg.mxu0
    %3567 = vmatprep.subr.mxu0 0.0
    %v3568 = vand.u32 %v3192, 4294901760
    %v3569 = vsub.f32 %v3192, %v3568
    %v3570 = vand.u32 %v3569, 4294901760
    %3571 = vmatpush1.msra.mxu0 %v3570
    %3572 = vmatprep.subr.mxu0 0.0
    %v3573 = vand.u32 %v3193, 4294901760
    %v3574 = vsub.f32 %v3193, %v3573
    %v3575 = vand.u32 %v3574, 4294901760
    %3576 = vmatpush1.msra.mxu0 %v3575
    %3577 = vmatprep.subr.mxu0 0.0
    %v3578 = vand.u32 %v3194, 4294901760
    %v3579 = vsub.f32 %v3194, %v3578
    %v3580 = vand.u32 %v3579, 4294901760
    %3581 = vmatpush1.msra.mxu0 %v3580
    %3582 = vmatprep.subr.mxu0 0.0
    %v3583 = vand.u32 %v3195, 4294901760
    %v3584 = vsub.f32 %v3195, %v3583
    %v3585 = vand.u32 %v3584, 4294901760
    %3586 = vmatpush1.msra.mxu0 %v3585
    %3587 = vmatprep.subr.mxu0 0.0
    %3588 = vmatpush1.msra.mxu0 0.0
    %3589 = vmatprep.subr.mxu0 0.0
    %3590 = vmatpush1.msra.mxu0 0.0
    %3591 = vmatprep.subr.mxu0 0.0
    %3592 = vmatpush1.msra.mxu0 0.0
    %3593 = vmatprep.subr.mxu0 0.0
    %3594 = vmatpush1.msra.mxu0 0.0
    %3595 = vmatprep.subr.mxu0 0.0
    %3596 = vmatpush1.msra.mxu0 0.0
    %3597 = vmatprep.subr.mxu0 0.0
    %3598 = vmatpush1.msra.mxu0 0.0
    %3599 = vmatprep.subr.mxu0 0.0
    %3600 = vmatpush1.msra.mxu0 0.0
    %3601 = vmatprep.subr.mxu0 0.0
    %3602 = vmatpush1.msra.mxu0 0.0
    %3603 = vmatprep.subr.mxu0 0.0
    %3604 = vmatpush1.msra.mxu0 0.0
    %3605 = vmatprep.subr.mxu0 0.0
    %3606 = vmatpush1.msra.mxu0 0.0
    %3607 = vmatprep.subr.mxu0 0.0
    %3608 = vmatpush1.msra.mxu0 0.0
    %3609 = vmatprep.subr.mxu0 0.0
    %3610 = vmatpush1.msra.mxu0 0.0
    %3611 = vmatprep.subr.mxu0 0.0
    %3612 = vmatpush1.msra.mxu0 0.0
    %3613 = vmatprep.subr.mxu0 0.0
    %3614 = vmatpush1.msra.mxu0 0.0
    %3615 = vmatprep.subr.mxu0 0.0
    %3616 = vmatpush1.msra.mxu0 0.0
    %3617 = vmatprep.subr.mxu0 0.0
    %3618 = vmatpush1.msra.mxu0 0.0
    %3619 = vmatprep.subr.mxu0 0.0
    %3620 = vmatpush1.msra.mxu0 0.0
    %3621 = vmatprep.subr.mxu0 0.0
    %3622 = vmatpush1.msra.mxu0 0.0
    %3623 = vmatprep.subr.mxu0 0.0
    %3624 = vmatpush1.msra.mxu0 0.0
    %3625 = vmatprep.subr.mxu0 0.0
    %3626 = vmatpush1.msra.mxu0 0.0
    %3627 = vmatprep.subr.mxu0 0.0
    %3628 = vmatpush1.msra.mxu0 0.0
    %3629 = vmatprep.subr.mxu0 0.0
    %3630 = vmatpush1.msra.mxu0 0.0
    %3631 = vmatprep.subr.mxu0 0.0
    %3632 = vmatpush1.msra.mxu0 0.0
    %3633 = vmatprep.subr.mxu0 0.0
    %3634 = vmatpush1.msra.mxu0 0.0
    %3635 = vmatprep.subr.mxu0 0.0
    %3636 = vmatpush1.msra.mxu0 0.0
    %3637 = vmatprep.subr.mxu0 0.0
    %3638 = vmatpush1.msra.mxu0 0.0
    %3639 = vmatprep.subr.mxu0 0.0
    %3640 = vmatpush1.msra.mxu0 0.0
    %3641 = vmatprep.subr.mxu0 0.0
    %3642 = vmatpush1.msra.mxu0 0.0
    %3643 = vmatprep.mubr.f32.mxu0 0.0
    %v3644 = vand.u32 %v3204, 4294901760
    %3645 = vmatmul.mubr.f32.gmra.mrb[0].mxu0 %v3644
    %v3646 = vpop.f32.mrb[0].mxu0
    %v3647 = vadd.f32 %v3556, %v3646
    %v3648 = vpop.f32.mrb[0].mxu0
    %3649 = vmatprep.mubr.f32.mxu0 0.0
    %v3650 = vand.u32 %v3207, 4294901760
    %3651 = vmatmul.mubr.f32.gmra.mrb[0].mxu0 %v3650
    %v3652 = vpop.f32.mrb[0].mxu0
    %v3653 = vadd.f32 %v3564, %v3652
    %v3654 = vpop.f32.mrb[0].mxu0
    %3655 = vdwg.mxu0
    %3656 = vmatprep.subr.mxu0 0.0
    %v3657 = vand.u32 %v3192, 4294901760
    %3658 = vmatpush1.msra.mxu0 %v3657
    %3659 = vmatprep.subr.mxu0 0.0
    %v3660 = vand.u32 %v3193, 4294901760
    %3661 = vmatpush1.msra.mxu0 %v3660
    %3662 = vmatprep.subr.mxu0 0.0
    %v3663 = vand.u32 %v3194, 4294901760
    %3664 = vmatpush1.msra.mxu0 %v3663
    %3665 = vmatprep.subr.mxu0 0.0
    %v3666 = vand.u32 %v3195, 4294901760
    %3667 = vmatpush1.msra.mxu0 %v3666
    %3668 = vmatprep.subr.mxu0 0.0
    %3669 = vmatpush1.msra.mxu0 0.0
    %3670 = vmatprep.subr.mxu0 0.0
    %3671 = vmatpush1.msra.mxu0 0.0
    %3672 = vmatprep.subr.mxu0 0.0
    %3673 = vmatpush1.msra.mxu0 0.0
    %3674 = vmatprep.subr.mxu0 0.0
    %3675 = vmatpush1.msra.mxu0 0.0
    %3676 = vmatprep.subr.mxu0 0.0
    %3677 = vmatpush1.msra.mxu0 0.0
    %3678 = vmatprep.subr.mxu0 0.0
    %3679 = vmatpush1.msra.mxu0 0.0
    %3680 = vmatprep.subr.mxu0 0.0
    %3681 = vmatpush1.msra.mxu0 0.0
    %3682 = vmatprep.subr.mxu0 0.0
    %3683 = vmatpush1.msra.mxu0 0.0
    %3684 = vmatprep.subr.mxu0 0.0
    %3685 = vmatpush1.msra.mxu0 0.0
    %3686 = vmatprep.subr.mxu0 0.0
    %3687 = vmatpush1.msra.mxu0 0.0
    %3688 = vmatprep.subr.mxu0 0.0
    %3689 = vmatpush1.msra.mxu0 0.0
    %3690 = vmatprep.subr.mxu0 0.0
    %3691 = vmatpush1.msra.mxu0 0.0
    %3692 = vmatprep.subr.mxu0 0.0
    %3693 = vmatpush1.msra.mxu0 0.0
    %3694 = vmatprep.subr.mxu0 0.0
    %3695 = vmatpush1.msra.mxu0 0.0
    %3696 = vmatprep.subr.mxu0 0.0
    %3697 = vmatpush1.msra.mxu0 0.0
    %3698 = vmatprep.subr.mxu0 0.0
    %3699 = vmatpush1.msra.mxu0 0.0
    %3700 = vmatprep.subr.mxu0 0.0
    %3701 = vmatpush1.msra.mxu0 0.0
    %3702 = vmatprep.subr.mxu0 0.0
    %3703 = vmatpush1.msra.mxu0 0.0
    %3704 = vmatprep.subr.mxu0 0.0
    %3705 = vmatpush1.msra.mxu0 0.0
    %3706 = vmatprep.subr.mxu0 0.0
    %3707 = vmatpush1.msra.mxu0 0.0
    %3708 = vmatprep.subr.mxu0 0.0
    %3709 = vmatpush1.msra.mxu0 0.0
    %3710 = vmatprep.subr.mxu0 0.0
    %3711 = vmatpush1.msra.mxu0 0.0
    %3712 = vmatprep.subr.mxu0 0.0
    %3713 = vmatpush1.msra.mxu0 0.0
    %3714 = vmatprep.subr.mxu0 0.0
    %3715 = vmatpush1.msra.mxu0 0.0
    %3716 = vmatprep.subr.mxu0 0.0
    %3717 = vmatpush1.msra.mxu0 0.0
    %3718 = vmatprep.subr.mxu0 0.0
    %3719 = vmatpush1.msra.mxu0 0.0
    %3720 = vmatprep.subr.mxu0 0.0
    %3721 = vmatpush1.msra.mxu0 0.0
    %3722 = vmatprep.subr.mxu0 0.0
    %3723 = vmatpush1.msra.mxu0 0.0
    %3724 = vmatprep.mubr.f32.mxu0 0.0
    %v3725 = vand.u32 %v3204, 4294901760
    %3726 = vmatmul.mubr.f32.gmra.mrb[0].mxu0 %v3725
    %v3727 = vpop.f32.mrb[0].mxu0
    %v3728 = vadd.f32 %v3647, %v3727
    %v3729 = vpop.f32.mrb[0].mxu0
    %3730 = vmatprep.mubr.f32.mxu0 0.0
    %v3731 = vand.u32 %v3207, 4294901760
    %3732 = vmatmul.mubr.f32.gmra.mrb[0].mxu0 %v3731
    %v3733 = vpop.f32.mrb[0].mxu0
    %v3734 = vadd.f32 %v3653, %v3733
    %v3735 = vpop.f32.mrb[0].mxu0
    %3736 = vdwg.mxu0
    %v3737 = vtanh.pop %v3728
    %v3738 = vtanh.pop %v3734
    %v3739 = vld [vmem:[%s14] sm:$0xff]
    %v3740 = vld [vmem:[%s14 + $0x8] sm:$0xff]
    %v3741 = vld [vmem:[%s14 + $0x10] sm:$0xff]
    %v3742 = vld [vmem:[%s14 + $0x18] sm:$0xff]
    %v3743 = vld [vmem:[%s15] sm:$0x1]
    %v3745 = vlaneseq
    %v3746 = vshrl.u32 %v3745, 7
    %v3747 = vsub.s32 0, %v3746
    %v3748 = vrot.slane %v3743, %v3747
    %v3751 = vsel %vm2655, %v3737, 0
    %v3754 = vsel %vm2655, %v3738, 0
    %3756 = vmatprep.subr.mxu0 0.0
    %v3757 = vand.u32 %v3739, 4294901760
    %3758 = vmatpush1.msra.mxu0 %v3757
    %3759 = vmatprep.subr.mxu0 0.0
    %v3760 = vand.u32 %v3740, 4294901760
    %3761 = vmatpush1.msra.mxu0 %v3760
    %3762 = vmatprep.subr.mxu0 0.0
    %v3763 = vand.u32 %v3741, 4294901760
    %3764 = vmatpush1.msra.mxu0 %v3763
    %3765 = vmatprep.subr.mxu0 0.0
    %v3766 = vand.u32 %v3742, 4294901760
    %3767 = vmatpush1.msra.mxu0 %v3766
    %3768 = vmatprep.subr.mxu0 0.0
    %3769 = vmatpush1.msra.mxu0 0.0
    %3770 = vmatprep.subr.mxu0 0.0
    %3771 = vmatpush1.msra.mxu0 0.0
    %3772 = vmatprep.subr.mxu0 0.0
    %3773 = vmatpush1.msra.mxu0 0.0
    %3774 = vmatprep.subr.mxu0 0.0
    %3775 = vmatpush1.msra.mxu0 0.0
    %3776 = vmatprep.subr.mxu0 0.0
    %3777 = vmatpush1.msra.mxu0 0.0
    %3778 = vmatprep.subr.mxu0 0.0
    %3779 = vmatpush1.msra.mxu0 0.0
    %3780 = vmatprep.subr.mxu0 0.0
    %3781 = vmatpush1.msra.mxu0 0.0
    %3782 = vmatprep.subr.mxu0 0.0
    %3783 = vmatpush1.msra.mxu0 0.0
    %3784 = vmatprep.subr.mxu0 0.0
    %3785 = vmatpush1.msra.mxu0 0.0
    %3786 = vmatprep.subr.mxu0 0.0
    %3787 = vmatpush1.msra.mxu0 0.0
    %3788 = vmatprep.subr.mxu0 0.0
    %3789 = vmatpush1.msra.mxu0 0.0
    %3790 = vmatprep.subr.mxu0 0.0
    %3791 = vmatpush1.msra.mxu0 0.0
    %3792 = vmatprep.subr.mxu0 0.0
    %3793 = vmatpush1.msra.mxu0 0.0
    %3794 = vmatprep.subr.mxu0 0.0
    %3795 = vmatpush1.msra.mxu0 0.0
    %3796 = vmatprep.subr.mxu0 0.0
    %3797 = vmatpush1.msra.mxu0 0.0
    %3798 = vmatprep.subr.mxu0 0.0
    %3799 = vmatpush1.msra.mxu0 0.0
    %3800 = vmatprep.subr.mxu0 0.0
    %3801 = vmatpush1.msra.mxu0 0.0
    %3802 = vmatprep.subr.mxu0 0.0
    %3803 = vmatpush1.msra.mxu0 0.0
    %3804 = vmatprep.subr.mxu0 0.0
    %3805 = vmatpush1.msra.mxu0 0.0
    %3806 = vmatprep.subr.mxu0 0.0
    %3807 = vmatpush1.msra.mxu0 0.0
    %3808 = vmatprep.subr.mxu0 0.0
    %3809 = vmatpush1.msra.mxu0 0.0
    %3810 = vmatprep.subr.mxu0 0.0
    %3811 = vmatpush1.msra.mxu0 0.0
    %3812 = vmatprep.subr.mxu0 0.0
    %3813 = vmatpush1.msra.mxu0 0.0
    %3814 = vmatprep.subr.mxu0 0.0
    %3815 = vmatpush1.msra.mxu0 0.0
    %3816 = vmatprep.subr.mxu0 0.0
    %3817 = vmatpush1.msra.mxu0 0.0
    %3818 = vmatprep.subr.mxu0 0.0
    %3819 = vmatpush1.msra.mxu0 0.0
    %3820 = vmatprep.subr.mxu0 0.0
    %3821 = vmatpush1.msra.mxu0 0.0
    %3822 = vmatprep.subr.mxu0 0.0
    %3823 = vmatpush1.msra.mxu0 0.0
    %3824 = vmatprep.mubr.f32.mxu0 0.0
    %v3825 = vand.u32 %v3751, 4294901760
    %v3826 = vsub.f32 %v3751, %v3825
    %v3827 = vand.u32 %v3826, 4294901760
    %v3828 = vsub.f32 %v3826, %v3827
    %v3829 = vand.u32 %v3828, 4294901760
    %3830 = vmatmul.mubr.f32.gmra.mrb[0].mxu0 %v3829
    %v3831 = vpop.f32.mrb[0].mxu0
    %v3832 = vadd.f32 %v3748, %v3831
    %v3833 = vpop.f32.mrb[0].mxu0
    %3834 = vmatprep.mubr.f32.mxu0 0.0
    %v3835 = vand.u32 %v3754, 4294901760
    %v3836 = vsub.f32 %v3754, %v3835
    %v3837 = vand.u32 %v3836, 4294901760
    %v3838 = vsub.f32 %v3836, %v3837
    %v3839 = vand.u32 %v3838, 4294901760
    %3840 = vmatmul.mubr.f32.gmra.mrb[0].mxu0 %v3839
    %v3841 = vpop.f32.mrb[0].mxu0
    %v3842 = vadd.f32 %v3748, %v3841
    %v3843 = vpop.f32.mrb[0].mxu0
    %3844 = vdwg.mxu0
    %3845 = vmatprep.subr.mxu0 0.0
    %v3846 = vand.u32 %v3739, 4294901760
    %v3847 = vsub.f32 %v3739, %v3846
    %v3848 = vand.u32 %v3847, 4294901760
    %v3849 = vsub.f32 %v3847, %v3848
    %v3850 = vand.u32 %v3849, 4294901760
    %3851 = vmatpush1.msra.mxu0 %v3850
    %3852 = vmatprep.subr.mxu0 0.0
    %v3853 = vand.u32 %v3740, 4294901760
    %v3854 = vsub.f32 %v3740, %v3853
    %v3855 = vand.u32 %v3854, 4294901760
    %v3856 = vsub.f32 %v3854, %v3855
    %v3857 = vand.u32 %v3856, 4294901760
    %3858 = vmatpush1.msra.mxu0 %v3857
    %3859 = vmatprep.subr.mxu0 0.0
    %v3860 = vand.u32 %v3741, 4294901760
    %v3861 = vsub.f32 %v3741, %v3860
    %v3862 = vand.u32 %v3861, 4294901760
    %v3863 = vsub.f32 %v3861, %v3862
    %v3864 = vand.u32 %v3863, 4294901760
    %3865 = vmatpush1.msra.mxu0 %v3864
    %3866 = vmatprep.subr.mxu0 0.0
    %v3867 = vand.u32 %v3742, 4294901760
    %v3868 = vsub.f32 %v3742, %v3867
    %v3869 = vand.u32 %v3868, 4294901760
    %v3870 = vsub.f32 %v3868, %v3869
    %v3871 = vand.u32 %v3870, 4294901760
    %3872 = vmatpush1.msra.mxu0 %v3871
    %3873 = vmatprep.subr.mxu0 0.0
    %3874 = vmatpush1.msra.mxu0 0.0
    %3875 = vmatprep.subr.mxu0 0.0
    %3876 = vmatpush1.msra.mxu0 0.0
    %3877 = vmatprep.subr.mxu0 0.0
    %3878 = vmatpush1.msra.mxu0 0.0
    %3879 = vmatprep.subr.mxu0 0.0
    %3880 = vmatpush1.msra.mxu0 0.0
    %3881 = vmatprep.subr.mxu0 0.0
    %3882 = vmatpush1.msra.mxu0 0.0
    %3883 = vmatprep.subr.mxu0 0.0
    %3884 = vmatpush1.msra.mxu0 0.0
    %3885 = vmatprep.subr.mxu0 0.0
    %3886 = vmatpush1.msra.mxu0 0.0
    %3887 = vmatprep.subr.mxu0 0.0
    %3888 = vmatpush1.msra.mxu0 0.0
    %3889 = vmatprep.subr.mxu0 0.0
    %3890 = vmatpush1.msra.mxu0 0.0
    %3891 = vmatprep.subr.mxu0 0.0
    %3892 = vmatpush1.msra.mxu0 0.0
    %3893 = vmatprep.subr.mxu0 0.0
    %3894 = vmatpush1.msra.mxu0 0.0
    %3895 = vmatprep.subr.mxu0 0.0
    %3896 = vmatpush1.msra.mxu0 0.0
    %3897 = vmatprep.subr.mxu0 0.0
    %3898 = vmatpush1.msra.mxu0 0.0
    %3899 = vmatprep.subr.mxu0 0.0
    %3900 = vmatpush1.msra.mxu0 0.0
    %3901 = vmatprep.subr.mxu0 0.0
    %3902 = vmatpush1.msra.mxu0 0.0
    %3903 = vmatprep.subr.mxu0 0.0
    %3904 = vmatpush1.msra.mxu0 0.0
    %3905 = vmatprep.subr.mxu0 0.0
    %3906 = vmatpush1.msra.mxu0 0.0
    %3907 = vmatprep.subr.mxu0 0.0
    %3908 = vmatpush1.msra.mxu0 0.0
    %3909 = vmatprep.subr.mxu0 0.0
    %3910 = vmatpush1.msra.mxu0 0.0
    %3911 = vmatprep.subr.mxu0 0.0
    %3912 = vmatpush1.msra.mxu0 0.0
    %3913 = vmatprep.subr.mxu0 0.0
    %3914 = vmatpush1.msra.mxu0 0.0
    %3915 = vmatprep.subr.mxu0 0.0
    %3916 = vmatpush1.msra.mxu0 0.0
    %3917 = vmatprep.subr.mxu0 0.0
    %3918 = vmatpush1.msra.mxu0 0.0
    %3919 = vmatprep.subr.mxu0 0.0
    %3920 = vmatpush1.msra.mxu0 0.0
    %3921 = vmatprep.subr.mxu0 0.0
    %3922 = vmatpush1.msra.mxu0 0.0
    %3923 = vmatprep.subr.mxu0 0.0
    %3924 = vmatpush1.msra.mxu0 0.0
    %3925 = vmatprep.subr.mxu0 0.0
    %3926 = vmatpush1.msra.mxu0 0.0
    %3927 = vmatprep.subr.mxu0 0.0
    %3928 = vmatpush1.msra.mxu0 0.0
    %3929 = vmatprep.mubr.f32.mxu0 0.0
    %v3930 = vand.u32 %v3751, 4294901760
    %3931 = vmatmul.mubr.f32.gmra.mrb[0].mxu0 %v3930
    %v3932 = vpop.f32.mrb[0].mxu0
    %v3933 = vadd.f32 %v3832, %v3932
    %v3934 = vpop.f32.mrb[0].mxu0
    %3935 = vmatprep.mubr.f32.mxu0 0.0
    %v3936 = vand.u32 %v3754, 4294901760
    %3937 = vmatmul.mubr.f32.gmra.mrb[0].mxu0 %v3936
    %v3938 = vpop.f32.mrb[0].mxu0
    %v3939 = vadd.f32 %v3842, %v3938
    %v3940 = vpop.f32.mrb[0].mxu0
    %3941 = vdwg.mxu0
    %3942 = vmatprep.subr.mxu0 0.0
    %v3943 = vand.u32 %v3739, 4294901760
    %v3944 = vsub.f32 %v3739, %v3943
    %3945 = vmatpush1.msra.mxu0 %v3944
    %3946 = vmatprep.subr.mxu0 0.0
    %v3947 = vand.u32 %v3740, 4294901760
    %v3948 = vsub.f32 %v3740, %v3947
    %3949 = vmatpush1.msra.mxu0 %v3948
    %3950 = vmatprep.subr.mxu0 0.0
    %v3951 = vand.u32 %v3741, 4294901760
    %v3952 = vsub.f32 %v3741, %v3951
    %3953 = vmatpush1.msra.mxu0 %v3952
    %3954 = vmatprep.subr.mxu0 0.0
    %v3955 = vand.u32 %v3742, 4294901760
    %v3956 = vsub.f32 %v3742, %v3955
    %3957 = vmatpush1.msra.mxu0 %v3956
    %3958 = vmatprep.subr.mxu0 0.0
    %3959 = vmatpush1.msra.mxu0 0.0
    %3960 = vmatprep.subr.mxu0 0.0
    %3961 = vmatpush1.msra.mxu0 0.0
    %3962 = vmatprep.subr.mxu0 0.0
    %3963 = vmatpush1.msra.mxu0 0.0
    %3964 = vmatprep.subr.mxu0 0.0
    %3965 = vmatpush1.msra.mxu0 0.0
    %3966 = vmatprep.subr.mxu0 0.0
    %3967 = vmatpush1.msra.mxu0 0.0
    %3968 = vmatprep.subr.mxu0 0.0
    %3969 = vmatpush1.msra.mxu0 0.0
    %3970 = vmatprep.subr.mxu0 0.0
    %3971 = vmatpush1.msra.mxu0 0.0
    %3972 = vmatprep.subr.mxu0 0.0
    %3973 = vmatpush1.msra.mxu0 0.0
    %3974 = vmatprep.subr.mxu0 0.0
    %3975 = vmatpush1.msra.mxu0 0.0
    %3976 = vmatprep.subr.mxu0 0.0
    %3977 = vmatpush1.msra.mxu0 0.0
    %3978 = vmatprep.subr.mxu0 0.0
    %3979 = vmatpush1.msra.mxu0 0.0
    %3980 = vmatprep.subr.mxu0 0.0
    %3981 = vmatpush1.msra.mxu0 0.0
    %3982 = vmatprep.subr.mxu0 0.0
    %3983 = vmatpush1.msra.mxu0 0.0
    %3984 = vmatprep.subr.mxu0 0.0
    %3985 = vmatpush1.msra.mxu0 0.0
    %3986 = vmatprep.subr.mxu0 0.0
    %3987 = vmatpush1.msra.mxu0 0.0
    %3988 = vmatprep.subr.mxu0 0.0
    %3989 = vmatpush1.msra.mxu0 0.0
    %3990 = vmatprep.subr.mxu0 0.0
    %3991 = vmatpush1.msra.mxu0 0.0
    %3992 = vmatprep.subr.mxu0 0.0
    %3993 = vmatpush1.msra.mxu0 0.0
    %3994 = vmatprep.subr.mxu0 0.0
    %3995 = vmatpush1.msra.mxu0 0.0
    %3996 = vmatprep.subr.mxu0 0.0
    %3997 = vmatpush1.msra.mxu0 0.0
    %3998 = vmatprep.subr.mxu0 0.0
    %3999 = vmatpush1.msra.mxu0 0.0
    %4000 = vmatprep.subr.mxu0 0.0
    %4001 = vmatpush1.msra.mxu0 0.0
    %4002 = vmatprep.subr.mxu0 0.0
    %4003 = vmatpush1.msra.mxu0 0.0
    %4004 = vmatprep.subr.mxu0 0.0
    %4005 = vmatpush1.msra.mxu0 0.0
    %4006 = vmatprep.subr.mxu0 0.0
    %4007 = vmatpush1.msra.mxu0 0.0
    %4008 = vmatprep.subr.mxu0 0.0
    %4009 = vmatpush1.msra.mxu0 0.0
    %4010 = vmatprep.subr.mxu0 0.0
    %4011 = vmatpush1.msra.mxu0 0.0
    %4012 = vmatprep.subr.mxu0 0.0
    %4013 = vmatpush1.msra.mxu0 0.0
    %4014 = vmatprep.mubr.f32.mxu0 0.0
    %v4015 = vand.u32 %v3751, 4294901760
    %v4016 = vsub.f32 %v3751, %v4015
    %4017 = vmatmul.mubr.f32.gmra.mrb[0].mxu0 %v4016
    %v4018 = vpop.f32.mrb[0].mxu0
    %v4019 = vadd.f32 %v3933, %v4018
    %v4020 = vpop.f32.mrb[0].mxu0
    %4021 = vmatprep.mubr.f32.mxu0 0.0
    %v4022 = vand.u32 %v3754, 4294901760
    %v4023 = vsub.f32 %v3754, %v4022
    %4024 = vmatmul.mubr.f32.gmra.mrb[0].mxu0 %v4023
    %v4025 = vpop.f32.mrb[0].mxu0
    %v4026 = vadd.f32 %v3939, %v4025
    %v4027 = vpop.f32.mrb[0].mxu0
    %4028 = vdwg.mxu0
    %4029 = vmatprep.subr.mxu0 0.0
    %v4030 = vand.u32 %v3739, 4294901760
    %4031 = vmatpush1.msra.mxu0 %v4030
    %4032 = vmatprep.subr.mxu0 0.0
    %v4033 = vand.u32 %v3740, 4294901760
    %4034 = vmatpush1.msra.mxu0 %v4033
    %4035 = vmatprep.subr.mxu0 0.0
    %v4036 = vand.u32 %v3741, 4294901760
    %4037 = vmatpush1.msra.mxu0 %v4036
    %4038 = vmatprep.subr.mxu0 0.0
    %v4039 = vand.u32 %v3742, 4294901760
    %4040 = vmatpush1.msra.mxu0 %v4039
    %4041 = vmatprep.subr.mxu0 0.0
    %4042 = vmatpush1.msra.mxu0 0.0
    %4043 = vmatprep.subr.mxu0 0.0
    %4044 = vmatpush1.msra.mxu0 0.0
    %4045 = vmatprep.subr.mxu0 0.0
    %4046 = vmatpush1.msra.mxu0 0.0
    %4047 = vmatprep.subr.mxu0 0.0
    %4048 = vmatpush1.msra.mxu0 0.0
    %4049 = vmatprep.subr.mxu0 0.0
    %4050 = vmatpush1.msra.mxu0 0.0
    %4051 = vmatprep.subr.mxu0 0.0
    %4052 = vmatpush1.msra.mxu0 0.0
    %4053 = vmatprep.subr.mxu0 0.0
    %4054 = vmatpush1.msra.mxu0 0.0
    %4055 = vmatprep.subr.mxu0 0.0
    %4056 = vmatpush1.msra.mxu0 0.0
    %4057 = vmatprep.subr.mxu0 0.0
    %4058 = vmatpush1.msra.mxu0 0.0
    %4059 = vmatprep.subr.mxu0 0.0
    %4060 = vmatpush1.msra.mxu0 0.0
    %4061 = vmatprep.subr.mxu0 0.0
    %4062 = vmatpush1.msra.mxu0 0.0
    %4063 = vmatprep.subr.mxu0 0.0
    %4064 = vmatpush1.msra.mxu0 0.0
    %4065 = vmatprep.subr.mxu0 0.0
    %4066 = vmatpush1.msra.mxu0 0.0
    %4067 = vmatprep.subr.mxu0 0.0
    %4068 = vmatpush1.msra.mxu0 0.0
    %4069 = vmatprep.subr.mxu0 0.0
    %4070 = vmatpush1.msra.mxu0 0.0
    %4071 = vmatprep.subr.mxu0 0.0
    %4072 = vmatpush1.msra.mxu0 0.0
    %4073 = vmatprep.subr.mxu0 0.0
    %4074 = vmatpush1.msra.mxu0 0.0
    %4075 = vmatprep.subr.mxu0 0.0
    %4076 = vmatpush1.msra.mxu0 0.0
    %4077 = vmatprep.subr.mxu0 0.0
    %4078 = vmatpush1.msra.mxu0 0.0
    %4079 = vmatprep.subr.mxu0 0.0
    %4080 = vmatpush1.msra.mxu0 0.0
    %4081 = vmatprep.subr.mxu0 0.0
    %4082 = vmatpush1.msra.mxu0 0.0
    %4083 = vmatprep.subr.mxu0 0.0
    %4084 = vmatpush1.msra.mxu0 0.0
    %4085 = vmatprep.subr.mxu0 0.0
    %4086 = vmatpush1.msra.mxu0 0.0
    %4087 = vmatprep.subr.mxu0 0.0
    %4088 = vmatpush1.msra.mxu0 0.0
    %4089 = vmatprep.subr.mxu0 0.0
    %4090 = vmatpush1.msra.mxu0 0.0
    %4091 = vmatprep.subr.mxu0 0.0
    %4092 = vmatpush1.msra.mxu0 0.0
    %4093 = vmatprep.subr.mxu0 0.0
    %4094 = vmatpush1.msra.mxu0 0.0
    %4095 = vmatprep.subr.mxu0 0.0
    %4096 = vmatpush1.msra.mxu0 0.0
    %4097 = vmatprep.mubr.f32.mxu0 0.0
    %v4098 = vand.u32 %v3751, 4294901760
    %v4099 = vsub.f32 %v3751, %v4098
    %v4100 = vand.u32 %v4099, 4294901760
    %4101 = vmatmul.mubr.f32.gmra.mrb[0].mxu0 %v4100
    %v4102 = vpop.f32.mrb[0].mxu0
    %v4103 = vadd.f32 %v4019, %v4102
    %v4104 = vpop.f32.mrb[0].mxu0
    %4105 = vmatprep.mubr.f32.mxu0 0.0
    %v4106 = vand.u32 %v3754, 4294901760
    %v4107 = vsub.f32 %v3754, %v4106
    %v4108 = vand.u32 %v4107, 4294901760
    %4109 = vmatmul.mubr.f32.gmra.mrb[0].mxu0 %v4108
    %v4110 = vpop.f32.mrb[0].mxu0
    %v4111 = vadd.f32 %v4026, %v4110
    %v4112 = vpop.f32.mrb[0].mxu0
    %4113 = vdwg.mxu0
    %4114 = vmatprep.subr.mxu0 0.0
    %v4115 = vand.u32 %v3739, 4294901760
    %v4116 = vsub.f32 %v3739, %v4115
    %v4117 = vand.u32 %v4116, 4294901760
    %4118 = vmatpush1.msra.mxu0 %v4117
    %4119 = vmatprep.subr.mxu0 0.0
    %v4120 = vand.u32 %v3740, 4294901760
    %v4121 = vsub.f32 %v3740, %v4120
    %v4122 = vand.u32 %v4121, 4294901760
    %4123 = vmatpush1.msra.mxu0 %v4122
    %4124 = vmatprep.subr.mxu0 0.0
    %v4125 = vand.u32 %v3741, 4294901760
    %v4126 = vsub.f32 %v3741, %v4125
    %v4127 = vand.u32 %v4126, 4294901760
    %4128 = vmatpush1.msra.mxu0 %v4127
    %4129 = vmatprep.subr.mxu0 0.0
    %v4130 = vand.u32 %v3742, 4294901760
    %v4131 = vsub.f32 %v3742, %v4130
    %v4132 = vand.u32 %v4131, 4294901760
    %4133 = vmatpush1.msra.mxu0 %v4132
    %4134 = vmatprep.subr.mxu0 0.0
    %4135 = vmatpush1.msra.mxu0 0.0
    %4136 = vmatprep.subr.mxu0 0.0
    %4137 = vmatpush1.msra.mxu0 0.0
    %4138 = vmatprep.subr.mxu0 0.0
    %4139 = vmatpush1.msra.mxu0 0.0
    %4140 = vmatprep.subr.mxu0 0.0
    %4141 = vmatpush1.msra.mxu0 0.0
    %4142 = vmatprep.subr.mxu0 0.0
    %4143 = vmatpush1.msra.mxu0 0.0
    %4144 = vmatprep.subr.mxu0 0.0
    %4145 = vmatpush1.msra.mxu0 0.0
    %4146 = vmatprep.subr.mxu0 0.0
    %4147 = vmatpush1.msra.mxu0 0.0
    %4148 = vmatprep.subr.mxu0 0.0
    %4149 = vmatpush1.msra.mxu0 0.0
    %4150 = vmatprep.subr.mxu0 0.0
    %4151 = vmatpush1.msra.mxu0 0.0
    %4152 = vmatprep.subr.mxu0 0.0
    %4153 = vmatpush1.msra.mxu0 0.0
    %4154 = vmatprep.subr.mxu0 0.0
    %4155 = vmatpush1.msra.mxu0 0.0
    %4156 = vmatprep.subr.mxu0 0.0
    %4157 = vmatpush1.msra.mxu0 0.0
    %4158 = vmatprep.subr.mxu0 0.0
    %4159 = vmatpush1.msra.mxu0 0.0
    %4160 = vmatprep.subr.mxu0 0.0
    %4161 = vmatpush1.msra.mxu0 0.0
    %4162 = vmatprep.subr.mxu0 0.0
    %4163 = vmatpush1.msra.mxu0 0.0
    %4164 = vmatprep.subr.mxu0 0.0
    %4165 = vmatpush1.msra.mxu0 0.0
    %4166 = vmatprep.subr.mxu0 0.0
    %4167 = vmatpush1.msra.mxu0 0.0
    %4168 = vmatprep.subr.mxu0 0.0
    %4169 = vmatpush1.msra.mxu0 0.0
    %4170 = vmatprep.subr.mxu0 0.0
    %4171 = vmatpush1.msra.mxu0 0.0
    %4172 = vmatprep.subr.mxu0 0.0
    %4173 = vmatpush1.msra.mxu0 0.0
    %4174 = vmatprep.subr.mxu0 0.0
    %4175 = vmatpush1.msra.mxu0 0.0
    %4176 = vmatprep.subr.mxu0 0.0
    %4177 = vmatpush1.msra.mxu0 0.0
    %4178 = vmatprep.subr.mxu0 0.0
    %4179 = vmatpush1.msra.mxu0 0.0
    %4180 = vmatprep.subr.mxu0 0.0
    %4181 = vmatpush1.msra.mxu0 0.0
    %4182 = vmatprep.subr.mxu0 0.0
    %4183 = vmatpush1.msra.mxu0 0.0
    %4184 = vmatprep.subr.mxu0 0.0
    %4185 = vmatpush1.msra.mxu0 0.0
    %4186 = vmatprep.subr.mxu0 0.0
    %4187 = vmatpush1.msra.mxu0 0.0
    %4188 = vmatprep.subr.mxu0 0.0
    %4189 = vmatpush1.msra.mxu0 0.0
    %4190 = vmatprep.mubr.f32.mxu0 0.0
    %v4191 = vand.u32 %v3751, 4294901760
    %4192 = vmatmul.mubr.f32.gmra.mrb[0].mxu0 %v4191
    %v4193 = vpop.f32.mrb[0].mxu0
    %v4194 = vadd.f32 %v4103, %v4193
    %v4195 = vpop.f32.mrb[0].mxu0
    %4196 = vmatprep.mubr.f32.mxu0 0.0
    %v4197 = vand.u32 %v3754, 4294901760
    %4198 = vmatmul.mubr.f32.gmra.mrb[0].mxu0 %v4197
    %v4199 = vpop.f32.mrb[0].mxu0
    %v4200 = vadd.f32 %v4111, %v4199
    %v4201 = vpop.f32.mrb[0].mxu0
    %4202 = vdwg.mxu0
    %4203 = vmatprep.subr.mxu0 0.0
    %v4204 = vand.u32 %v3739, 4294901760
    %4205 = vmatpush1.msra.mxu0 %v4204
    %4206 = vmatprep.subr.mxu0 0.0
    %v4207 = vand.u32 %v3740, 4294901760
    %4208 = vmatpush1.msra.mxu0 %v4207
    %4209 = vmatprep.subr.mxu0 0.0
    %v4210 = vand.u32 %v3741, 4294901760
    %4211 = vmatpush1.msra.mxu0 %v4210
    %4212 = vmatprep.subr.mxu0 0.0
    %v4213 = vand.u32 %v3742, 4294901760
    %4214 = vmatpush1.msra.mxu0 %v4213
    %4215 = vmatprep.subr.mxu0 0.0
    %4216 = vmatpush1.msra.mxu0 0.0
    %4217 = vmatprep.subr.mxu0 0.0
    %4218 = vmatpush1.msra.mxu0 0.0
    %4219 = vmatprep.subr.mxu0 0.0
    %4220 = vmatpush1.msra.mxu0 0.0
    %4221 = vmatprep.subr.mxu0 0.0
    %4222 = vmatpush1.msra.mxu0 0.0
    %4223 = vmatprep.subr.mxu0 0.0
    %4224 = vmatpush1.msra.mxu0 0.0
    %4225 = vmatprep.subr.mxu0 0.0
    %4226 = vmatpush1.msra.mxu0 0.0
    %4227 = vmatprep.subr.mxu0 0.0
    %4228 = vmatpush1.msra.mxu0 0.0
    %4229 = vmatprep.subr.mxu0 0.0
    %4230 = vmatpush1.msra.mxu0 0.0
    %4231 = vmatprep.subr.mxu0 0.0
    %4232 = vmatpush1.msra.mxu0 0.0
    %4233 = vmatprep.subr.mxu0 0.0
    %4234 = vmatpush1.msra.mxu0 0.0
    %4235 = vmatprep.subr.mxu0 0.0
    %4236 = vmatpush1.msra.mxu0 0.0
    %4237 = vmatprep.subr.mxu0 0.0
    %4238 = vmatpush1.msra.mxu0 0.0
    %4239 = vmatprep.subr.mxu0 0.0
    %4240 = vmatpush1.msra.mxu0 0.0
    %4241 = vmatprep.subr.mxu0 0.0
    %4242 = vmatpush1.msra.mxu0 0.0
    %4243 = vmatprep.subr.mxu0 0.0
    %4244 = vmatpush1.msra.mxu0 0.0
    %4245 = vmatprep.subr.mxu0 0.0
    %4246 = vmatpush1.msra.mxu0 0.0
    %4247 = vmatprep.subr.mxu0 0.0
    %4248 = vmatpush1.msra.mxu0 0.0
    %4249 = vmatprep.subr.mxu0 0.0
    %4250 = vmatpush1.msra.mxu0 0.0
    %4251 = vmatprep.subr.mxu0 0.0
    %4252 = vmatpush1.msra.mxu0 0.0
    %4253 = vmatprep.subr.mxu0 0.0
    %4254 = vmatpush1.msra.mxu0 0.0
    %4255 = vmatprep.subr.mxu0 0.0
    %4256 = vmatpush1.msra.mxu0 0.0
    %4257 = vmatprep.subr.mxu0 0.0
    %4258 = vmatpush1.msra.mxu0 0.0
    %4259 = vmatprep.subr.mxu0 0.0
    %4260 = vmatpush1.msra.mxu0 0.0
    %4261 = vmatprep.subr.mxu0 0.0
    %4262 = vmatpush1.msra.mxu0 0.0
    %4263 = vmatprep.subr.mxu0 0.0
    %4264 = vmatpush1.msra.mxu0 0.0
    %4265 = vmatprep.subr.mxu0 0.0
    %4266 = vmatpush1.msra.mxu0 0.0
    %4267 = vmatprep.subr.mxu0 0.0
    %4268 = vmatpush1.msra.mxu0 0.0
    %4269 = vmatprep.subr.mxu0 0.0
    %4270 = vmatpush1.msra.mxu0 0.0
    %4271 = vmatprep.mubr.f32.mxu0 0.0
    %v4272 = vand.u32 %v3751, 4294901760
    %4273 = vmatmul.mubr.f32.gmra.mrb[0].mxu0 %v4272
    %v4274 = vpop.f32.mrb[0].mxu0
    %v4275 = vadd.f32 %v4194, %v4274
    %v4276 = vpop.f32.mrb[0].mxu0
    %4277 = vmatprep.mubr.f32.mxu0 0.0
    %v4278 = vand.u32 %v3754, 4294901760
    %4279 = vmatmul.mubr.f32.gmra.mrb[0].mxu0 %v4278
    %v4280 = vpop.f32.mrb[0].mxu0
    %v4281 = vadd.f32 %v4200, %v4280
    %v4282 = vpop.f32.mrb[0].mxu0
    %4283 = vdwg.mxu0
    %v4284 = vmul.f32 %v4275, 1.442695
    %v4285 = vpow.pop %v4284
    %v4286 = vmul.f32 %v4281, 1.442695
    %v4287 = vpow.pop %v4286
    %v4288 = vld [vmem:[%s3] sm:$0xff]
    %v4289 = vld [vmem:[%s3 + $0x8] sm:$0xff]
    %v4290 = vmul.f32 %v4285, %v4288
    %v4291 = vmul.f32 %v4287, %v4289
    %4294 = vrot.lane.b32.xlu0 %v4275, 120
    %v4295 = vpop.permute.xlu0 %4294
    %4296 = vrot.lane.b32.xlu0 %v4281, 120
    %v4297 = vpop.permute.xlu0 %4296
    %v4300 = vadd.f32 %v4290, %v4295
    %v4301 = vadd.f32 %v4291, %v4297
    %vm4302 = vcmask 64512
    %4303 = vst.msk [vmem:[%s16] sm:$0xff] %vm4302, %v4300
    %4304 = vst.msk [vmem:[%s16 + $0x8] sm:$0xff] %vm4302, %v4301
    %4305 = vst.msk [vmem:[#allocation3] sm:$0xff] %vm4302, %v4275
    %4306 = vst.msk [vmem:[#allocation3 + $0x8] sm:$0xff] %vm4302, %v4281
    // Predicated region
    $region73: #{ar_back_step_forward.1} parent=1 // pred_check
      _
    $region74: #{ar_back_step_forward.1} parent=1 // pred_check_branch
      %4308 = sbr.rel (0) target = $region76
    $region75: #{ar_back_step_forward.1} parent=1 // pred_region
      _
    $region76: #{ar_back_step_forward.1} parent=1 // pred_fallthru
      _
    // Predicated region
    $region77: #{ar_back_step_forward.1} parent=1 // pred_check
      _
    $region78: #{ar_back_step_forward.1} parent=1 // pred_check_branch
      %4310 = sbr.rel (0) target = $region80
    $region79: #{ar_back_step_forward.1} parent=1 // pred_region
      %s4312 = ssub.s32 256, 256
      %4313 = vsyncadd [#allocation4], %s4312
      %s4314 = sshll.u32 [#allocation3], 4
      %s4315 = int_to_ptr.vmem [resolvable:$true] %s4314
      %4320 = dma.vmem_to_hbm [thread:$0]  %s4315, 256, %s17, [#allocation4], 128, 128, 8
    $region80: #{ar_back_step_forward.1} parent=1 // pred_fallthru
      _
    // Predicated region
    $region81: #{ar_back_step_forward.1} parent=1 // pred_check
      _
    $region82: #{ar_back_step_forward.1} parent=1 // pred_check_branch
      %4322 = sbr.rel (0) target = $region84
    $region83: #{ar_back_step_forward.1} parent=1 // pred_region
      _
    $region84: #{ar_back_step_forward.1} parent=1 // pred_fallthru
      _
    // Predicated region
    $region85: #{ar_back_step_forward.1} parent=1 // pred_check
      _
    $region86: #{ar_back_step_forward.1} parent=1 // pred_check_branch
      %4324 = sbr.rel (0) target = $region88
    $region87: #{ar_back_step_forward.1} parent=1 // pred_region
      %4325 = dma.done [#allocation4], 256
    $region88: #{ar_back_step_forward.1} parent=1 // pred_fallthru
      _
    %4326 = vsyncpa [#allocation4], 1

</llo_original>
